<compile_context>
chip_gen: v5e
topology: v5e:2x2
jax: 0.10.0
libtpu: 0.0.40
codegen_flags: <defaults>
</compile_context>

<pallas_src>
import functools

import jax
import jax.numpy as jnp
from jax import lax
from jax.experimental import pallas as pl
from jax.experimental.pallas import tpu as pltpu


def _round_up(x, m):
    return ((x + m - 1) // m) * m


# ----------------------------------------------------------------------------
# Fused Seq2Seq kernel factory.
# ----------------------------------------------------------------------------
def _make_seq2seq_kernel(layer_num, hidden_size, S_x, S_y, Bp, compute_dtype):
    H = hidden_size
    L = layer_num
    cd = compute_dtype

    def kernel(*refs):
        # ---- unpack refs -----------------------------------------------------
        it = iter(refs)
        x_ref = next(it)                  # (S_x*Bp, F_in)   compute_dtype
        y_ref = next(it)                  # (S_y*Bp, F_tgt)  compute_dtype
        h0_ref = next(it)                 # (L, Bp, H)  f32
        c0_ref = next(it)                 # (L, Bp, H)  f32
        enc_params = [(next(it), next(it), next(it)) for _ in range(L)]
        dec_params = [(next(it), next(it), next(it)) for _ in range(L)]
        lin_w_ref = next(it)              # (H, O)
        lin_b_ref = next(it)              # (1, O)
        out_ref = next(it)                # (Bp, O)
        enc_hn_ref = next(it)             # (L, Bp, H)
        enc_cn_ref = next(it)             # (L, Bp, H)
        enc_proj = next(it)               # VMEM scratch (S_x*Bp, 4H) f32
        dec_proj = next(it)               # VMEM scratch (S_y*Bp, 4H) f32

        # ---- g-gate lane mask, built ONCE (hoisted off the recurrence) -------
        lane = lax.broadcasted_iota(jnp.int32, (Bp, 4 * H), 1)
        g_mask = (lane >= 2 * H) & (lane < 3 * H)

        def cell(gates, c):
            # Single EUP pass for all four gates: sigmoid(x) = 0.5*tanh(x/2)+0.5
            pre = jnp.where(g_mask, gates, gates * 0.5)
            t = jnp.tanh(pre)
            act = jnp.where(g_mask, t, t * 0.5 + 0.5)
            i = act[:, 0 * H:1 * H]
            f = act[:, 1 * H:2 * H]
            g = act[:, 2 * H:3 * H]
            o = act[:, 3 * H:4 * H]
            c_new = f * c + i * g
            h_new = o * jnp.tanh(c_new)
            return h_new, c_new

        # ---- hoisted layer-0 input projections (both stacks, up front) -------
        # The decoder's projection is independent of the encoder, so it is
        # issued before the latency-bound recurrence rather than after it.
        enc_proj[...] = (jnp.dot(x_ref[...], enc_params[0][0][...],
                                 preferred_element_type=jnp.float32)
                         + enc_params[0][2][...])
        dec_proj[...] = (jnp.dot(y_ref[...], dec_params[0][0][...],
                                 preferred_element_type=jnp.float32)
                         + dec_params[0][2][...])

        def run_stack(S, proj_ref, params, h_init, c_init):
            """Wavefront (diagonal) schedule over an L-layer LSTM stack.

            At wavefront step w, layer l processes its own timestep t = w - l,
            so the serial dependence chain is S + L - 1 cell updates instead of
            S * L.  Layer 0 reads its pre-hoisted input projection from
            proj_ref; layers > 0 project the layer-below hidden state produced
            on the previous wavefront step.
            """

            def step(w, hs, cs, active):
                new_h = list(hs)
                new_c = list(cs)
                for l in range(L):
                    if not active[l]:
                        continue
                    wih_ref, whh_ref, b_ref = params[l]
                    rec = jnp.dot(hs[l].astype(cd), whh_ref[...],
                                  preferred_element_type=jnp.float32)
                    if l == 0:
                        start = w * Bp
                        if not isinstance(start, int):
                            start = pl.multiple_of(start, Bp)
                        gates = proj_ref[pl.ds(start, Bp), :] + rec
                    else:
                        gates = (jnp.dot(hs[l - 1].astype(cd), wih_ref[...],
                                         preferred_element_type=jnp.float32)
                                 + rec + b_ref[...])
                    new_h[l], new_c[l] = cell(gates, cs[l])
                return tuple(new_h), tuple(new_c)

            hs = tuple(h_init)
            cs = tuple(c_init)
            n_steps = S + L - 1
            lo, hi = L - 1, S

            # prologue (static): not all layers active yet
            for w in range(min(lo, n_steps)):
                act_mask = [0 <= w - l < S for l in range(L)]
                hs, cs = step(w, hs, cs, act_mask)

            # steady state: all layers active -> fori_loop bounds live ranges
            if hi > lo:
                trip = hi - lo

                def body(w, carry):
                    return step(w, carry[0], carry[1], [True] * L)

                hs, cs = lax.fori_loop(lo, hi, body, (hs, cs),
                                       unroll=True if trip <= 8 else 4)

            # epilogue (static): drain the upper layers
            for w in range(max(lo, hi), n_steps):
                act_mask = [0 <= w - l < S for l in range(L)]
                hs, cs = step(w, hs, cs, act_mask)

            return hs, cs

        # ---- encoder ----------------------------------------------------------
        h0s = [h0_ref[l] for l in range(L)]
        c0s = [c0_ref[l] for l in range(L)]
        enc_h, enc_c = run_stack(S_x, enc_proj, enc_params, h0s, c0s)
        for l in range(L):
            enc_hn_ref[l] = enc_h[l]
            enc_cn_ref[l] = enc_c[l]

        # ---- decoder (initialized with encoder final states) ------------------
        dec_h, _ = run_stack(S_y, dec_proj, dec_params, list(enc_h), list(enc_c))

        # ---- final Linear on the decoder's top-layer last hidden --------------
        out_ref[...] = (jnp.dot(dec_h[L - 1].astype(cd), lin_w_ref[...],
                                preferred_element_type=jnp.float32)
                        + lin_b_ref[...])

    return kernel


# ----------------------------------------------------------------------------
# Seq2Seq forward (att=False path), single fused pallas_call.
# ----------------------------------------------------------------------------
def seq2seq_forward(params, input_tensor, target_tensor,
                    short_term=None, long_term=None, *,
                    hidden_size, layer_num, compute_dtype=jnp.float32):
    # TODO(synk): att=True branch (SelfAttention) is not defined in the given
    # module source; only the default att=False path is implemented.
    S_x, B, F_in = input_tensor.shape
    S_y, _, F_tgt = target_tensor.shape
    H = hidden_size
    L = layer_num
    O = params["lin_w_t"].shape[-1]

    if short_term is None or long_term is None:
        short_term = jnp.zeros((L, B, H), jnp.float32)
        long_term = short_term

    # Pad batch to a sublane-full multiple of 8.  Padded rows run an
    # independent zero-input LSTM (no NaNs) and are sliced away afterwards.
    Bp = max(8, _round_up(B, 8))
    pad_b = Bp - B

    def pad3(a):
        return jnp.pad(a.astype(jnp.float32), ((0, 0), (0, pad_b), (0, 0)))

    # Flat (S*Bp, F) layouts so the hoisted layer-0 projections are plain 2-D
    # matmuls and the per-step read is a sublane-aligned pl.ds row block.
    xp = pad3(input_tensor).reshape(S_x * Bp, F_in).astype(compute_dtype)
    yp = pad3(target_tensor).reshape(S_y * Bp, F_tgt).astype(compute_dtype)
    h0p = pad3(short_term)
    c0p = pad3(long_term)

    flat_w = []
    for (w_ih_t, w_hh_t, b) in params["enc"]:
        flat_w += [w_ih_t.astype(compute_dtype), w_hh_t.astype(compute_dtype),
                   b.astype(jnp.float32)]
    for (w_ih_t, w_hh_t, b) in params["dec"]:
        flat_w += [w_ih_t.astype(compute_dtype), w_hh_t.astype(compute_dtype),
                   b.astype(jnp.float32)]
    lin_w = params["lin_w_t"].astype(compute_dtype)
    lin_b = params["lin_b"].reshape(1, O).astype(jnp.float32)

    # VMEM budget: grid-less kernel keeps everything resident -> size the
    # scoped limit to the real footprint with headroom.
    def nbytes(a):
        return int(a.size) * a.dtype.itemsize

    footprint = (sum(nbytes(a) for a in [xp, yp, h0p, c0p, lin_w, lin_b] + flat_w)
                 + 4 * (Bp * O + 2 * L * Bp * H)          # f32 outputs
                 + 4 * (S_x + S_y) * Bp * 4 * H)          # f32 proj scratch
    vmem_limit = int(min(96 * 2**20, max(32 * 2**20, 2 * footprint)))

    kernel = _make_seq2seq_kernel(L, H, S_x, S_y, Bp, compute_dtype)
    out, enc_hn, enc_cn = pl.pallas_call(
        kernel,
        out_shape=(
            jax.ShapeDtypeStruct((Bp, O), jnp.float32),
            jax.ShapeDtypeStruct((L, Bp, H), jnp.float32),
            jax.ShapeDtypeStruct((L, Bp, H), jnp.float32),
        ),
        scratch_shapes=[
            pltpu.VMEM((S_x * Bp, 4 * H), jnp.float32),   # encoder layer-0 proj
            pltpu.VMEM((S_y * Bp, 4 * H), jnp.float32),   # decoder layer-0 proj
        ],
        compiler_params=pltpu.CompilerParams(vmem_limit_bytes=vmem_limit),
    )(xp, yp, h0p, c0p, *flat_w, lin_w, lin_b)

    return out[:B], enc_hn[:, :B], enc_cn[:, :B]


# ----------------------------------------------------------------------------
# Parameter init (mimics torch.nn.LSTM / nn.Linear uniform(-1/sqrt(H), 1/sqrt(H)))
# ----------------------------------------------------------------------------
def init_lstm_params(key, input_size, hidden_size, layer_num):
    k = 1.0 / jnp.sqrt(hidden_size)
    params = []
    for l in range(layer_num):
        in_sz = input_size if l == 0 else hidden_size
        key, k1, k2, k3, k4 = jax.random.split(key, 5)
        w_ih = jax.random.uniform(k1, (4 * hidden_size, in_sz), jnp.float32, -k, k)
        w_hh = jax.random.uniform(k2, (4 * hidden_size, hidden_size), jnp.float32, -k, k)
        b_ih = jax.random.uniform(k3, (4 * hidden_size,), jnp.float32, -k, k)
        b_hh = jax.random.uniform(k4, (4 * hidden_size,), jnp.float32, -k, k)
        # pre-transpose weights and fuse biases for the kernel
        params.append((w_ih.T, w_hh.T, (b_ih + b_hh).reshape(1, -1)))
    return params, key


def init_seq2seq_params(seed, input_size, hidden_size, target_size, output_size,
                        layer_num):
    key = jax.random.PRNGKey(seed)
    enc, key = init_lstm_params(key, input_size, hidden_size, layer_num)
    dec, key = init_lstm_params(key, target_size, hidden_size, layer_num)
    k = 1.0 / jnp.sqrt(hidden_size)
    key, k1, k2 = jax.random.split(key, 3)
    lin_w = jax.random.uniform(k1, (output_size, hidden_size), jnp.float32, -k, k)
    lin_b = jax.random.uniform(k2, (output_size,), jnp.float32, -k, k)
    return {"enc": enc, "dec": dec, "lin_w_t": lin_w.T, "lin_b": lin_b}


# ----------------------------------------------------------------------------
# Pure-JAX reference (lax.scan LSTM) for a correctness sanity check.
# ----------------------------------------------------------------------------
def _ref_lstm_stack(x, layer_params, h0, c0):
    hs, cs = [], []
    inp = x
    for l, (w_ih_t, w_hh_t, b) in enumerate(layer_params):
        H = w_hh_t.shape[0]

        def step(carry, xt, w_ih_t=w_ih_t, w_hh_t=w_hh_t, b=b, H=H):
            h, c = carry
            g = xt @ w_ih_t + h @ w_hh_t + b[0]
            i = jax.nn.sigmoid(g[:, 0*H:1*H]); f = jax.nn.sigmoid(g[:, 1*H:2*H])
            gg = jnp.tanh(g[:, 2*H:3*H]); o = jax.nn.sigmoid(g[:, 3*H:4*H])
            c = f * c + i * gg
            h = o * jnp.tanh(c)
            return (h, c), h

        (hn, cn), out = jax.lax.scan(step, (h0[l], c0[l]), inp)
        hs.append(hn); cs.append(cn); inp = out
    return inp, jnp.stack(hs), jnp.stack(cs)


def _ref_forward(params, x, y, hidden_size, layer_num):
    B = x.shape[1]
    h0 = jnp.zeros((layer_num, B, hidden_size), jnp.float32)
    _, ehn, ecn = _ref_lstm_stack(x, params["enc"], h0, h0)
    _, dhn, _ = _ref_lstm_stack(y, params["dec"], ehn, ecn)
    return dhn[-1] @ params["lin_w_t"] + params["lin_b"], ehn, ecn


if __name__ == "__main__":
    # Small, module-consistent shapes.
    input_size, hidden_size, target_size, output_size = 6, 32, 4, 3
    batch_size, layer_num = 2, 2
    seq_x, seq_y = 8, 5

    params = init_seq2seq_params(0, input_size, hidden_size, target_size,
                                 output_size, layer_num)

    key = jax.random.PRNGKey(0)
    kx, ky = jax.random.split(key)
    input_tensor = jax.random.normal(kx, (seq_x, batch_size, input_size), jnp.float32)
    target_tensor = jax.random.normal(ky, (seq_y, batch_size, target_size), jnp.float32)

    # compute_dtype=jnp.bfloat16 is recommended for large H on v6e/v7x (MXU
    # native); kept f32 here for exact parity with the f32 reference.
    fwd = functools.partial(seq2seq_forward, hidden_size=hidden_size,
                            layer_num=layer_num, compute_dtype=jnp.float32)
    outputs, enc_hn, enc_cn = jax.jit(fwd)(params, input_tensor, target_tensor)
    jax.block_until_ready((outputs, enc_hn, enc_cn))

    # sanity check vs pure-JAX reference
    ref_out, ref_hn, ref_cn = _ref_forward(params, input_tensor, target_tensor,
                                           hidden_size, layer_num)
    assert outputs.shape == (batch_size, output_size)
    assert enc_hn.shape == (layer_num, batch_size, hidden_size)
    assert enc_cn.shape == (layer_num, batch_size, hidden_size)
    assert jnp.allclose(outputs, ref_out, atol=1e-3)
    assert jnp.allclose(enc_hn, ref_hn, atol=1e-3)
    assert jnp.allclose(enc_cn, ref_cn, atol=1e-3)

    print("KERNEL_OK")
</pallas_src>

<mosaic_0001>
module attributes {stable_mosaic.version = 11 : i64} {
  func.func @kernel(%arg0: memref<64x6xf32, #tpu.memory_space<vmem>>, %arg1: memref<40x4xf32, #tpu.memory_space<vmem>>, %arg2: memref<2x8x32xf32, #tpu.memory_space<vmem>>, %arg3: memref<2x8x32xf32, #tpu.memory_space<vmem>>, %arg4: memref<6x128xf32, #tpu.memory_space<vmem>>, %arg5: memref<32x128xf32, #tpu.memory_space<vmem>>, %arg6: memref<1x128xf32, #tpu.memory_space<vmem>>, %arg7: memref<32x128xf32, #tpu.memory_space<vmem>>, %arg8: memref<32x128xf32, #tpu.memory_space<vmem>>, %arg9: memref<1x128xf32, #tpu.memory_space<vmem>>, %arg10: memref<4x128xf32, #tpu.memory_space<vmem>>, %arg11: memref<32x128xf32, #tpu.memory_space<vmem>>, %arg12: memref<1x128xf32, #tpu.memory_space<vmem>>, %arg13: memref<32x128xf32, #tpu.memory_space<vmem>>, %arg14: memref<32x128xf32, #tpu.memory_space<vmem>>, %arg15: memref<1x128xf32, #tpu.memory_space<vmem>>, %arg16: memref<32x3xf32, #tpu.memory_space<vmem>>, %arg17: memref<1x3xf32, #tpu.memory_space<vmem>>, %arg18: memref<8x3xf32, #tpu.memory_space<vmem>>, %arg19: memref<2x8x32xf32, #tpu.memory_space<vmem>>, %arg20: memref<2x8x32xf32, #tpu.memory_space<vmem>>, %arg21: memref<64x128xf32, #tpu.memory_space<vmem>>, %arg22: memref<40x128xf32, #tpu.memory_space<vmem>>) attributes {dimension_semantics = [], scalar_prefetch = 0 : i64, scratch_operands = 2 : i64, tpu.core_type = #tpu.core_type<tc>} {
    %0 = tpu.iota {dimensions = array<i32: 1>} : vector<8x128xi32>
    %c64_i32 = arith.constant 64 : i32
    %1 = vector.broadcast %c64_i32 : i32 to vector<8x128xi32>
    %2 = arith.cmpi sge, %0, %1 : vector<8x128xi32>
    %c96_i32 = arith.constant 96 : i32
    %3 = vector.broadcast %c96_i32 : i32 to vector<8x128xi32>
    %4 = arith.cmpi slt, %0, %3 : vector<8x128xi32>
    %5 = arith.andi %2, %4 : vector<8x128xi1>
    %c0 = arith.constant 0 : index
    %c0_0 = arith.constant 0 : index
    %6 = vector.load %arg0[%c0, %c0_0] : memref<64x6xf32, #tpu.memory_space<vmem>>, vector<64x6xf32>
    %c0_1 = arith.constant 0 : index
    %c0_2 = arith.constant 0 : index
    %7 = vector.load %arg4[%c0_1, %c0_2] : memref<6x128xf32, #tpu.memory_space<vmem>>, vector<6x128xf32>
    %cst = arith.constant dense<0.000000e+00> : vector<64x128xf32>
    %8 = tpu.matmul %6, %7, %cst {dimension_numbers = #tpu.dot_dimension_numbers<[1], [0], [0], [1], [0, 0, 1, 1], [], []>} : vector<64x6xf32>, vector<6x128xf32>, vector<64x128xf32> -> vector<64x128xf32>
    %c0_3 = arith.constant 0 : index
    %c0_4 = arith.constant 0 : index
    %9 = vector.load %arg6[%c0_3, %c0_4] : memref<1x128xf32, #tpu.memory_space<vmem>>, vector<1x128xf32>
    %10 = vector.broadcast %9 : vector<1x128xf32> to vector<64x128xf32>
    %11 = arith.addf %8, %10 : vector<64x128xf32>
    %c0_5 = arith.constant 0 : index
    %c0_6 = arith.constant 0 : index
    %12 = vector.load %arg21[%c0_5, %c0_6] : memref<64x128xf32, #tpu.memory_space<vmem>>, vector<64x128xf32>
    tpu.vector_store %arg21[%c0_5, %c0_6], %11 {strides = array<i32>} : memref<64x128xf32, #tpu.memory_space<vmem>>, vector<64x128xf32>,
    %c0_7 = arith.constant 0 : index
    %c0_8 = arith.constant 0 : index
    %13 = vector.load %arg1[%c0_7, %c0_8] : memref<40x4xf32, #tpu.memory_space<vmem>>, vector<40x4xf32>
    %c0_9 = arith.constant 0 : index
    %c0_10 = arith.constant 0 : index
    %14 = vector.load %arg10[%c0_9, %c0_10] : memref<4x128xf32, #tpu.memory_space<vmem>>, vector<4x128xf32>
    %cst_11 = arith.constant dense<0.000000e+00> : vector<40x128xf32>
    %15 = tpu.matmul %13, %14, %cst_11 {dimension_numbers = #tpu.dot_dimension_numbers<[1], [0], [0], [1], [0, 0, 1, 1], [], []>} : vector<40x4xf32>, vector<4x128xf32>, vector<40x128xf32> -> vector<40x128xf32>
    %c0_12 = arith.constant 0 : index
    %c0_13 = arith.constant 0 : index
    %16 = vector.load %arg12[%c0_12, %c0_13] : memref<1x128xf32, #tpu.memory_space<vmem>>, vector<1x128xf32>
    %17 = vector.broadcast %16 : vector<1x128xf32> to vector<40x128xf32>
    %18 = arith.addf %15, %17 : vector<40x128xf32>
    %c0_14 = arith.constant 0 : index
    %c0_15 = arith.constant 0 : index
    %19 = vector.load %arg22[%c0_14, %c0_15] : memref<40x128xf32, #tpu.memory_space<vmem>>, vector<40x128xf32>
    tpu.vector_store %arg22[%c0_14, %c0_15], %18 {strides = array<i32>} : memref<40x128xf32, #tpu.memory_space<vmem>>, vector<40x128xf32>,
    %c0_16 = arith.constant 0 : index
    %c0_17 = arith.constant 0 : index
    %c0_18 = arith.constant 0 : index
    %20 = vector.load %arg2[%c0_16, %c0_17, %c0_18] : memref<2x8x32xf32, #tpu.memory_space<vmem>>, vector<1x8x32xf32>
    %21 = vector.shape_cast %20 : vector<1x8x32xf32> to vector<8x32xf32>
    %c1 = arith.constant 1 : index
    %c0_19 = arith.constant 0 : index
    %c0_20 = arith.constant 0 : index
    %22 = vector.load %arg2[%c1, %c0_19, %c0_20] : memref<2x8x32xf32, #tpu.memory_space<vmem>>, vector<1x8x32xf32>
    %23 = vector.shape_cast %22 : vector<1x8x32xf32> to vector<8x32xf32>
    %c0_21 = arith.constant 0 : index
    %c0_22 = arith.constant 0 : index
    %c0_23 = arith.constant 0 : index
    %24 = vector.load %arg3[%c0_21, %c0_22, %c0_23] : memref<2x8x32xf32, #tpu.memory_space<vmem>>, vector<1x8x32xf32>
    %25 = vector.shape_cast %24 : vector<1x8x32xf32> to vector<8x32xf32>
    %c1_24 = arith.constant 1 : index
    %c0_25 = arith.constant 0 : index
    %c0_26 = arith.constant 0 : index
    %26 = vector.load %arg3[%c1_24, %c0_25, %c0_26] : memref<2x8x32xf32, #tpu.memory_space<vmem>>, vector<1x8x32xf32>
    %27 = vector.shape_cast %26 : vector<1x8x32xf32> to vector<8x32xf32>
    %c0_27 = arith.constant 0 : index
    %c0_28 = arith.constant 0 : index
    %28 = vector.load %arg5[%c0_27, %c0_28] : memref<32x128xf32, #tpu.memory_space<vmem>>, vector<32x128xf32>
    %cst_29 = arith.constant dense<0.000000e+00> : vector<8x128xf32>
    %29 = tpu.matmul %21, %28, %cst_29 {dimension_numbers = #tpu.dot_dimension_numbers<[1], [0], [0], [1], [0, 0, 1, 1], [], []>} : vector<8x32xf32>, vector<32x128xf32>, vector<8x128xf32> -> vector<8x128xf32>
    %c0_30 = arith.constant 0 : index
    %c0_31 = arith.constant 0 : index
    %30 = vector.load %arg21[%c0_30, %c0_31] : memref<64x128xf32, #tpu.memory_space<vmem>>, vector<8x128xf32>
    %31 = arith.addf %30, %29 : vector<8x128xf32>
    %cst_32 = arith.constant 5.000000e-01 : f32
    %32 = vector.broadcast %cst_32 : f32 to vector<8x128xf32>
    %33 = arith.mulf %31, %32 : vector<8x128xf32>
    %34 = arith.select %5, %31, %33 : vector<8x128xi1>, vector<8x128xf32>
    %35 = math.tanh %34 : vector<8x128xf32>
    %cst_33 = arith.constant 5.000000e-01 : f32
    %36 = vector.broadcast %cst_33 : f32 to vector<8x128xf32>
    %37 = arith.mulf %35, %36 : vector<8x128xf32>
    %cst_34 = arith.constant 5.000000e-01 : f32
    %38 = vector.broadcast %cst_34 : f32 to vector<8x128xf32>
    %39 = arith.addf %37, %38 : vector<8x128xf32>
    %40 = arith.select %5, %35, %39 : vector<8x128xi1>, vector<8x128xf32>
    %41 = vector.extract_strided_slice %40 {offsets = [0, 0], sizes = [8, 32], strides = [1, 1]} : vector<8x128xf32> to vector<8x32xf32>
    %42 = vector.extract_strided_slice %40 {offsets = [0, 32], sizes = [8, 32], strides = [1, 1]} : vector<8x128xf32> to vector<8x32xf32>
    %43 = vector.extract_strided_slice %40 {offsets = [0, 64], sizes = [8, 32], strides = [1, 1]} : vector<8x128xf32> to vector<8x32xf32>
    %44 = vector.extract_strided_slice %40 {offsets = [0, 96], sizes = [8, 32], strides = [1, 1]} : vector<8x128xf32> to vector<8x32xf32>
    %45 = arith.mulf %42, %25 : vector<8x32xf32>
    %46 = arith.mulf %41, %43 : vector<8x32xf32>
    %47 = arith.addf %45, %46 : vector<8x32xf32>
    %48 = math.tanh %47 : vector<8x32xf32>
    %49 = arith.mulf %44, %48 : vector<8x32xf32>
    %c1_i32 = arith.constant 1 : i32
    %c0_35 = arith.constant 0 : index
    %c0_36 = arith.constant 0 : index
    %50 = vector.load %arg5[%c0_35, %c0_36] : memref<32x128xf32, #tpu.memory_space<vmem>>, vector<32x128xf32>
    %cst_37 = arith.constant dense<0.000000e+00> : vector<8x128xf32>
    %51 = tpu.matmul %49, %50, %cst_37 {dimension_numbers = #tpu.dot_dimension_numbers<[1], [0], [0], [1], [0, 0, 1, 1], [], []>} : vector<8x32xf32>, vector<32x128xf32>, vector<8x128xf32> -> vector<8x128xf32>
    %c8_i32 = arith.constant 8 : i32
    %52 = arith.muli %c1_i32, %c8_i32 : i32
    %53 = tpu.assume_multiple %52, 8 : i32
    %54 = arith.index_cast %53 : i32 to index
    %c0_38 = arith.constant 0 : index
    %55 = vector.load %arg21[%54, %c0_38] : memref<64x128xf32, #tpu.memory_space<vmem>>, vector<8x128xf32>
    %56 = arith.addf %55, %51 : vector<8x128xf32>
    %cst_39 = arith.constant 5.000000e-01 : f32
    %57 = vector.broadcast %cst_39 : f32 to vector<8x128xf32>
    %58 = arith.mulf %56, %57 : vector<8x128xf32>
    %59 = arith.select %5, %56, %58 : vector<8x128xi1>, vector<8x128xf32>
    %60 = math.tanh %59 : vector<8x128xf32>
    %cst_40 = arith.constant 5.000000e-01 : f32
    %61 = vector.broadcast %cst_40 : f32 to vector<8x128xf32>
    %62 = arith.mulf %60, %61 : vector<8x128xf32>
    %cst_41 = arith.constant 5.000000e-01 : f32
    %63 = vector.broadcast %cst_41 : f32 to vector<8x128xf32>
    %64 = arith.addf %62, %63 : vector<8x128xf32>
    %65 = arith.select %5, %60, %64 : vector<8x128xi1>, vector<8x128xf32>
    %66 = vector.extract_strided_slice %65 {offsets = [0, 0], sizes = [8, 32], strides = [1, 1]} : vector<8x128xf32> to vector<8x32xf32>
    %67 = vector.extract_strided_slice %65 {offsets = [0, 32], sizes = [8, 32], strides = [1, 1]} : vector<8x128xf32> to vector<8x32xf32>
    %68 = vector.extract_strided_slice %65 {offsets = [0, 64], sizes = [8, 32], strides = [1, 1]} : vector<8x128xf32> to vector<8x32xf32>
    %69 = vector.extract_strided_slice %65 {offsets = [0, 96], sizes = [8, 32], strides = [1, 1]} : vector<8x128xf32> to vector<8x32xf32>
    %70 = arith.mulf %67, %47 : vector<8x32xf32>
    %71 = arith.mulf %66, %68 : vector<8x32xf32>
    %72 = arith.addf %70, %71 : vector<8x32xf32>
    %73 = math.tanh %72 : vector<8x32xf32>
    %74 = arith.mulf %69, %73 : vector<8x32xf32>
    %c0_42 = arith.constant 0 : index
    %c0_43 = arith.constant 0 : index
    %75 = vector.load %arg8[%c0_42, %c0_43] : memref<32x128xf32, #tpu.memory_space<vmem>>, vector<32x128xf32>
    %cst_44 = arith.constant dense<0.000000e+00> : vector<8x128xf32>
    %76 = tpu.matmul %23, %75, %cst_44 {dimension_numbers = #tpu.dot_dimension_numbers<[1], [0], [0], [1], [0, 0, 1, 1], [], []>} : vector<8x32xf32>, vector<32x128xf32>, vector<8x128xf32> -> vector<8x128xf32>
    %c0_45 = arith.constant 0 : index
    %c0_46 = arith.constant 0 : index
    %77 = vector.load %arg7[%c0_45, %c0_46] : memref<32x128xf32, #tpu.memory_space<vmem>>, vector<32x128xf32>
    %cst_47 = arith.constant dense<0.000000e+00> : vector<8x128xf32>
    %78 = tpu.matmul %49, %77, %cst_47 {dimension_numbers = #tpu.dot_dimension_numbers<[1], [0], [0], [1], [0, 0, 1, 1], [], []>} : vector<8x32xf32>, vector<32x128xf32>, vector<8x128xf32> -> vector<8x128xf32>
    %79 = arith.addf %78, %76 : vector<8x128xf32>
    %c0_48 = arith.constant 0 : index
    %c0_49 = arith.constant 0 : index
    %80 = vector.load %arg9[%c0_48, %c0_49] : memref<1x128xf32, #tpu.memory_space<vmem>>, vector<1x128xf32>
    %81 = vector.broadcast %80 : vector<1x128xf32> to vector<8x128xf32>
    %82 = arith.addf %79, %81 : vector<8x128xf32>
    %cst_50 = arith.constant 5.000000e-01 : f32
    %83 = vector.broadcast %cst_50 : f32 to vector<8x128xf32>
    %84 = arith.mulf %82, %83 : vector<8x128xf32>
    %85 = arith.select %5, %82, %84 : vector<8x128xi1>, vector<8x128xf32>
    %86 = math.tanh %85 : vector<8x128xf32>
    %cst_51 = arith.constant 5.000000e-01 : f32
    %87 = vector.broadcast %cst_51 : f32 to vector<8x128xf32>
    %88 = arith.mulf %86, %87 : vector<8x128xf32>
    %cst_52 = arith.constant 5.000000e-01 : f32
    %89 = vector.broadcast %cst_52 : f32 to vector<8x128xf32>
    %90 = arith.addf %88, %89 : vector<8x128xf32>
    %91 = arith.select %5, %86, %90 : vector<8x128xi1>, vector<8x128xf32>
    %92 = vector.extract_strided_slice %91 {offsets = [0, 0], sizes = [8, 32], strides = [1, 1]} : vector<8x128xf32> to vector<8x32xf32>
    %93 = vector.extract_strided_slice %91 {offsets = [0, 32], sizes = [8, 32], strides = [1, 1]} : vector<8x128xf32> to vector<8x32xf32>
    %94 = vector.extract_strided_slice %91 {offsets = [0, 64], sizes = [8, 32], strides = [1, 1]} : vector<8x128xf32> to vector<8x32xf32>
    %95 = vector.extract_strided_slice %91 {offsets = [0, 96], sizes = [8, 32], strides = [1, 1]} : vector<8x128xf32> to vector<8x32xf32>
    %96 = arith.mulf %93, %27 : vector<8x32xf32>
    %97 = arith.mulf %92, %94 : vector<8x32xf32>
    %98 = arith.addf %96, %97 : vector<8x32xf32>
    %99 = math.tanh %98 : vector<8x32xf32>
    %100 = arith.mulf %95, %99 : vector<8x32xf32>
    %c2_i32 = arith.constant 2 : i32
    %c0_53 = arith.constant 0 : index
    %c0_54 = arith.constant 0 : index
    %101 = vector.load %arg5[%c0_53, %c0_54] : memref<32x128xf32, #tpu.memory_space<vmem>>, vector<32x128xf32>
    %cst_55 = arith.constant dense<0.000000e+00> : vector<8x128xf32>
    %102 = tpu.matmul %74, %101, %cst_55 {dimension_numbers = #tpu.dot_dimension_numbers<[1], [0], [0], [1], [0, 0, 1, 1], [], []>} : vector<8x32xf32>, vector<32x128xf32>, vector<8x128xf32> -> vector<8x128xf32>
    %c8_i32_56 = arith.constant 8 : i32
    %103 = arith.muli %c2_i32, %c8_i32_56 : i32
    %104 = tpu.assume_multiple %103, 8 : i32
    %105 = arith.index_cast %104 : i32 to index
    %c0_57 = arith.constant 0 : index
    %106 = vector.load %arg21[%105, %c0_57] : memref<64x128xf32, #tpu.memory_space<vmem>>, vector<8x128xf32>
    %107 = arith.addf %106, %102 : vector<8x128xf32>
    %cst_58 = arith.constant 5.000000e-01 : f32
    %108 = vector.broadcast %cst_58 : f32 to vector<8x128xf32>
    %109 = arith.mulf %107, %108 : vector<8x128xf32>
    %110 = arith.select %5, %107, %109 : vector<8x128xi1>, vector<8x128xf32>
    %111 = math.tanh %110 : vector<8x128xf32>
    %cst_59 = arith.constant 5.000000e-01 : f32
    %112 = vector.broadcast %cst_59 : f32 to vector<8x128xf32>
    %113 = arith.mulf %111, %112 : vector<8x128xf32>
    %cst_60 = arith.constant 5.000000e-01 : f32
    %114 = vector.broadcast %cst_60 : f32 to vector<8x128xf32>
    %115 = arith.addf %113, %114 : vector<8x128xf32>
    %116 = arith.select %5, %111, %115 : vector<8x128xi1>, vector<8x128xf32>
    %117 = vector.extract_strided_slice %116 {offsets = [0, 0], sizes = [8, 32], strides = [1, 1]} : vector<8x128xf32> to vector<8x32xf32>
    %118 = vector.extract_strided_slice %116 {offsets = [0, 32], sizes = [8, 32], strides = [1, 1]} : vector<8x128xf32> to vector<8x32xf32>
    %119 = vector.extract_strided_slice %116 {offsets = [0, 64], sizes = [8, 32], strides = [1, 1]} : vector<8x128xf32> to vector<8x32xf32>
    %120 = vector.extract_strided_slice %116 {offsets = [0, 96], sizes = [8, 32], strides = [1, 1]} : vector<8x128xf32> to vector<8x32xf32>
    %121 = arith.mulf %118, %72 : vector<8x32xf32>
    %122 = arith.mulf %117, %119 : vector<8x32xf32>
    %123 = arith.addf %121, %122 : vector<8x32xf32>
    %124 = math.tanh %123 : vector<8x32xf32>
    %125 = arith.mulf %120, %124 : vector<8x32xf32>
    %c0_61 = arith.constant 0 : index
    %c0_62 = arith.constant 0 : index
    %126 = vector.load %arg8[%c0_61, %c0_62] : memref<32x128xf32, #tpu.memory_space<vmem>>, vector<32x128xf32>
    %cst_63 = arith.constant dense<0.000000e+00> : vector<8x128xf32>
    %127 = tpu.matmul %100, %126, %cst_63 {dimension_numbers = #tpu.dot_dimension_numbers<[1], [0], [0], [1], [0, 0, 1, 1], [], []>} : vector<8x32xf32>, vector<32x128xf32>, vector<8x128xf32> -> vector<8x128xf32>
    %c0_64 = arith.constant 0 : index
    %c0_65 = arith.constant 0 : index
    %128 = vector.load %arg7[%c0_64, %c0_65] : memref<32x128xf32, #tpu.memory_space<vmem>>, vector<32x128xf32>
    %cst_66 = arith.constant dense<0.000000e+00> : vector<8x128xf32>
    %129 = tpu.matmul %74, %128, %cst_66 {dimension_numbers = #tpu.dot_dimension_numbers<[1], [0], [0], [1], [0, 0, 1, 1], [], []>} : vector<8x32xf32>, vector<32x128xf32>, vector<8x128xf32> -> vector<8x128xf32>
    %130 = arith.addf %129, %127 : vector<8x128xf32>
    %c0_67 = arith.constant 0 : index
    %c0_68 = arith.constant 0 : index
    %131 = vector.load %arg9[%c0_67, %c0_68] : memref<1x128xf32, #tpu.memory_space<vmem>>, vector<1x128xf32>
    %132 = vector.broadcast %131 : vector<1x128xf32> to vector<8x128xf32>
    %133 = arith.addf %130, %132 : vector<8x128xf32>
    %cst_69 = arith.constant 5.000000e-01 : f32
    %134 = vector.broadcast %cst_69 : f32 to vector<8x128xf32>
    %135 = arith.mulf %133, %134 : vector<8x128xf32>
    %136 = arith.select %5, %133, %135 : vector<8x128xi1>, vector<8x128xf32>
    %137 = math.tanh %136 : vector<8x128xf32>
    %cst_70 = arith.constant 5.000000e-01 : f32
    %138 = vector.broadcast %cst_70 : f32 to vector<8x128xf32>
    %139 = arith.mulf %137, %138 : vector<8x128xf32>
    %cst_71 = arith.constant 5.000000e-01 : f32
    %140 = vector.broadcast %cst_71 : f32 to vector<8x128xf32>
    %141 = arith.addf %139, %140 : vector<8x128xf32>
    %142 = arith.select %5, %137, %141 : vector<8x128xi1>, vector<8x128xf32>
    %143 = vector.extract_strided_slice %142 {offsets = [0, 0], sizes = [8, 32], strides = [1, 1]} : vector<8x128xf32> to vector<8x32xf32>
    %144 = vector.extract_strided_slice %142 {offsets = [0, 32], sizes = [8, 32], strides = [1, 1]} : vector<8x128xf32> to vector<8x32xf32>
    %145 = vector.extract_strided_slice %142 {offsets = [0, 64], sizes = [8, 32], strides = [1, 1]} : vector<8x128xf32> to vector<8x32xf32>
    %146 = vector.extract_strided_slice %142 {offsets = [0, 96], sizes = [8, 32], strides = [1, 1]} : vector<8x128xf32> to vector<8x32xf32>
    %147 = arith.mulf %144, %98 : vector<8x32xf32>
    %148 = arith.mulf %143, %145 : vector<8x32xf32>
    %149 = arith.addf %147, %148 : vector<8x32xf32>
    %150 = math.tanh %149 : vector<8x32xf32>
    %151 = arith.mulf %146, %150 : vector<8x32xf32>
    %c3_i32 = arith.constant 3 : i32
    %c0_72 = arith.constant 0 : index
    %c0_73 = arith.constant 0 : index
    %152 = vector.load %arg5[%c0_72, %c0_73] : memref<32x128xf32, #tpu.memory_space<vmem>>, vector<32x128xf32>
    %cst_74 = arith.constant dense<0.000000e+00> : vector<8x128xf32>
    %153 = tpu.matmul %125, %152, %cst_74 {dimension_numbers = #tpu.dot_dimension_numbers<[1], [0], [0], [1], [0, 0, 1, 1], [], []>} : vector<8x32xf32>, vector<32x128xf32>, vector<8x128xf32> -> vector<8x128xf32>
    %c8_i32_75 = arith.constant 8 : i32
    %154 = arith.muli %c3_i32, %c8_i32_75 : i32
    %155 = tpu.assume_multiple %154, 8 : i32
    %156 = arith.index_cast %155 : i32 to index
    %c0_76 = arith.constant 0 : index
    %157 = vector.load %arg21[%156, %c0_76] : memref<64x128xf32, #tpu.memory_space<vmem>>, vector<8x128xf32>
    %158 = arith.addf %157, %153 : vector<8x128xf32>
    %cst_77 = arith.constant 5.000000e-01 : f32
    %159 = vector.broadcast %cst_77 : f32 to vector<8x128xf32>
    %160 = arith.mulf %158, %159 : vector<8x128xf32>
    %161 = arith.select %5, %158, %160 : vector<8x128xi1>, vector<8x128xf32>
    %162 = math.tanh %161 : vector<8x128xf32>
    %cst_78 = arith.constant 5.000000e-01 : f32
    %163 = vector.broadcast %cst_78 : f32 to vector<8x128xf32>
    %164 = arith.mulf %162, %163 : vector<8x128xf32>
    %cst_79 = arith.constant 5.000000e-01 : f32
    %165 = vector.broadcast %cst_79 : f32 to vector<8x128xf32>
    %166 = arith.addf %164, %165 : vector<8x128xf32>
    %167 = arith.select %5, %162, %166 : vector<8x128xi1>, vector<8x128xf32>
    %168 = vector.extract_strided_slice %167 {offsets = [0, 0], sizes = [8, 32], strides = [1, 1]} : vector<8x128xf32> to vector<8x32xf32>
    %169 = vector.extract_strided_slice %167 {offsets = [0, 32], sizes = [8, 32], strides = [1, 1]} : vector<8x128xf32> to vector<8x32xf32>
    %170 = vector.extract_strided_slice %167 {offsets = [0, 64], sizes = [8, 32], strides = [1, 1]} : vector<8x128xf32> to vector<8x32xf32>
    %171 = vector.extract_strided_slice %167 {offsets = [0, 96], sizes = [8, 32], strides = [1, 1]} : vector<8x128xf32> to vector<8x32xf32>
    %172 = arith.mulf %169, %123 : vector<8x32xf32>
    %173 = arith.mulf %168, %170 : vector<8x32xf32>
    %174 = arith.addf %172, %173 : vector<8x32xf32>
    %175 = math.tanh %174 : vector<8x32xf32>
    %176 = arith.mulf %171, %175 : vector<8x32xf32>
    %c0_80 = arith.constant 0 : index
    %c0_81 = arith.constant 0 : index
    %177 = vector.load %arg8[%c0_80, %c0_81] : memref<32x128xf32, #tpu.memory_space<vmem>>, vector<32x128xf32>
    %cst_82 = arith.constant dense<0.000000e+00> : vector<8x128xf32>
    %178 = tpu.matmul %151, %177, %cst_82 {dimension_numbers = #tpu.dot_dimension_numbers<[1], [0], [0], [1], [0, 0, 1, 1], [], []>} : vector<8x32xf32>, vector<32x128xf32>, vector<8x128xf32> -> vector<8x128xf32>
    %c0_83 = arith.constant 0 : index
    %c0_84 = arith.constant 0 : index
    %179 = vector.load %arg7[%c0_83, %c0_84] : memref<32x128xf32, #tpu.memory_space<vmem>>, vector<32x128xf32>
    %cst_85 = arith.constant dense<0.000000e+00> : vector<8x128xf32>
    %180 = tpu.matmul %125, %179, %cst_85 {dimension_numbers = #tpu.dot_dimension_numbers<[1], [0], [0], [1], [0, 0, 1, 1], [], []>} : vector<8x32xf32>, vector<32x128xf32>, vector<8x128xf32> -> vector<8x128xf32>
    %181 = arith.addf %180, %178 : vector<8x128xf32>
    %c0_86 = arith.constant 0 : index
    %c0_87 = arith.constant 0 : index
    %182 = vector.load %arg9[%c0_86, %c0_87] : memref<1x128xf32, #tpu.memory_space<vmem>>, vector<1x128xf32>
    %183 = vector.broadcast %182 : vector<1x128xf32> to vector<8x128xf32>
    %184 = arith.addf %181, %183 : vector<8x128xf32>
    %cst_88 = arith.constant 5.000000e-01 : f32
    %185 = vector.broadcast %cst_88 : f32 to vector<8x128xf32>
    %186 = arith.mulf %184, %185 : vector<8x128xf32>
    %187 = arith.select %5, %184, %186 : vector<8x128xi1>, vector<8x128xf32>
    %188 = math.tanh %187 : vector<8x128xf32>
    %cst_89 = arith.constant 5.000000e-01 : f32
    %189 = vector.broadcast %cst_89 : f32 to vector<8x128xf32>
    %190 = arith.mulf %188, %189 : vector<8x128xf32>
    %cst_90 = arith.constant 5.000000e-01 : f32
    %191 = vector.broadcast %cst_90 : f32 to vector<8x128xf32>
    %192 = arith.addf %190, %191 : vector<8x128xf32>
    %193 = arith.select %5, %188, %192 : vector<8x128xi1>, vector<8x128xf32>
    %194 = vector.extract_strided_slice %193 {offsets = [0, 0], sizes = [8, 32], strides = [1, 1]} : vector<8x128xf32> to vector<8x32xf32>
    %195 = vector.extract_strided_slice %193 {offsets = [0, 32], sizes = [8, 32], strides = [1, 1]} : vector<8x128xf32> to vector<8x32xf32>
    %196 = vector.extract_strided_slice %193 {offsets = [0, 64], sizes = [8, 32], strides = [1, 1]} : vector<8x128xf32> to vector<8x32xf32>
    %197 = vector.extract_strided_slice %193 {offsets = [0, 96], sizes = [8, 32], strides = [1, 1]} : vector<8x128xf32> to vector<8x32xf32>
    %198 = arith.mulf %195, %149 : vector<8x32xf32>
    %199 = arith.mulf %194, %196 : vector<8x32xf32>
    %200 = arith.addf %198, %199 : vector<8x32xf32>
    %201 = math.tanh %200 : vector<8x32xf32>
    %202 = arith.mulf %197, %201 : vector<8x32xf32>
    %c4_i32 = arith.constant 4 : i32
    %c0_91 = arith.constant 0 : index
    %c0_92 = arith.constant 0 : index
    %203 = vector.load %arg5[%c0_91, %c0_92] : memref<32x128xf32, #tpu.memory_space<vmem>>, vector<32x128xf32>
    %cst_93 = arith.constant dense<0.000000e+00> : vector<8x128xf32>
    %204 = tpu.matmul %176, %203, %cst_93 {dimension_numbers = #tpu.dot_dimension_numbers<[1], [0], [0], [1], [0, 0, 1, 1], [], []>} : vector<8x32xf32>, vector<32x128xf32>, vector<8x128xf32> -> vector<8x128xf32>
    %c8_i32_94 = arith.constant 8 : i32
    %205 = arith.muli %c4_i32, %c8_i32_94 : i32
    %206 = tpu.assume_multiple %205, 8 : i32
    %207 = arith.index_cast %206 : i32 to index
    %c0_95 = arith.constant 0 : index
    %208 = vector.load %arg21[%207, %c0_95] : memref<64x128xf32, #tpu.memory_space<vmem>>, vector<8x128xf32>
    %209 = arith.addf %208, %204 : vector<8x128xf32>
    %cst_96 = arith.constant 5.000000e-01 : f32
    %210 = vector.broadcast %cst_96 : f32 to vector<8x128xf32>
    %211 = arith.mulf %209, %210 : vector<8x128xf32>
    %212 = arith.select %5, %209, %211 : vector<8x128xi1>, vector<8x128xf32>
    %213 = math.tanh %212 : vector<8x128xf32>
    %cst_97 = arith.constant 5.000000e-01 : f32
    %214 = vector.broadcast %cst_97 : f32 to vector<8x128xf32>
    %215 = arith.mulf %213, %214 : vector<8x128xf32>
    %cst_98 = arith.constant 5.000000e-01 : f32
    %216 = vector.broadcast %cst_98 : f32 to vector<8x128xf32>
    %217 = arith.addf %215, %216 : vector<8x128xf32>
    %218 = arith.select %5, %213, %217 : vector<8x128xi1>, vector<8x128xf32>
    %219 = vector.extract_strided_slice %218 {offsets = [0, 0], sizes = [8, 32], strides = [1, 1]} : vector<8x128xf32> to vector<8x32xf32>
    %220 = vector.extract_strided_slice %218 {offsets = [0, 32], sizes = [8, 32], strides = [1, 1]} : vector<8x128xf32> to vector<8x32xf32>
    %221 = vector.extract_strided_slice %218 {offsets = [0, 64], sizes = [8, 32], strides = [1, 1]} : vector<8x128xf32> to vector<8x32xf32>
    %222 = vector.extract_strided_slice %218 {offsets = [0, 96], sizes = [8, 32], strides = [1, 1]} : vector<8x128xf32> to vector<8x32xf32>
    %223 = arith.mulf %220, %174 : vector<8x32xf32>
    %224 = arith.mulf %219, %221 : vector<8x32xf32>
    %225 = arith.addf %223, %224 : vector<8x32xf32>
    %226 = math.tanh %225 : vector<8x32xf32>
    %227 = arith.mulf %222, %226 : vector<8x32xf32>
    %c0_99 = arith.constant 0 : index
    %c0_100 = arith.constant 0 : index
    %228 = vector.load %arg8[%c0_99, %c0_100] : memref<32x128xf32, #tpu.memory_space<vmem>>, vector<32x128xf32>
    %cst_101 = arith.constant dense<0.000000e+00> : vector<8x128xf32>
    %229 = tpu.matmul %202, %228, %cst_101 {dimension_numbers = #tpu.dot_dimension_numbers<[1], [0], [0], [1], [0, 0, 1, 1], [], []>} : vector<8x32xf32>, vector<32x128xf32>, vector<8x128xf32> -> vector<8x128xf32>
    %c0_102 = arith.constant 0 : index
    %c0_103 = arith.constant 0 : index
    %230 = vector.load %arg7[%c0_102, %c0_103] : memref<32x128xf32, #tpu.memory_space<vmem>>, vector<32x128xf32>
    %cst_104 = arith.constant dense<0.000000e+00> : vector<8x128xf32>
    %231 = tpu.matmul %176, %230, %cst_104 {dimension_numbers = #tpu.dot_dimension_numbers<[1], [0], [0], [1], [0, 0, 1, 1], [], []>} : vector<8x32xf32>, vector<32x128xf32>, vector<8x128xf32> -> vector<8x128xf32>
    %232 = arith.addf %231, %229 : vector<8x128xf32>
    %c0_105 = arith.constant 0 : index
    %c0_106 = arith.constant 0 : index
    %233 = vector.load %arg9[%c0_105, %c0_106] : memref<1x128xf32, #tpu.memory_space<vmem>>, vector<1x128xf32>
    %234 = vector.broadcast %233 : vector<1x128xf32> to vector<8x128xf32>
    %235 = arith.addf %232, %234 : vector<8x128xf32>
    %cst_107 = arith.constant 5.000000e-01 : f32
    %236 = vector.broadcast %cst_107 : f32 to vector<8x128xf32>
    %237 = arith.mulf %235, %236 : vector<8x128xf32>
    %238 = arith.select %5, %235, %237 : vector<8x128xi1>, vector<8x128xf32>
    %239 = math.tanh %238 : vector<8x128xf32>
    %cst_108 = arith.constant 5.000000e-01 : f32
    %240 = vector.broadcast %cst_108 : f32 to vector<8x128xf32>
    %241 = arith.mulf %239, %240 : vector<8x128xf32>
    %cst_109 = arith.constant 5.000000e-01 : f32
    %242 = vector.broadcast %cst_109 : f32 to vector<8x128xf32>
    %243 = arith.addf %241, %242 : vector<8x128xf32>
    %244 = arith.select %5, %239, %243 : vector<8x128xi1>, vector<8x128xf32>
    %245 = vector.extract_strided_slice %244 {offsets = [0, 0], sizes = [8, 32], strides = [1, 1]} : vector<8x128xf32> to vector<8x32xf32>
    %246 = vector.extract_strided_slice %244 {offsets = [0, 32], sizes = [8, 32], strides = [1, 1]} : vector<8x128xf32> to vector<8x32xf32>
    %247 = vector.extract_strided_slice %244 {offsets = [0, 64], sizes = [8, 32], strides = [1, 1]} : vector<8x128xf32> to vector<8x32xf32>
    %248 = vector.extract_strided_slice %244 {offsets = [0, 96], sizes = [8, 32], strides = [1, 1]} : vector<8x128xf32> to vector<8x32xf32>
    %249 = arith.mulf %246, %200 : vector<8x32xf32>
    %250 = arith.mulf %245, %247 : vector<8x32xf32>
    %251 = arith.addf %249, %250 : vector<8x32xf32>
    %252 = math.tanh %251 : vector<8x32xf32>
    %253 = arith.mulf %248, %252 : vector<8x32xf32>
    %c5_i32 = arith.constant 5 : i32
    %c0_110 = arith.constant 0 : index
    %c0_111 = arith.constant 0 : index
    %254 = vector.load %arg5[%c0_110, %c0_111] : memref<32x128xf32, #tpu.memory_space<vmem>>, vector<32x128xf32>
    %cst_112 = arith.constant dense<0.000000e+00> : vector<8x128xf32>
    %255 = tpu.matmul %227, %254, %cst_112 {dimension_numbers = #tpu.dot_dimension_numbers<[1], [0], [0], [1], [0, 0, 1, 1], [], []>} : vector<8x32xf32>, vector<32x128xf32>, vector<8x128xf32> -> vector<8x128xf32>
    %c8_i32_113 = arith.constant 8 : i32
    %256 = arith.muli %c5_i32, %c8_i32_113 : i32
    %257 = tpu.assume_multiple %256, 8 : i32
    %258 = arith.index_cast %257 : i32 to index
    %c0_114 = arith.constant 0 : index
    %259 = vector.load %arg21[%258, %c0_114] : memref<64x128xf32, #tpu.memory_space<vmem>>, vector<8x128xf32>
    %260 = arith.addf %259, %255 : vector<8x128xf32>
    %cst_115 = arith.constant 5.000000e-01 : f32
    %261 = vector.broadcast %cst_115 : f32 to vector<8x128xf32>
    %262 = arith.mulf %260, %261 : vector<8x128xf32>
    %263 = arith.select %5, %260, %262 : vector<8x128xi1>, vector<8x128xf32>
    %264 = math.tanh %263 : vector<8x128xf32>
    %cst_116 = arith.constant 5.000000e-01 : f32
    %265 = vector.broadcast %cst_116 : f32 to vector<8x128xf32>
    %266 = arith.mulf %264, %265 : vector<8x128xf32>
    %cst_117 = arith.constant 5.000000e-01 : f32
    %267 = vector.broadcast %cst_117 : f32 to vector<8x128xf32>
    %268 = arith.addf %266, %267 : vector<8x128xf32>
    %269 = arith.select %5, %264, %268 : vector<8x128xi1>, vector<8x128xf32>
    %270 = vector.extract_strided_slice %269 {offsets = [0, 0], sizes = [8, 32], strides = [1, 1]} : vector<8x128xf32> to vector<8x32xf32>
    %271 = vector.extract_strided_slice %269 {offsets = [0, 32], sizes = [8, 32], strides = [1, 1]} : vector<8x128xf32> to vector<8x32xf32>
    %272 = vector.extract_strided_slice %269 {offsets = [0, 64], sizes = [8, 32], strides = [1, 1]} : vector<8x128xf32> to vector<8x32xf32>
    %273 = vector.extract_strided_slice %269 {offsets = [0, 96], sizes = [8, 32], strides = [1, 1]} : vector<8x128xf32> to vector<8x32xf32>
    %274 = arith.mulf %271, %225 : vector<8x32xf32>
    %275 = arith.mulf %270, %272 : vector<8x32xf32>
    %276 = arith.addf %274, %275 : vector<8x32xf32>
    %277 = math.tanh %276 : vector<8x32xf32>
    %278 = arith.mulf %273, %277 : vector<8x32xf32>
    %c0_118 = arith.constant 0 : index
    %c0_119 = arith.constant 0 : index
    %279 = vector.load %arg8[%c0_118, %c0_119] : memref<32x128xf32, #tpu.memory_space<vmem>>, vector<32x128xf32>
    %cst_120 = arith.constant dense<0.000000e+00> : vector<8x128xf32>
    %280 = tpu.matmul %253, %279, %cst_120 {dimension_numbers = #tpu.dot_dimension_numbers<[1], [0], [0], [1], [0, 0, 1, 1], [], []>} : vector<8x32xf32>, vector<32x128xf32>, vector<8x128xf32> -> vector<8x128xf32>
    %c0_121 = arith.constant 0 : index
    %c0_122 = arith.constant 0 : index
    %281 = vector.load %arg7[%c0_121, %c0_122] : memref<32x128xf32, #tpu.memory_space<vmem>>, vector<32x128xf32>
    %cst_123 = arith.constant dense<0.000000e+00> : vector<8x128xf32>
    %282 = tpu.matmul %227, %281, %cst_123 {dimension_numbers = #tpu.dot_dimension_numbers<[1], [0], [0], [1], [0, 0, 1, 1], [], []>} : vector<8x32xf32>, vector<32x128xf32>, vector<8x128xf32> -> vector<8x128xf32>
    %283 = arith.addf %282, %280 : vector<8x128xf32>
    %c0_124 = arith.constant 0 : index
    %c0_125 = arith.constant 0 : index
    %284 = vector.load %arg9[%c0_124, %c0_125] : memref<1x128xf32, #tpu.memory_space<vmem>>, vector<1x128xf32>
    %285 = vector.broadcast %284 : vector<1x128xf32> to vector<8x128xf32>
    %286 = arith.addf %283, %285 : vector<8x128xf32>
    %cst_126 = arith.constant 5.000000e-01 : f32
    %287 = vector.broadcast %cst_126 : f32 to vector<8x128xf32>
    %288 = arith.mulf %286, %287 : vector<8x128xf32>
    %289 = arith.select %5, %286, %288 : vector<8x128xi1>, vector<8x128xf32>
    %290 = math.tanh %289 : vector<8x128xf32>
    %cst_127 = arith.constant 5.000000e-01 : f32
    %291 = vector.broadcast %cst_127 : f32 to vector<8x128xf32>
    %292 = arith.mulf %290, %291 : vector<8x128xf32>
    %cst_128 = arith.constant 5.000000e-01 : f32
    %293 = vector.broadcast %cst_128 : f32 to vector<8x128xf32>
    %294 = arith.addf %292, %293 : vector<8x128xf32>
    %295 = arith.select %5, %290, %294 : vector<8x128xi1>, vector<8x128xf32>
    %296 = vector.extract_strided_slice %295 {offsets = [0, 0], sizes = [8, 32], strides = [1, 1]} : vector<8x128xf32> to vector<8x32xf32>
    %297 = vector.extract_strided_slice %295 {offsets = [0, 32], sizes = [8, 32], strides = [1, 1]} : vector<8x128xf32> to vector<8x32xf32>
    %298 = vector.extract_strided_slice %295 {offsets = [0, 64], sizes = [8, 32], strides = [1, 1]} : vector<8x128xf32> to vector<8x32xf32>
    %299 = vector.extract_strided_slice %295 {offsets = [0, 96], sizes = [8, 32], strides = [1, 1]} : vector<8x128xf32> to vector<8x32xf32>
    %300 = arith.mulf %297, %251 : vector<8x32xf32>
    %301 = arith.mulf %296, %298 : vector<8x32xf32>
    %302 = arith.addf %300, %301 : vector<8x32xf32>
    %303 = math.tanh %302 : vector<8x32xf32>
    %304 = arith.mulf %299, %303 : vector<8x32xf32>
    %c6_i32 = arith.constant 6 : i32
    %c0_129 = arith.constant 0 : index
    %c0_130 = arith.constant 0 : index
    %305 = vector.load %arg5[%c0_129, %c0_130] : memref<32x128xf32, #tpu.memory_space<vmem>>, vector<32x128xf32>
    %cst_131 = arith.constant dense<0.000000e+00> : vector<8x128xf32>
    %306 = tpu.matmul %278, %305, %cst_131 {dimension_numbers = #tpu.dot_dimension_numbers<[1], [0], [0], [1], [0, 0, 1, 1], [], []>} : vector<8x32xf32>, vector<32x128xf32>, vector<8x128xf32> -> vector<8x128xf32>
    %c8_i32_132 = arith.constant 8 : i32
    %307 = arith.muli %c6_i32, %c8_i32_132 : i32
    %308 = tpu.assume_multiple %307, 8 : i32
    %309 = arith.index_cast %308 : i32 to index
    %c0_133 = arith.constant 0 : index
    %310 = vector.load %arg21[%309, %c0_133] : memref<64x128xf32, #tpu.memory_space<vmem>>, vector<8x128xf32>
    %311 = arith.addf %310, %306 : vector<8x128xf32>
    %cst_134 = arith.constant 5.000000e-01 : f32
    %312 = vector.broadcast %cst_134 : f32 to vector<8x128xf32>
    %313 = arith.mulf %311, %312 : vector<8x128xf32>
    %314 = arith.select %5, %311, %313 : vector<8x128xi1>, vector<8x128xf32>
    %315 = math.tanh %314 : vector<8x128xf32>
    %cst_135 = arith.constant 5.000000e-01 : f32
    %316 = vector.broadcast %cst_135 : f32 to vector<8x128xf32>
    %317 = arith.mulf %315, %316 : vector<8x128xf32>
    %cst_136 = arith.constant 5.000000e-01 : f32
    %318 = vector.broadcast %cst_136 : f32 to vector<8x128xf32>
    %319 = arith.addf %317, %318 : vector<8x128xf32>
    %320 = arith.select %5, %315, %319 : vector<8x128xi1>, vector<8x128xf32>
    %321 = vector.extract_strided_slice %320 {offsets = [0, 0], sizes = [8, 32], strides = [1, 1]} : vector<8x128xf32> to vector<8x32xf32>
    %322 = vector.extract_strided_slice %320 {offsets = [0, 32], sizes = [8, 32], strides = [1, 1]} : vector<8x128xf32> to vector<8x32xf32>
    %323 = vector.extract_strided_slice %320 {offsets = [0, 64], sizes = [8, 32], strides = [1, 1]} : vector<8x128xf32> to vector<8x32xf32>
    %324 = vector.extract_strided_slice %320 {offsets = [0, 96], sizes = [8, 32], strides = [1, 1]} : vector<8x128xf32> to vector<8x32xf32>
    %325 = arith.mulf %322, %276 : vector<8x32xf32>
    %326 = arith.mulf %321, %323 : vector<8x32xf32>
    %327 = arith.addf %325, %326 : vector<8x32xf32>
    %328 = math.tanh %327 : vector<8x32xf32>
    %329 = arith.mulf %324, %328 : vector<8x32xf32>
    %c0_137 = arith.constant 0 : index
    %c0_138 = arith.constant 0 : index
    %330 = vector.load %arg8[%c0_137, %c0_138] : memref<32x128xf32, #tpu.memory_space<vmem>>, vector<32x128xf32>
    %cst_139 = arith.constant dense<0.000000e+00> : vector<8x128xf32>
    %331 = tpu.matmul %304, %330, %cst_139 {dimension_numbers = #tpu.dot_dimension_numbers<[1], [0], [0], [1], [0, 0, 1, 1], [], []>} : vector<8x32xf32>, vector<32x128xf32>, vector<8x128xf32> -> vector<8x128xf32>
    %c0_140 = arith.constant 0 : index
    %c0_141 = arith.constant 0 : index
    %332 = vector.load %arg7[%c0_140, %c0_141] : memref<32x128xf32, #tpu.memory_space<vmem>>, vector<32x128xf32>
    %cst_142 = arith.constant dense<0.000000e+00> : vector<8x128xf32>
    %333 = tpu.matmul %278, %332, %cst_142 {dimension_numbers = #tpu.dot_dimension_numbers<[1], [0], [0], [1], [0, 0, 1, 1], [], []>} : vector<8x32xf32>, vector<32x128xf32>, vector<8x128xf32> -> vector<8x128xf32>
    %334 = arith.addf %333, %331 : vector<8x128xf32>
    %c0_143 = arith.constant 0 : index
    %c0_144 = arith.constant 0 : index
    %335 = vector.load %arg9[%c0_143, %c0_144] : memref<1x128xf32, #tpu.memory_space<vmem>>, vector<1x128xf32>
    %336 = vector.broadcast %335 : vector<1x128xf32> to vector<8x128xf32>
    %337 = arith.addf %334, %336 : vector<8x128xf32>
    %cst_145 = arith.constant 5.000000e-01 : f32
    %338 = vector.broadcast %cst_145 : f32 to vector<8x128xf32>
    %339 = arith.mulf %337, %338 : vector<8x128xf32>
    %340 = arith.select %5, %337, %339 : vector<8x128xi1>, vector<8x128xf32>
    %341 = math.tanh %340 : vector<8x128xf32>
    %cst_146 = arith.constant 5.000000e-01 : f32
    %342 = vector.broadcast %cst_146 : f32 to vector<8x128xf32>
    %343 = arith.mulf %341, %342 : vector<8x128xf32>
    %cst_147 = arith.constant 5.000000e-01 : f32
    %344 = vector.broadcast %cst_147 : f32 to vector<8x128xf32>
    %345 = arith.addf %343, %344 : vector<8x128xf32>
    %346 = arith.select %5, %341, %345 : vector<8x128xi1>, vector<8x128xf32>
    %347 = vector.extract_strided_slice %346 {offsets = [0, 0], sizes = [8, 32], strides = [1, 1]} : vector<8x128xf32> to vector<8x32xf32>
    %348 = vector.extract_strided_slice %346 {offsets = [0, 32], sizes = [8, 32], strides = [1, 1]} : vector<8x128xf32> to vector<8x32xf32>
    %349 = vector.extract_strided_slice %346 {offsets = [0, 64], sizes = [8, 32], strides = [1, 1]} : vector<8x128xf32> to vector<8x32xf32>
    %350 = vector.extract_strided_slice %346 {offsets = [0, 96], sizes = [8, 32], strides = [1, 1]} : vector<8x128xf32> to vector<8x32xf32>
    %351 = arith.mulf %348, %302 : vector<8x32xf32>
    %352 = arith.mulf %347, %349 : vector<8x32xf32>
    %353 = arith.addf %351, %352 : vector<8x32xf32>
    %354 = math.tanh %353 : vector<8x32xf32>
    %355 = arith.mulf %350, %354 : vector<8x32xf32>
    %c7_i32 = arith.constant 7 : i32
    %c0_148 = arith.constant 0 : index
    %c0_149 = arith.constant 0 : index
    %356 = vector.load %arg5[%c0_148, %c0_149] : memref<32x128xf32, #tpu.memory_space<vmem>>, vector<32x128xf32>
    %cst_150 = arith.constant dense<0.000000e+00> : vector<8x128xf32>
    %357 = tpu.matmul %329, %356, %cst_150 {dimension_numbers = #tpu.dot_dimension_numbers<[1], [0], [0], [1], [0, 0, 1, 1], [], []>} : vector<8x32xf32>, vector<32x128xf32>, vector<8x128xf32> -> vector<8x128xf32>
    %c8_i32_151 = arith.constant 8 : i32
    %358 = arith.muli %c7_i32, %c8_i32_151 : i32
    %359 = tpu.assume_multiple %358, 8 : i32
    %360 = arith.index_cast %359 : i32 to index
    %c0_152 = arith.constant 0 : index
    %361 = vector.load %arg21[%360, %c0_152] : memref<64x128xf32, #tpu.memory_space<vmem>>, vector<8x128xf32>
    %362 = arith.addf %361, %357 : vector<8x128xf32>
    %cst_153 = arith.constant 5.000000e-01 : f32
    %363 = vector.broadcast %cst_153 : f32 to vector<8x128xf32>
    %364 = arith.mulf %362, %363 : vector<8x128xf32>
    %365 = arith.select %5, %362, %364 : vector<8x128xi1>, vector<8x128xf32>
    %366 = math.tanh %365 : vector<8x128xf32>
    %cst_154 = arith.constant 5.000000e-01 : f32
    %367 = vector.broadcast %cst_154 : f32 to vector<8x128xf32>
    %368 = arith.mulf %366, %367 : vector<8x128xf32>
    %cst_155 = arith.constant 5.000000e-01 : f32
    %369 = vector.broadcast %cst_155 : f32 to vector<8x128xf32>
    %370 = arith.addf %368, %369 : vector<8x128xf32>
    %371 = arith.select %5, %366, %370 : vector<8x128xi1>, vector<8x128xf32>
    %372 = vector.extract_strided_slice %371 {offsets = [0, 0], sizes = [8, 32], strides = [1, 1]} : vector<8x128xf32> to vector<8x32xf32>
    %373 = vector.extract_strided_slice %371 {offsets = [0, 32], sizes = [8, 32], strides = [1, 1]} : vector<8x128xf32> to vector<8x32xf32>
    %374 = vector.extract_strided_slice %371 {offsets = [0, 64], sizes = [8, 32], strides = [1, 1]} : vector<8x128xf32> to vector<8x32xf32>
    %375 = vector.extract_strided_slice %371 {offsets = [0, 96], sizes = [8, 32], strides = [1, 1]} : vector<8x128xf32> to vector<8x32xf32>
    %376 = arith.mulf %373, %327 : vector<8x32xf32>
    %377 = arith.mulf %372, %374 : vector<8x32xf32>
    %378 = arith.addf %376, %377 : vector<8x32xf32>
    %379 = math.tanh %378 : vector<8x32xf32>
    %380 = arith.mulf %375, %379 : vector<8x32xf32>
    %c0_156 = arith.constant 0 : index
    %c0_157 = arith.constant 0 : index
    %381 = vector.load %arg8[%c0_156, %c0_157] : memref<32x128xf32, #tpu.memory_space<vmem>>, vector<32x128xf32>
    %cst_158 = arith.constant dense<0.000000e+00> : vector<8x128xf32>
    %382 = tpu.matmul %355, %381, %cst_158 {dimension_numbers = #tpu.dot_dimension_numbers<[1], [0], [0], [1], [0, 0, 1, 1], [], []>} : vector<8x32xf32>, vector<32x128xf32>, vector<8x128xf32> -> vector<8x128xf32>
    %c0_159 = arith.constant 0 : index
    %c0_160 = arith.constant 0 : index
    %383 = vector.load %arg7[%c0_159, %c0_160] : memref<32x128xf32, #tpu.memory_space<vmem>>, vector<32x128xf32>
    %cst_161 = arith.constant dense<0.000000e+00> : vector<8x128xf32>
    %384 = tpu.matmul %329, %383, %cst_161 {dimension_numbers = #tpu.dot_dimension_numbers<[1], [0], [0], [1], [0, 0, 1, 1], [], []>} : vector<8x32xf32>, vector<32x128xf32>, vector<8x128xf32> -> vector<8x128xf32>
    %385 = arith.addf %384, %382 : vector<8x128xf32>
    %c0_162 = arith.constant 0 : index
    %c0_163 = arith.constant 0 : index
    %386 = vector.load %arg9[%c0_162, %c0_163] : memref<1x128xf32, #tpu.memory_space<vmem>>, vector<1x128xf32>
    %387 = vector.broadcast %386 : vector<1x128xf32> to vector<8x128xf32>
    %388 = arith.addf %385, %387 : vector<8x128xf32>
    %cst_164 = arith.constant 5.000000e-01 : f32
    %389 = vector.broadcast %cst_164 : f32 to vector<8x128xf32>
    %390 = arith.mulf %388, %389 : vector<8x128xf32>
    %391 = arith.select %5, %388, %390 : vector<8x128xi1>, vector<8x128xf32>
    %392 = math.tanh %391 : vector<8x128xf32>
    %cst_165 = arith.constant 5.000000e-01 : f32
    %393 = vector.broadcast %cst_165 : f32 to vector<8x128xf32>
    %394 = arith.mulf %392, %393 : vector<8x128xf32>
    %cst_166 = arith.constant 5.000000e-01 : f32
    %395 = vector.broadcast %cst_166 : f32 to vector<8x128xf32>
    %396 = arith.addf %394, %395 : vector<8x128xf32>
    %397 = arith.select %5, %392, %396 : vector<8x128xi1>, vector<8x128xf32>
    %398 = vector.extract_strided_slice %397 {offsets = [0, 0], sizes = [8, 32], strides = [1, 1]} : vector<8x128xf32> to vector<8x32xf32>
    %399 = vector.extract_strided_slice %397 {offsets = [0, 32], sizes = [8, 32], strides = [1, 1]} : vector<8x128xf32> to vector<8x32xf32>
    %400 = vector.extract_strided_slice %397 {offsets = [0, 64], sizes = [8, 32], strides = [1, 1]} : vector<8x128xf32> to vector<8x32xf32>
    %401 = vector.extract_strided_slice %397 {offsets = [0, 96], sizes = [8, 32], strides = [1, 1]} : vector<8x128xf32> to vector<8x32xf32>
    %402 = arith.mulf %399, %353 : vector<8x32xf32>
    %403 = arith.mulf %398, %400 : vector<8x32xf32>
    %404 = arith.addf %402, %403 : vector<8x32xf32>
    %405 = math.tanh %404 : vector<8x32xf32>
    %406 = arith.mulf %401, %405 : vector<8x32xf32>
    %c7_i32_167 = arith.constant 7 : i32
    %c0_168 = arith.constant 0 : index
    %c0_169 = arith.constant 0 : index
    %407 = vector.load %arg8[%c0_168, %c0_169] : memref<32x128xf32, #tpu.memory_space<vmem>>, vector<32x128xf32>
    %cst_170 = arith.constant dense<0.000000e+00> : vector<8x128xf32>
    %408 = tpu.matmul %406, %407, %cst_170 {dimension_numbers = #tpu.dot_dimension_numbers<[1], [0], [0], [1], [0, 0, 1, 1], [], []>} : vector<8x32xf32>, vector<32x128xf32>, vector<8x128xf32> -> vector<8x128xf32>
    %c0_171 = arith.constant 0 : index
    %c0_172 = arith.constant 0 : index
    %409 = vector.load %arg7[%c0_171, %c0_172] : memref<32x128xf32, #tpu.memory_space<vmem>>, vector<32x128xf32>
    %cst_173 = arith.constant dense<0.000000e+00> : vector<8x128xf32>
    %410 = tpu.matmul %380, %409, %cst_173 {dimension_numbers = #tpu.dot_dimension_numbers<[1], [0], [0], [1], [0, 0, 1, 1], [], []>} : vector<8x32xf32>, vector<32x128xf32>, vector<8x128xf32> -> vector<8x128xf32>
    %411 = arith.addf %410, %408 : vector<8x128xf32>
    %c0_174 = arith.constant 0 : index
    %c0_175 = arith.constant 0 : index
    %412 = vector.load %arg9[%c0_174, %c0_175] : memref<1x128xf32, #tpu.memory_space<vmem>>, vector<1x128xf32>
    %413 = vector.broadcast %412 : vector<1x128xf32> to vector<8x128xf32>
    %414 = arith.addf %411, %413 : vector<8x128xf32>
    %cst_176 = arith.constant 5.000000e-01 : f32
    %415 = vector.broadcast %cst_176 : f32 to vector<8x128xf32>
    %416 = arith.mulf %414, %415 : vector<8x128xf32>
    %417 = arith.select %5, %414, %416 : vector<8x128xi1>, vector<8x128xf32>
    %418 = math.tanh %417 : vector<8x128xf32>
    %cst_177 = arith.constant 5.000000e-01 : f32
    %419 = vector.broadcast %cst_177 : f32 to vector<8x128xf32>
    %420 = arith.mulf %418, %419 : vector<8x128xf32>
    %cst_178 = arith.constant 5.000000e-01 : f32
    %421 = vector.broadcast %cst_178 : f32 to vector<8x128xf32>
    %422 = arith.addf %420, %421 : vector<8x128xf32>
    %423 = arith.select %5, %418, %422 : vector<8x128xi1>, vector<8x128xf32>
    %424 = vector.extract_strided_slice %423 {offsets = [0, 0], sizes = [8, 32], strides = [1, 1]} : vector<8x128xf32> to vector<8x32xf32>
    %425 = vector.extract_strided_slice %423 {offsets = [0, 32], sizes = [8, 32], strides = [1, 1]} : vector<8x128xf32> to vector<8x32xf32>
    %426 = vector.extract_strided_slice %423 {offsets = [0, 64], sizes = [8, 32], strides = [1, 1]} : vector<8x128xf32> to vector<8x32xf32>
    %427 = vector.extract_strided_slice %423 {offsets = [0, 96], sizes = [8, 32], strides = [1, 1]} : vector<8x128xf32> to vector<8x32xf32>
    %428 = arith.mulf %425, %404 : vector<8x32xf32>
    %429 = arith.mulf %424, %426 : vector<8x32xf32>
    %430 = arith.addf %428, %429 : vector<8x32xf32>
    %431 = math.tanh %430 : vector<8x32xf32>
    %432 = arith.mulf %427, %431 : vector<8x32xf32>
    %c0_179 = arith.constant 0 : index
    %c0_180 = arith.constant 0 : index
    %c0_181 = arith.constant 0 : index
    %433 = vector.load %arg19[%c0_179, %c0_180, %c0_181] : memref<2x8x32xf32, #tpu.memory_space<vmem>>, vector<1x8x32xf32>
    %434 = vector.shape_cast %433 : vector<1x8x32xf32> to vector<8x32xf32>
    %435 = vector.shape_cast %380 : vector<8x32xf32> to vector<1x8x32xf32>
    tpu.vector_store %arg19[%c0_179, %c0_180, %c0_181], %435 {strides = array<i32>} : memref<2x8x32xf32, #tpu.memory_space<vmem>>, vector<1x8x32xf32>,
    %c0_182 = arith.constant 0 : index
    %c0_183 = arith.constant 0 : index
    %c0_184 = arith.constant 0 : index
    %436 = vector.load %arg20[%c0_182, %c0_183, %c0_184] : memref<2x8x32xf32, #tpu.memory_space<vmem>>, vector<1x8x32xf32>
    %437 = vector.shape_cast %436 : vector<1x8x32xf32> to vector<8x32xf32>
    %438 = vector.shape_cast %378 : vector<8x32xf32> to vector<1x8x32xf32>
    tpu.vector_store %arg20[%c0_182, %c0_183, %c0_184], %438 {strides = array<i32>} : memref<2x8x32xf32, #tpu.memory_space<vmem>>, vector<1x8x32xf32>,
    %c1_185 = arith.constant 1 : index
    %c0_186 = arith.constant 0 : index
    %c0_187 = arith.constant 0 : index
    %439 = vector.load %arg19[%c1_185, %c0_186, %c0_187] : memref<2x8x32xf32, #tpu.memory_space<vmem>>, vector<1x8x32xf32>
    %440 = vector.shape_cast %439 : vector<1x8x32xf32> to vector<8x32xf32>
    %441 = vector.shape_cast %432 : vector<8x32xf32> to vector<1x8x32xf32>
    tpu.vector_store %arg19[%c1_185, %c0_186, %c0_187], %441 {strides = array<i32>} : memref<2x8x32xf32, #tpu.memory_space<vmem>>, vector<1x8x32xf32>,
    %c1_188 = arith.constant 1 : index
    %c0_189 = arith.constant 0 : index
    %c0_190 = arith.constant 0 : index
    %442 = vector.load %arg20[%c1_188, %c0_189, %c0_190] : memref<2x8x32xf32, #tpu.memory_space<vmem>>, vector<1x8x32xf32>
    %443 = vector.shape_cast %442 : vector<1x8x32xf32> to vector<8x32xf32>
    %444 = vector.shape_cast %430 : vector<8x32xf32> to vector<1x8x32xf32>
    tpu.vector_store %arg20[%c1_188, %c0_189, %c0_190], %444 {strides = array<i32>} : memref<2x8x32xf32, #tpu.memory_space<vmem>>, vector<1x8x32xf32>,
    %c0_191 = arith.constant 0 : index
    %c0_192 = arith.constant 0 : index
    %445 = vector.load %arg11[%c0_191, %c0_192] : memref<32x128xf32, #tpu.memory_space<vmem>>, vector<32x128xf32>
    %cst_193 = arith.constant dense<0.000000e+00> : vector<8x128xf32>
    %446 = tpu.matmul %380, %445, %cst_193 {dimension_numbers = #tpu.dot_dimension_numbers<[1], [0], [0], [1], [0, 0, 1, 1], [], []>} : vector<8x32xf32>, vector<32x128xf32>, vector<8x128xf32> -> vector<8x128xf32>
    %c0_194 = arith.constant 0 : index
    %c0_195 = arith.constant 0 : index
    %447 = vector.load %arg22[%c0_194, %c0_195] : memref<40x128xf32, #tpu.memory_space<vmem>>, vector<8x128xf32>
    %448 = arith.addf %447, %446 : vector<8x128xf32>
    %cst_196 = arith.constant 5.000000e-01 : f32
    %449 = vector.broadcast %cst_196 : f32 to vector<8x128xf32>
    %450 = arith.mulf %448, %449 : vector<8x128xf32>
    %451 = arith.select %5, %448, %450 : vector<8x128xi1>, vector<8x128xf32>
    %452 = math.tanh %451 : vector<8x128xf32>
    %cst_197 = arith.constant 5.000000e-01 : f32
    %453 = vector.broadcast %cst_197 : f32 to vector<8x128xf32>
    %454 = arith.mulf %452, %453 : vector<8x128xf32>
    %cst_198 = arith.constant 5.000000e-01 : f32
    %455 = vector.broadcast %cst_198 : f32 to vector<8x128xf32>
    %456 = arith.addf %454, %455 : vector<8x128xf32>
    %457 = arith.select %5, %452, %456 : vector<8x128xi1>, vector<8x128xf32>
    %458 = vector.extract_strided_slice %457 {offsets = [0, 0], sizes = [8, 32], strides = [1, 1]} : vector<8x128xf32> to vector<8x32xf32>
    %459 = vector.extract_strided_slice %457 {offsets = [0, 32], sizes = [8, 32], strides = [1, 1]} : vector<8x128xf32> to vector<8x32xf32>
    %460 = vector.extract_strided_slice %457 {offsets = [0, 64], sizes = [8, 32], strides = [1, 1]} : vector<8x128xf32> to vector<8x32xf32>
    %461 = vector.extract_strided_slice %457 {offsets = [0, 96], sizes = [8, 32], strides = [1, 1]} : vector<8x128xf32> to vector<8x32xf32>
    %462 = arith.mulf %459, %378 : vector<8x32xf32>
    %463 = arith.mulf %458, %460 : vector<8x32xf32>
    %464 = arith.addf %462, %463 : vector<8x32xf32>
    %465 = math.tanh %464 : vector<8x32xf32>
    %466 = arith.mulf %461, %465 : vector<8x32xf32>
    %c1_i32_199 = arith.constant 1 : i32
    %c0_200 = arith.constant 0 : index
    %c0_201 = arith.constant 0 : index
    %467 = vector.load %arg11[%c0_200, %c0_201] : memref<32x128xf32, #tpu.memory_space<vmem>>, vector<32x128xf32>
    %cst_202 = arith.constant dense<0.000000e+00> : vector<8x128xf32>
    %468 = tpu.matmul %466, %467, %cst_202 {dimension_numbers = #tpu.dot_dimension_numbers<[1], [0], [0], [1], [0, 0, 1, 1], [], []>} : vector<8x32xf32>, vector<32x128xf32>, vector<8x128xf32> -> vector<8x128xf32>
    %c8_i32_203 = arith.constant 8 : i32
    %469 = arith.muli %c1_i32_199, %c8_i32_203 : i32
    %470 = tpu.assume_multiple %469, 8 : i32
    %471 = arith.index_cast %470 : i32 to index
    %c0_204 = arith.constant 0 : index
    %472 = vector.load %arg22[%471, %c0_204] : memref<40x128xf32, #tpu.memory_space<vmem>>, vector<8x128xf32>
    %473 = arith.addf %472, %468 : vector<8x128xf32>
    %cst_205 = arith.constant 5.000000e-01 : f32
    %474 = vector.broadcast %cst_205 : f32 to vector<8x128xf32>
    %475 = arith.mulf %473, %474 : vector<8x128xf32>
    %476 = arith.select %5, %473, %475 : vector<8x128xi1>, vector<8x128xf32>
    %477 = math.tanh %476 : vector<8x128xf32>
    %cst_206 = arith.constant 5.000000e-01 : f32
    %478 = vector.broadcast %cst_206 : f32 to vector<8x128xf32>
    %479 = arith.mulf %477, %478 : vector<8x128xf32>
    %cst_207 = arith.constant 5.000000e-01 : f32
    %480 = vector.broadcast %cst_207 : f32 to vector<8x128xf32>
    %481 = arith.addf %479, %480 : vector<8x128xf32>
    %482 = arith.select %5, %477, %481 : vector<8x128xi1>, vector<8x128xf32>
    %483 = vector.extract_strided_slice %482 {offsets = [0, 0], sizes = [8, 32], strides = [1, 1]} : vector<8x128xf32> to vector<8x32xf32>
    %484 = vector.extract_strided_slice %482 {offsets = [0, 32], sizes = [8, 32], strides = [1, 1]} : vector<8x128xf32> to vector<8x32xf32>
    %485 = vector.extract_strided_slice %482 {offsets = [0, 64], sizes = [8, 32], strides = [1, 1]} : vector<8x128xf32> to vector<8x32xf32>
    %486 = vector.extract_strided_slice %482 {offsets = [0, 96], sizes = [8, 32], strides = [1, 1]} : vector<8x128xf32> to vector<8x32xf32>
    %487 = arith.mulf %484, %464 : vector<8x32xf32>
    %488 = arith.mulf %483, %485 : vector<8x32xf32>
    %489 = arith.addf %487, %488 : vector<8x32xf32>
    %490 = math.tanh %489 : vector<8x32xf32>
    %491 = arith.mulf %486, %490 : vector<8x32xf32>
    %c0_208 = arith.constant 0 : index
    %c0_209 = arith.constant 0 : index
    %492 = vector.load %arg14[%c0_208, %c0_209] : memref<32x128xf32, #tpu.memory_space<vmem>>, vector<32x128xf32>
    %cst_210 = arith.constant dense<0.000000e+00> : vector<8x128xf32>
    %493 = tpu.matmul %432, %492, %cst_210 {dimension_numbers = #tpu.dot_dimension_numbers<[1], [0], [0], [1], [0, 0, 1, 1], [], []>} : vector<8x32xf32>, vector<32x128xf32>, vector<8x128xf32> -> vector<8x128xf32>
    %c0_211 = arith.constant 0 : index
    %c0_212 = arith.constant 0 : index
    %494 = vector.load %arg13[%c0_211, %c0_212] : memref<32x128xf32, #tpu.memory_space<vmem>>, vector<32x128xf32>
    %cst_213 = arith.constant dense<0.000000e+00> : vector<8x128xf32>
    %495 = tpu.matmul %466, %494, %cst_213 {dimension_numbers = #tpu.dot_dimension_numbers<[1], [0], [0], [1], [0, 0, 1, 1], [], []>} : vector<8x32xf32>, vector<32x128xf32>, vector<8x128xf32> -> vector<8x128xf32>
    %496 = arith.addf %495, %493 : vector<8x128xf32>
    %c0_214 = arith.constant 0 : index
    %c0_215 = arith.constant 0 : index
    %497 = vector.load %arg15[%c0_214, %c0_215] : memref<1x128xf32, #tpu.memory_space<vmem>>, vector<1x128xf32>
    %498 = vector.broadcast %497 : vector<1x128xf32> to vector<8x128xf32>
    %499 = arith.addf %496, %498 : vector<8x128xf32>
    %cst_216 = arith.constant 5.000000e-01 : f32
    %500 = vector.broadcast %cst_216 : f32 to vector<8x128xf32>
    %501 = arith.mulf %499, %500 : vector<8x128xf32>
    %502 = arith.select %5, %499, %501 : vector<8x128xi1>, vector<8x128xf32>
    %503 = math.tanh %502 : vector<8x128xf32>
    %cst_217 = arith.constant 5.000000e-01 : f32
    %504 = vector.broadcast %cst_217 : f32 to vector<8x128xf32>
    %505 = arith.mulf %503, %504 : vector<8x128xf32>
    %cst_218 = arith.constant 5.000000e-01 : f32
    %506 = vector.broadcast %cst_218 : f32 to vector<8x128xf32>
    %507 = arith.addf %505, %506 : vector<8x128xf32>
    %508 = arith.select %5, %503, %507 : vector<8x128xi1>, vector<8x128xf32>
    %509 = vector.extract_strided_slice %508 {offsets = [0, 0], sizes = [8, 32], strides = [1, 1]} : vector<8x128xf32> to vector<8x32xf32>
    %510 = vector.extract_strided_slice %508 {offsets = [0, 32], sizes = [8, 32], strides = [1, 1]} : vector<8x128xf32> to vector<8x32xf32>
    %511 = vector.extract_strided_slice %508 {offsets = [0, 64], sizes = [8, 32], strides = [1, 1]} : vector<8x128xf32> to vector<8x32xf32>
    %512 = vector.extract_strided_slice %508 {offsets = [0, 96], sizes = [8, 32], strides = [1, 1]} : vector<8x128xf32> to vector<8x32xf32>
    %513 = arith.mulf %510, %430 : vector<8x32xf32>
    %514 = arith.mulf %509, %511 : vector<8x32xf32>
    %515 = arith.addf %513, %514 : vector<8x32xf32>
    %516 = math.tanh %515 : vector<8x32xf32>
    %517 = arith.mulf %512, %516 : vector<8x32xf32>
    %c2_i32_219 = arith.constant 2 : i32
    %c0_220 = arith.constant 0 : index
    %c0_221 = arith.constant 0 : index
    %518 = vector.load %arg11[%c0_220, %c0_221] : memref<32x128xf32, #tpu.memory_space<vmem>>, vector<32x128xf32>
    %cst_222 = arith.constant dense<0.000000e+00> : vector<8x128xf32>
    %519 = tpu.matmul %491, %518, %cst_222 {dimension_numbers = #tpu.dot_dimension_numbers<[1], [0], [0], [1], [0, 0, 1, 1], [], []>} : vector<8x32xf32>, vector<32x128xf32>, vector<8x128xf32> -> vector<8x128xf32>
    %c8_i32_223 = arith.constant 8 : i32
    %520 = arith.muli %c2_i32_219, %c8_i32_223 : i32
    %521 = tpu.assume_multiple %520, 8 : i32
    %522 = arith.index_cast %521 : i32 to index
    %c0_224 = arith.constant 0 : index
    %523 = vector.load %arg22[%522, %c0_224] : memref<40x128xf32, #tpu.memory_space<vmem>>, vector<8x128xf32>
    %524 = arith.addf %523, %519 : vector<8x128xf32>
    %cst_225 = arith.constant 5.000000e-01 : f32
    %525 = vector.broadcast %cst_225 : f32 to vector<8x128xf32>
    %526 = arith.mulf %524, %525 : vector<8x128xf32>
    %527 = arith.select %5, %524, %526 : vector<8x128xi1>, vector<8x128xf32>
    %528 = math.tanh %527 : vector<8x128xf32>
    %cst_226 = arith.constant 5.000000e-01 : f32
    %529 = vector.broadcast %cst_226 : f32 to vector<8x128xf32>
    %530 = arith.mulf %528, %529 : vector<8x128xf32>
    %cst_227 = arith.constant 5.000000e-01 : f32
    %531 = vector.broadcast %cst_227 : f32 to vector<8x128xf32>
    %532 = arith.addf %530, %531 : vector<8x128xf32>
    %533 = arith.select %5, %528, %532 : vector<8x128xi1>, vector<8x128xf32>
    %534 = vector.extract_strided_slice %533 {offsets = [0, 0], sizes = [8, 32], strides = [1, 1]} : vector<8x128xf32> to vector<8x32xf32>
    %535 = vector.extract_strided_slice %533 {offsets = [0, 32], sizes = [8, 32], strides = [1, 1]} : vector<8x128xf32> to vector<8x32xf32>
    %536 = vector.extract_strided_slice %533 {offsets = [0, 64], sizes = [8, 32], strides = [1, 1]} : vector<8x128xf32> to vector<8x32xf32>
    %537 = vector.extract_strided_slice %533 {offsets = [0, 96], sizes = [8, 32], strides = [1, 1]} : vector<8x128xf32> to vector<8x32xf32>
    %538 = arith.mulf %535, %489 : vector<8x32xf32>
    %539 = arith.mulf %534, %536 : vector<8x32xf32>
    %540 = arith.addf %538, %539 : vector<8x32xf32>
    %541 = math.tanh %540 : vector<8x32xf32>
    %542 = arith.mulf %537, %541 : vector<8x32xf32>
    %c0_228 = arith.constant 0 : index
    %c0_229 = arith.constant 0 : index
    %543 = vector.load %arg14[%c0_228, %c0_229] : memref<32x128xf32, #tpu.memory_space<vmem>>, vector<32x128xf32>
    %cst_230 = arith.constant dense<0.000000e+00> : vector<8x128xf32>
    %544 = tpu.matmul %517, %543, %cst_230 {dimension_numbers = #tpu.dot_dimension_numbers<[1], [0], [0], [1], [0, 0, 1, 1], [], []>} : vector<8x32xf32>, vector<32x128xf32>, vector<8x128xf32> -> vector<8x128xf32>
    %c0_231 = arith.constant 0 : index
    %c0_232 = arith.constant 0 : index
    %545 = vector.load %arg13[%c0_231, %c0_232] : memref<32x128xf32, #tpu.memory_space<vmem>>, vector<32x128xf32>
    %cst_233 = arith.constant dense<0.000000e+00> : vector<8x128xf32>
    %546 = tpu.matmul %491, %545, %cst_233 {dimension_numbers = #tpu.dot_dimension_numbers<[1], [0], [0], [1], [0, 0, 1, 1], [], []>} : vector<8x32xf32>, vector<32x128xf32>, vector<8x128xf32> -> vector<8x128xf32>
    %547 = arith.addf %546, %544 : vector<8x128xf32>
    %c0_234 = arith.constant 0 : index
    %c0_235 = arith.constant 0 : index
    %548 = vector.load %arg15[%c0_234, %c0_235] : memref<1x128xf32, #tpu.memory_space<vmem>>, vector<1x128xf32>
    %549 = vector.broadcast %548 : vector<1x128xf32> to vector<8x128xf32>
    %550 = arith.addf %547, %549 : vector<8x128xf32>
    %cst_236 = arith.constant 5.000000e-01 : f32
    %551 = vector.broadcast %cst_236 : f32 to vector<8x128xf32>
    %552 = arith.mulf %550, %551 : vector<8x128xf32>
    %553 = arith.select %5, %550, %552 : vector<8x128xi1>, vector<8x128xf32>
    %554 = math.tanh %553 : vector<8x128xf32>
    %cst_237 = arith.constant 5.000000e-01 : f32
    %555 = vector.broadcast %cst_237 : f32 to vector<8x128xf32>
    %556 = arith.mulf %554, %555 : vector<8x128xf32>
    %cst_238 = arith.constant 5.000000e-01 : f32
    %557 = vector.broadcast %cst_238 : f32 to vector<8x128xf32>
    %558 = arith.addf %556, %557 : vector<8x128xf32>
    %559 = arith.select %5, %554, %558 : vector<8x128xi1>, vector<8x128xf32>
    %560 = vector.extract_strided_slice %559 {offsets = [0, 0], sizes = [8, 32], strides = [1, 1]} : vector<8x128xf32> to vector<8x32xf32>
    %561 = vector.extract_strided_slice %559 {offsets = [0, 32], sizes = [8, 32], strides = [1, 1]} : vector<8x128xf32> to vector<8x32xf32>
    %562 = vector.extract_strided_slice %559 {offsets = [0, 64], sizes = [8, 32], strides = [1, 1]} : vector<8x128xf32> to vector<8x32xf32>
    %563 = vector.extract_strided_slice %559 {offsets = [0, 96], sizes = [8, 32], strides = [1, 1]} : vector<8x128xf32> to vector<8x32xf32>
    %564 = arith.mulf %561, %515 : vector<8x32xf32>
    %565 = arith.mulf %560, %562 : vector<8x32xf32>
    %566 = arith.addf %564, %565 : vector<8x32xf32>
    %567 = math.tanh %566 : vector<8x32xf32>
    %568 = arith.mulf %563, %567 : vector<8x32xf32>
    %c3_i32_239 = arith.constant 3 : i32
    %c0_240 = arith.constant 0 : index
    %c0_241 = arith.constant 0 : index
    %569 = vector.load %arg11[%c0_240, %c0_241] : memref<32x128xf32, #tpu.memory_space<vmem>>, vector<32x128xf32>
    %cst_242 = arith.constant dense<0.000000e+00> : vector<8x128xf32>
    %570 = tpu.matmul %542, %569, %cst_242 {dimension_numbers = #tpu.dot_dimension_numbers<[1], [0], [0], [1], [0, 0, 1, 1], [], []>} : vector<8x32xf32>, vector<32x128xf32>, vector<8x128xf32> -> vector<8x128xf32>
    %c8_i32_243 = arith.constant 8 : i32
    %571 = arith.muli %c3_i32_239, %c8_i32_243 : i32
    %572 = tpu.assume_multiple %571, 8 : i32
    %573 = arith.index_cast %572 : i32 to index
    %c0_244 = arith.constant 0 : index
    %574 = vector.load %arg22[%573, %c0_244] : memref<40x128xf32, #tpu.memory_space<vmem>>, vector<8x128xf32>
    %575 = arith.addf %574, %570 : vector<8x128xf32>
    %cst_245 = arith.constant 5.000000e-01 : f32
    %576 = vector.broadcast %cst_245 : f32 to vector<8x128xf32>
    %577 = arith.mulf %575, %576 : vector<8x128xf32>
    %578 = arith.select %5, %575, %577 : vector<8x128xi1>, vector<8x128xf32>
    %579 = math.tanh %578 : vector<8x128xf32>
    %cst_246 = arith.constant 5.000000e-01 : f32
    %580 = vector.broadcast %cst_246 : f32 to vector<8x128xf32>
    %581 = arith.mulf %579, %580 : vector<8x128xf32>
    %cst_247 = arith.constant 5.000000e-01 : f32
    %582 = vector.broadcast %cst_247 : f32 to vector<8x128xf32>
    %583 = arith.addf %581, %582 : vector<8x128xf32>
    %584 = arith.select %5, %579, %583 : vector<8x128xi1>, vector<8x128xf32>
    %585 = vector.extract_strided_slice %584 {offsets = [0, 0], sizes = [8, 32], strides = [1, 1]} : vector<8x128xf32> to vector<8x32xf32>
    %586 = vector.extract_strided_slice %584 {offsets = [0, 32], sizes = [8, 32], strides = [1, 1]} : vector<8x128xf32> to vector<8x32xf32>
    %587 = vector.extract_strided_slice %584 {offsets = [0, 64], sizes = [8, 32], strides = [1, 1]} : vector<8x128xf32> to vector<8x32xf32>
    %588 = vector.extract_strided_slice %584 {offsets = [0, 96], sizes = [8, 32], strides = [1, 1]} : vector<8x128xf32> to vector<8x32xf32>
    %589 = arith.mulf %586, %540 : vector<8x32xf32>
    %590 = arith.mulf %585, %587 : vector<8x32xf32>
    %591 = arith.addf %589, %590 : vector<8x32xf32>
    %592 = math.tanh %591 : vector<8x32xf32>
    %593 = arith.mulf %588, %592 : vector<8x32xf32>
    %c0_248 = arith.constant 0 : index
    %c0_249 = arith.constant 0 : index
    %594 = vector.load %arg14[%c0_248, %c0_249] : memref<32x128xf32, #tpu.memory_space<vmem>>, vector<32x128xf32>
    %cst_250 = arith.constant dense<0.000000e+00> : vector<8x128xf32>
    %595 = tpu.matmul %568, %594, %cst_250 {dimension_numbers = #tpu.dot_dimension_numbers<[1], [0], [0], [1], [0, 0, 1, 1], [], []>} : vector<8x32xf32>, vector<32x128xf32>, vector<8x128xf32> -> vector<8x128xf32>
    %c0_251 = arith.constant 0 : index
    %c0_252 = arith.constant 0 : index
    %596 = vector.load %arg13[%c0_251, %c0_252] : memref<32x128xf32, #tpu.memory_space<vmem>>, vector<32x128xf32>
    %cst_253 = arith.constant dense<0.000000e+00> : vector<8x128xf32>
    %597 = tpu.matmul %542, %596, %cst_253 {dimension_numbers = #tpu.dot_dimension_numbers<[1], [0], [0], [1], [0, 0, 1, 1], [], []>} : vector<8x32xf32>, vector<32x128xf32>, vector<8x128xf32> -> vector<8x128xf32>
    %598 = arith.addf %597, %595 : vector<8x128xf32>
    %c0_254 = arith.constant 0 : index
    %c0_255 = arith.constant 0 : index
    %599 = vector.load %arg15[%c0_254, %c0_255] : memref<1x128xf32, #tpu.memory_space<vmem>>, vector<1x128xf32>
    %600 = vector.broadcast %599 : vector<1x128xf32> to vector<8x128xf32>
    %601 = arith.addf %598, %600 : vector<8x128xf32>
    %cst_256 = arith.constant 5.000000e-01 : f32
    %602 = vector.broadcast %cst_256 : f32 to vector<8x128xf32>
    %603 = arith.mulf %601, %602 : vector<8x128xf32>
    %604 = arith.select %5, %601, %603 : vector<8x128xi1>, vector<8x128xf32>
    %605 = math.tanh %604 : vector<8x128xf32>
    %cst_257 = arith.constant 5.000000e-01 : f32
    %606 = vector.broadcast %cst_257 : f32 to vector<8x128xf32>
    %607 = arith.mulf %605, %606 : vector<8x128xf32>
    %cst_258 = arith.constant 5.000000e-01 : f32
    %608 = vector.broadcast %cst_258 : f32 to vector<8x128xf32>
    %609 = arith.addf %607, %608 : vector<8x128xf32>
    %610 = arith.select %5, %605, %609 : vector<8x128xi1>, vector<8x128xf32>
    %611 = vector.extract_strided_slice %610 {offsets = [0, 0], sizes = [8, 32], strides = [1, 1]} : vector<8x128xf32> to vector<8x32xf32>
    %612 = vector.extract_strided_slice %610 {offsets = [0, 32], sizes = [8, 32], strides = [1, 1]} : vector<8x128xf32> to vector<8x32xf32>
    %613 = vector.extract_strided_slice %610 {offsets = [0, 64], sizes = [8, 32], strides = [1, 1]} : vector<8x128xf32> to vector<8x32xf32>
    %614 = vector.extract_strided_slice %610 {offsets = [0, 96], sizes = [8, 32], strides = [1, 1]} : vector<8x128xf32> to vector<8x32xf32>
    %615 = arith.mulf %612, %566 : vector<8x32xf32>
    %616 = arith.mulf %611, %613 : vector<8x32xf32>
    %617 = arith.addf %615, %616 : vector<8x32xf32>
    %618 = math.tanh %617 : vector<8x32xf32>
    %619 = arith.mulf %614, %618 : vector<8x32xf32>
    %c4_i32_259 = arith.constant 4 : i32
    %c0_260 = arith.constant 0 : index
    %c0_261 = arith.constant 0 : index
    %620 = vector.load %arg11[%c0_260, %c0_261] : memref<32x128xf32, #tpu.memory_space<vmem>>, vector<32x128xf32>
    %cst_262 = arith.constant dense<0.000000e+00> : vector<8x128xf32>
    %621 = tpu.matmul %593, %620, %cst_262 {dimension_numbers = #tpu.dot_dimension_numbers<[1], [0], [0], [1], [0, 0, 1, 1], [], []>} : vector<8x32xf32>, vector<32x128xf32>, vector<8x128xf32> -> vector<8x128xf32>
    %c8_i32_263 = arith.constant 8 : i32
    %622 = arith.muli %c4_i32_259, %c8_i32_263 : i32
    %623 = tpu.assume_multiple %622, 8 : i32
    %624 = arith.index_cast %623 : i32 to index
    %c0_264 = arith.constant 0 : index
    %625 = vector.load %arg22[%624, %c0_264] : memref<40x128xf32, #tpu.memory_space<vmem>>, vector<8x128xf32>
    %626 = arith.addf %625, %621 : vector<8x128xf32>
    %cst_265 = arith.constant 5.000000e-01 : f32
    %627 = vector.broadcast %cst_265 : f32 to vector<8x128xf32>
    %628 = arith.mulf %626, %627 : vector<8x128xf32>
    %629 = arith.select %5, %626, %628 : vector<8x128xi1>, vector<8x128xf32>
    %630 = math.tanh %629 : vector<8x128xf32>
    %cst_266 = arith.constant 5.000000e-01 : f32
    %631 = vector.broadcast %cst_266 : f32 to vector<8x128xf32>
    %632 = arith.mulf %630, %631 : vector<8x128xf32>
    %cst_267 = arith.constant 5.000000e-01 : f32
    %633 = vector.broadcast %cst_267 : f32 to vector<8x128xf32>
    %634 = arith.addf %632, %633 : vector<8x128xf32>
    %635 = arith.select %5, %630, %634 : vector<8x128xi1>, vector<8x128xf32>
    %636 = vector.extract_strided_slice %635 {offsets = [0, 0], sizes = [8, 32], strides = [1, 1]} : vector<8x128xf32> to vector<8x32xf32>
    %637 = vector.extract_strided_slice %635 {offsets = [0, 32], sizes = [8, 32], strides = [1, 1]} : vector<8x128xf32> to vector<8x32xf32>
    %638 = vector.extract_strided_slice %635 {offsets = [0, 64], sizes = [8, 32], strides = [1, 1]} : vector<8x128xf32> to vector<8x32xf32>
    %639 = vector.extract_strided_slice %635 {offsets = [0, 96], sizes = [8, 32], strides = [1, 1]} : vector<8x128xf32> to vector<8x32xf32>
    %640 = arith.mulf %637, %591 : vector<8x32xf32>
    %641 = arith.mulf %636, %638 : vector<8x32xf32>
    %642 = arith.addf %640, %641 : vector<8x32xf32>
    %643 = math.tanh %642 : vector<8x32xf32>
    %644 = arith.mulf %639, %643 : vector<8x32xf32>
    %c0_268 = arith.constant 0 : index
    %c0_269 = arith.constant 0 : index
    %645 = vector.load %arg14[%c0_268, %c0_269] : memref<32x128xf32, #tpu.memory_space<vmem>>, vector<32x128xf32>
    %cst_270 = arith.constant dense<0.000000e+00> : vector<8x128xf32>
    %646 = tpu.matmul %619, %645, %cst_270 {dimension_numbers = #tpu.dot_dimension_numbers<[1], [0], [0], [1], [0, 0, 1, 1], [], []>} : vector<8x32xf32>, vector<32x128xf32>, vector<8x128xf32> -> vector<8x128xf32>
    %c0_271 = arith.constant 0 : index
    %c0_272 = arith.constant 0 : index
    %647 = vector.load %arg13[%c0_271, %c0_272] : memref<32x128xf32, #tpu.memory_space<vmem>>, vector<32x128xf32>
    %cst_273 = arith.constant dense<0.000000e+00> : vector<8x128xf32>
    %648 = tpu.matmul %593, %647, %cst_273 {dimension_numbers = #tpu.dot_dimension_numbers<[1], [0], [0], [1], [0, 0, 1, 1], [], []>} : vector<8x32xf32>, vector<32x128xf32>, vector<8x128xf32> -> vector<8x128xf32>
    %649 = arith.addf %648, %646 : vector<8x128xf32>
    %c0_274 = arith.constant 0 : index
    %c0_275 = arith.constant 0 : index
    %650 = vector.load %arg15[%c0_274, %c0_275] : memref<1x128xf32, #tpu.memory_space<vmem>>, vector<1x128xf32>
    %651 = vector.broadcast %650 : vector<1x128xf32> to vector<8x128xf32>
    %652 = arith.addf %649, %651 : vector<8x128xf32>
    %cst_276 = arith.constant 5.000000e-01 : f32
    %653 = vector.broadcast %cst_276 : f32 to vector<8x128xf32>
    %654 = arith.mulf %652, %653 : vector<8x128xf32>
    %655 = arith.select %5, %652, %654 : vector<8x128xi1>, vector<8x128xf32>
    %656 = math.tanh %655 : vector<8x128xf32>
    %cst_277 = arith.constant 5.000000e-01 : f32
    %657 = vector.broadcast %cst_277 : f32 to vector<8x128xf32>
    %658 = arith.mulf %656, %657 : vector<8x128xf32>
    %cst_278 = arith.constant 5.000000e-01 : f32
    %659 = vector.broadcast %cst_278 : f32 to vector<8x128xf32>
    %660 = arith.addf %658, %659 : vector<8x128xf32>
    %661 = arith.select %5, %656, %660 : vector<8x128xi1>, vector<8x128xf32>
    %662 = vector.extract_strided_slice %661 {offsets = [0, 0], sizes = [8, 32], strides = [1, 1]} : vector<8x128xf32> to vector<8x32xf32>
    %663 = vector.extract_strided_slice %661 {offsets = [0, 32], sizes = [8, 32], strides = [1, 1]} : vector<8x128xf32> to vector<8x32xf32>
    %664 = vector.extract_strided_slice %661 {offsets = [0, 64], sizes = [8, 32], strides = [1, 1]} : vector<8x128xf32> to vector<8x32xf32>
    %665 = vector.extract_strided_slice %661 {offsets = [0, 96], sizes = [8, 32], strides = [1, 1]} : vector<8x128xf32> to vector<8x32xf32>
    %666 = arith.mulf %663, %617 : vector<8x32xf32>
    %667 = arith.mulf %662, %664 : vector<8x32xf32>
    %668 = arith.addf %666, %667 : vector<8x32xf32>
    %669 = math.tanh %668 : vector<8x32xf32>
    %670 = arith.mulf %665, %669 : vector<8x32xf32>
    %c4_i32_279 = arith.constant 4 : i32
    %c0_280 = arith.constant 0 : index
    %c0_281 = arith.constant 0 : index
    %671 = vector.load %arg14[%c0_280, %c0_281] : memref<32x128xf32, #tpu.memory_space<vmem>>, vector<32x128xf32>
    %cst_282 = arith.constant dense<0.000000e+00> : vector<8x128xf32>
    %672 = tpu.matmul %670, %671, %cst_282 {dimension_numbers = #tpu.dot_dimension_numbers<[1], [0], [0], [1], [0, 0, 1, 1], [], []>} : vector<8x32xf32>, vector<32x128xf32>, vector<8x128xf32> -> vector<8x128xf32>
    %c0_283 = arith.constant 0 : index
    %c0_284 = arith.constant 0 : index
    %673 = vector.load %arg13[%c0_283, %c0_284] : memref<32x128xf32, #tpu.memory_space<vmem>>, vector<32x128xf32>
    %cst_285 = arith.constant dense<0.000000e+00> : vector<8x128xf32>
    %674 = tpu.matmul %644, %673, %cst_285 {dimension_numbers = #tpu.dot_dimension_numbers<[1], [0], [0], [1], [0, 0, 1, 1], [], []>} : vector<8x32xf32>, vector<32x128xf32>, vector<8x128xf32> -> vector<8x128xf32>
    %675 = arith.addf %674, %672 : vector<8x128xf32>
    %c0_286 = arith.constant 0 : index
    %c0_287 = arith.constant 0 : index
    %676 = vector.load %arg15[%c0_286, %c0_287] : memref<1x128xf32, #tpu.memory_space<vmem>>, vector<1x128xf32>
    %677 = vector.broadcast %676 : vector<1x128xf32> to vector<8x128xf32>
    %678 = arith.addf %675, %677 : vector<8x128xf32>
    %cst_288 = arith.constant 5.000000e-01 : f32
    %679 = vector.broadcast %cst_288 : f32 to vector<8x128xf32>
    %680 = arith.mulf %678, %679 : vector<8x128xf32>
    %681 = arith.select %5, %678, %680 : vector<8x128xi1>, vector<8x128xf32>
    %682 = math.tanh %681 : vector<8x128xf32>
    %cst_289 = arith.constant 5.000000e-01 : f32
    %683 = vector.broadcast %cst_289 : f32 to vector<8x128xf32>
    %684 = arith.mulf %682, %683 : vector<8x128xf32>
    %cst_290 = arith.constant 5.000000e-01 : f32
    %685 = vector.broadcast %cst_290 : f32 to vector<8x128xf32>
    %686 = arith.addf %684, %685 : vector<8x128xf32>
    %687 = arith.select %5, %682, %686 : vector<8x128xi1>, vector<8x128xf32>
    %688 = vector.extract_strided_slice %687 {offsets = [0, 0], sizes = [8, 32], strides = [1, 1]} : vector<8x128xf32> to vector<8x32xf32>
    %689 = vector.extract_strided_slice %687 {offsets = [0, 32], sizes = [8, 32], strides = [1, 1]} : vector<8x128xf32> to vector<8x32xf32>
    %690 = vector.extract_strided_slice %687 {offsets = [0, 64], sizes = [8, 32], strides = [1, 1]} : vector<8x128xf32> to vector<8x32xf32>
    %691 = vector.extract_strided_slice %687 {offsets = [0, 96], sizes = [8, 32], strides = [1, 1]} : vector<8x128xf32> to vector<8x32xf32>
    %692 = arith.mulf %689, %668 : vector<8x32xf32>
    %693 = arith.mulf %688, %690 : vector<8x32xf32>
    %694 = arith.addf %692, %693 : vector<8x32xf32>
    %695 = math.tanh %694 : vector<8x32xf32>
    %696 = arith.mulf %691, %695 : vector<8x32xf32>
    %c0_291 = arith.constant 0 : index
    %c0_292 = arith.constant 0 : index
    %697 = vector.load %arg16[%c0_291, %c0_292] : memref<32x3xf32, #tpu.memory_space<vmem>>, vector<32x3xf32>
    %cst_293 = arith.constant dense<0.000000e+00> : vector<8x3xf32>
    %698 = tpu.matmul %696, %697, %cst_293 {dimension_numbers = #tpu.dot_dimension_numbers<[1], [0], [0], [1], [0, 0, 1, 1], [], []>} : vector<8x32xf32>, vector<32x3xf32>, vector<8x3xf32> -> vector<8x3xf32>
    %c0_294 = arith.constant 0 : index
    %c0_295 = arith.constant 0 : index
    %699 = vector.load %arg17[%c0_294, %c0_295] : memref<1x3xf32, #tpu.memory_space<vmem>>, vector<1x3xf32>
    %700 = vector.broadcast %699 : vector<1x3xf32> to vector<8x3xf32>
    %701 = arith.addf %698, %700 : vector<8x3xf32>
    %c0_296 = arith.constant 0 : index
    %c0_297 = arith.constant 0 : index
    %702 = vector.load %arg18[%c0_296, %c0_297] : memref<8x3xf32, #tpu.memory_space<vmem>>, vector<8x3xf32>
    tpu.vector_store %arg18[%c0_296, %c0_297], %701 {strides = array<i32>} : memref<8x3xf32, #tpu.memory_space<vmem>>, vector<8x3xf32>,
    return
  }
}

</mosaic_0001>

<llo_original>
// kernel: seq2seq_forward.1
$region0: #{seq2seq_forward.1}
  #allocation0 [shape = 'u32[]', space=smem, size = 0x4, offset = 0x4, fixed_abs, tag = 'smem constant byte address 0x4 - core index']
  #allocation1 [shape = 'u32[72,128]{1,0:T(1,128)}', space=vmem, size = 0x9000, scoped, tag = 'internal scratch']
  #allocation2 [shape = 'f32[64,128]{1,0:T(8,128)}', space=vmem, size = 0x8000, scoped, tag = 'scratch operand']
  #allocation3 [shape = 'f32[40,128]{1,0:T(8,128)}', space=vmem, size = 0x5000, scoped, tag = 'scratch operand']
  %s0 = inlined_call_operand.vmem [shape: f32[64,6], index: 0, kind: input, shape index: {}]
  %s1 = inlined_call_operand.vmem [shape: f32[40,4], index: 1, kind: input, shape index: {}]
  %s2 = inlined_call_operand.vmem [shape: f32[2,8,32], index: 2, kind: input, shape index: {}, may-alias: {2,3}]
  %s3 = inlined_call_operand.vmem [shape: f32[2,8,32], index: 3, kind: input, shape index: {}, may-alias: {2,3}]
  %s4 = inlined_call_operand.vmem [shape: f32[6,128], index: 4, kind: input, shape index: {}]
  %s5 = inlined_call_operand.vmem [shape: f32[32,128], index: 5, kind: input, shape index: {}]
  %s6 = inlined_call_operand.vmem [shape: f32[1,128], index: 6, kind: input, shape index: {}]
  %s7 = inlined_call_operand.vmem [shape: f32[32,128], index: 7, kind: input, shape index: {}]
  %s8 = inlined_call_operand.vmem [shape: f32[32,128], index: 8, kind: input, shape index: {}]
  %s9 = inlined_call_operand.vmem [shape: f32[1,128], index: 9, kind: input, shape index: {}]
  %s10 = inlined_call_operand.vmem [shape: f32[4,128], index: 10, kind: input, shape index: {}]
  %s11 = inlined_call_operand.vmem [shape: f32[32,128], index: 11, kind: input, shape index: {}]
  %s12 = inlined_call_operand.vmem [shape: f32[1,128], index: 12, kind: input, shape index: {}]
  %s13 = inlined_call_operand.vmem [shape: f32[32,128], index: 13, kind: input, shape index: {}]
  %s14 = inlined_call_operand.vmem [shape: f32[32,128], index: 14, kind: input, shape index: {}]
  %s15 = inlined_call_operand.vmem [shape: f32[1,128], index: 15, kind: input, shape index: {}]
  %s16 = inlined_call_operand.vmem [shape: f32[32,3], index: 16, kind: input, shape index: {}]
  %s17 = inlined_call_operand.vmem [shape: f32[1,3], index: 17, kind: input, shape index: {}]
  %s18 = inlined_call_operand.vmem [shape: f32[8,3], index: 18, kind: output, shape index: {0}]
  %s19 = inlined_call_operand.vmem [shape: f32[2,8,32], index: 19, kind: output, shape index: {1}]
  %s20 = inlined_call_operand.vmem [shape: f32[2,8,32], index: 20, kind: output, shape index: {2}]
  %21 = xla_tuple %s18, %s19, %s20
  %s22 = sld [smem:[#allocation0]]
  $region98: #{seq2seq_forward.1} parent=0
    _
  %s24 = ssub.s32 1, %s22
  %s25 = scalar_select 0, %s24, %s22
  // Predicated region
  $region2: #{seq2seq_forward.1} parent=0 // pred_check
    _
  $region3: #{seq2seq_forward.1} parent=0 // pred_check_branch
    %27 = sbr.rel (0) target = $region5
  $region4: #{seq2seq_forward.1} parent=0 // pred_region
    _
  $region5: #{seq2seq_forward.1} parent=0 // pred_fallthru
    _
  // Predicated region
  $region6: #{seq2seq_forward.1} parent=0 // pred_check
    _
  $region7: #{seq2seq_forward.1} parent=0 // pred_check_branch
    %29 = sbr.rel (0) target = $region9
  $region8: #{seq2seq_forward.1} parent=0 // pred_region
    _
  $region9: #{seq2seq_forward.1} parent=0 // pred_fallthru
    _
  // Predicated region
  $region10: #{seq2seq_forward.1} parent=0 // pred_check
    _
  $region11: #{seq2seq_forward.1} parent=0 // pred_check_branch
    %31 = sbr.rel (0) target = $region13
  $region12: #{seq2seq_forward.1} parent=0 // pred_region
    _
  $region13: #{seq2seq_forward.1} parent=0 // pred_fallthru
    _
  // Predicated region
  $region14: #{seq2seq_forward.1} parent=0 // pred_check
    _
  $region15: #{seq2seq_forward.1} parent=0 // pred_check_branch
    %33 = sbr.rel (0) target = $region17
  $region16: #{seq2seq_forward.1} parent=0 // pred_region
    _
  $region17: #{seq2seq_forward.1} parent=0 // pred_fallthru
    _
  // Predicated region
  $region18: #{seq2seq_forward.1} parent=0 // pred_check
    _
  $region19: #{seq2seq_forward.1} parent=0 // pred_check_branch
    %35 = sbr.rel (0) target = $region21
  $region20: #{seq2seq_forward.1} parent=0 // pred_region
    _
  $region21: #{seq2seq_forward.1} parent=0 // pred_fallthru
    _
  // Predicated region
  $region22: #{seq2seq_forward.1} parent=0 // pred_check
    _
  $region23: #{seq2seq_forward.1} parent=0 // pred_check_branch
    %37 = sbr.rel (0) target = $region25
  $region24: #{seq2seq_forward.1} parent=0 // pred_region
    _
  $region25: #{seq2seq_forward.1} parent=0 // pred_fallthru
    _
  // Predicated region
  $region26: #{seq2seq_forward.1} parent=0 // pred_check
    _
  $region27: #{seq2seq_forward.1} parent=0 // pred_check_branch
    %39 = sbr.rel (0) target = $region29
  $region28: #{seq2seq_forward.1} parent=0 // pred_region
    _
  $region29: #{seq2seq_forward.1} parent=0 // pred_fallthru
    _
  // Predicated region
  $region30: #{seq2seq_forward.1} parent=0 // pred_check
    _
  $region31: #{seq2seq_forward.1} parent=0 // pred_check_branch
    %41 = sbr.rel (0) target = $region33
  $region32: #{seq2seq_forward.1} parent=0 // pred_region
    _
  $region33: #{seq2seq_forward.1} parent=0 // pred_fallthru
    _
  // Predicated region
  $region34: #{seq2seq_forward.1} parent=0 // pred_check
    _
  $region35: #{seq2seq_forward.1} parent=0 // pred_check_branch
    %43 = sbr.rel (0) target = $region37
  $region36: #{seq2seq_forward.1} parent=0 // pred_region
    _
  $region37: #{seq2seq_forward.1} parent=0 // pred_fallthru
    _
  // Predicated region
  $region38: #{seq2seq_forward.1} parent=0 // pred_check
    _
  $region39: #{seq2seq_forward.1} parent=0 // pred_check_branch
    %45 = sbr.rel (0) target = $region41
  $region40: #{seq2seq_forward.1} parent=0 // pred_region
    _
  $region41: #{seq2seq_forward.1} parent=0 // pred_fallthru
    _
  // Predicated region
  $region42: #{seq2seq_forward.1} parent=0 // pred_check
    _
  $region43: #{seq2seq_forward.1} parent=0 // pred_check_branch
    %47 = sbr.rel (0) target = $region45
  $region44: #{seq2seq_forward.1} parent=0 // pred_region
    _
  $region45: #{seq2seq_forward.1} parent=0 // pred_fallthru
    _
  // Predicated region
  $region46: #{seq2seq_forward.1} parent=0 // pred_check
    _
  $region47: #{seq2seq_forward.1} parent=0 // pred_check_branch
    %49 = sbr.rel (0) target = $region49
  $region48: #{seq2seq_forward.1} parent=0 // pred_region
    _
  $region49: #{seq2seq_forward.1} parent=0 // pred_fallthru
    _
  // Predicated region
  $region50: #{seq2seq_forward.1} parent=0 // pred_check
    _
  $region51: #{seq2seq_forward.1} parent=0 // pred_check_branch
    %51 = sbr.rel (0) target = $region53
  $region52: #{seq2seq_forward.1} parent=0 // pred_region
    _
  $region53: #{seq2seq_forward.1} parent=0 // pred_fallthru
    _
  // Predicated region
  $region54: #{seq2seq_forward.1} parent=0 // pred_check
    _
  $region55: #{seq2seq_forward.1} parent=0 // pred_check_branch
    %53 = sbr.rel (0) target = $region57
  $region56: #{seq2seq_forward.1} parent=0 // pred_region
    _
  $region57: #{seq2seq_forward.1} parent=0 // pred_fallthru
    _
  // Predicated region
  $region58: #{seq2seq_forward.1} parent=0 // pred_check
    _
  $region59: #{seq2seq_forward.1} parent=0 // pred_check_branch
    %55 = sbr.rel (0) target = $region61
  $region60: #{seq2seq_forward.1} parent=0 // pred_region
    _
  $region61: #{seq2seq_forward.1} parent=0 // pred_fallthru
    _
  // Predicated region
  $region62: #{seq2seq_forward.1} parent=0 // pred_check
    _
  $region63: #{seq2seq_forward.1} parent=0 // pred_check_branch
    %57 = sbr.rel (0) target = $region65
  $region64: #{seq2seq_forward.1} parent=0 // pred_region
    _
  $region65: #{seq2seq_forward.1} parent=0 // pred_fallthru
    _
  // Predicated region
  $region66: #{seq2seq_forward.1} parent=0 // pred_check
    _
  $region67: #{seq2seq_forward.1} parent=0 // pred_check_branch
    %59 = sbr.rel (0) target = $region69
  $region68: #{seq2seq_forward.1} parent=0 // pred_region
    _
  $region69: #{seq2seq_forward.1} parent=0 // pred_fallthru
    _
  // Predicated region
  $region70: #{seq2seq_forward.1} parent=0 // pred_check
    _
  $region71: #{seq2seq_forward.1} parent=0 // pred_check_branch
    %61 = sbr.rel (0) target = $region73
  $region72: #{seq2seq_forward.1} parent=0 // pred_region
    _
  $region73: #{seq2seq_forward.1} parent=0 // pred_fallthru
    _
  %v62 = vlaneseq
  %v63 = vand.u32 %v62, 127
  %vm64 = vcmp.ge.s32.totalorder %v63, 64
  %vm65 = vcmp.lt.s32.totalorder %v63, 96
  %vm66 = vmand %vm64, %vm65
  %v67 = vld [vmem:[%s0] sm:$0xff]
  %v68 = vld [vmem:[%s0 + $0x8] sm:$0xff]
  %v69 = vld [vmem:[%s0 + $0x10] sm:$0xff]
  %v70 = vld [vmem:[%s0 + $0x18] sm:$0xff]
  %v71 = vld [vmem:[%s0 + $0x20] sm:$0xff]
  %v72 = vld [vmem:[%s0 + $0x28] sm:$0xff]
  %v73 = vld [vmem:[%s0 + $0x30] sm:$0xff]
  %v74 = vld [vmem:[%s0 + $0x38] sm:$0xff]
  %v75 = vld [vmem:[%s4] sm:$0x3f]
  %v76 = vld [vmem:[%s6] sm:$0x1]
  %v78 = vperm.slane %v76, 0
  %vm80 = vcmask 48128
  %v82 = vsel %vm80, %v67, 0
  %v85 = vsel %vm80, %v68, 0
  %v88 = vsel %vm80, %v69, 0
  %v91 = vsel %vm80, %v70, 0
  %v94 = vsel %vm80, %v71, 0
  %v97 = vsel %vm80, %v72, 0
  %v100 = vsel %vm80, %v73, 0
  %v103 = vsel %vm80, %v74, 0
  %vm105 = vcmask 1045504
  %v107 = vsel %vm105, %v75, 0
  %109 = vmatpush.msra.mxu0 0.0
  %110 = vmatpush.msra.mxu0 0.0
  %111 = vmatpush.msra.mxu0 0.0
  %112 = vmatpush.msra.mxu0 0.0
  %113 = vmatpush.msra.mxu0 0.0
  %114 = vmatpush.msra.mxu0 0.0
  %115 = vmatpush.msra.mxu0 0.0
  %116 = vmatpush.msra.mxu0 0.0
  %117 = vmatpush.msra.mxu0 0.0
  %118 = vmatpush.msra.mxu0 0.0
  %119 = vmatpush.msra.mxu0 0.0
  %120 = vmatpush.msra.mxu0 0.0
  %121 = vmatpush.msra.mxu0 0.0
  %122 = vmatpush.msra.mxu0 0.0
  %123 = vmatpush.msra.mxu0 0.0
  %124 = vmatpush.msra.mxu0 %v107
  %125 = vmatmul.f32.gmra.mxu0 %v82
  %v126 = vpop.f32.mrf.mxu0
  %v127 = vadd.f32 %v78, %v126
  %128 = vmatmul.f32.gmra.mxu0 %v85
  %v129 = vpop.f32.mrf.mxu0
  %v130 = vadd.f32 %v78, %v129
  %131 = vmatmul.f32.gmra.mxu0 %v88
  %v132 = vpop.f32.mrf.mxu0
  %v133 = vadd.f32 %v78, %v132
  %134 = vmatmul.f32.gmra.mxu0 %v91
  %v135 = vpop.f32.mrf.mxu0
  %v136 = vadd.f32 %v78, %v135
  %137 = vmatmul.f32.gmra.mxu0 %v94
  %v138 = vpop.f32.mrf.mxu0
  %v139 = vadd.f32 %v78, %v138
  %140 = vmatmul.f32.gmra.mxu0 %v97
  %v141 = vpop.f32.mrf.mxu0
  %v142 = vadd.f32 %v78, %v141
  %143 = vmatmul.f32.gmra.mxu0 %v100
  %v144 = vpop.f32.mrf.mxu0
  %v145 = vadd.f32 %v78, %v144
  %146 = vmatmul.f32.gmra.mxu0 %v103
  %v147 = vpop.f32.mrf.mxu0
  %v148 = vadd.f32 %v78, %v147
  %149 = vdwg.mxu0
  %150 = vst [vmem:[#allocation2] sm:$0xff] %v127
  %151 = vst [vmem:[#allocation2 + $0x8] sm:$0xff] %v130
  %152 = vst [vmem:[#allocation2 + $0x10] sm:$0xff] %v133
  %153 = vst [vmem:[#allocation2 + $0x18] sm:$0xff] %v136
  %154 = vst [vmem:[#allocation2 + $0x20] sm:$0xff] %v139
  %155 = vst [vmem:[#allocation2 + $0x28] sm:$0xff] %v142
  %156 = vst [vmem:[#allocation2 + $0x30] sm:$0xff] %v145
  %157 = vst [vmem:[#allocation2 + $0x38] sm:$0xff] %v148
  %v158 = vld [vmem:[%s1] sm:$0xff]
  %v159 = vld [vmem:[%s1 + $0x8] sm:$0xff]
  %v160 = vld [vmem:[%s1 + $0x10] sm:$0xff]
  %v161 = vld [vmem:[%s1 + $0x18] sm:$0xff]
  %v162 = vld [vmem:[%s1 + $0x20] sm:$0xff]
  %v163 = vld [vmem:[%s10] sm:$0xf]
  %v164 = vld [vmem:[%s12] sm:$0x1]
  %v166 = vperm.slane %v164, 0
  %vm168 = vcmask 31744
  %v170 = vsel %vm168, %v158, 0
  %v173 = vsel %vm168, %v159, 0
  %v176 = vsel %vm168, %v160, 0
  %v179 = vsel %vm168, %v161, 0
  %v182 = vsel %vm168, %v162, 0
  %vm184 = vcmask 1043456
  %v186 = vsel %vm184, %v163, 0
  %188 = vmatpush.msra.mxu0 0.0
  %189 = vmatpush.msra.mxu0 0.0
  %190 = vmatpush.msra.mxu0 0.0
  %191 = vmatpush.msra.mxu0 0.0
  %192 = vmatpush.msra.mxu0 0.0
  %193 = vmatpush.msra.mxu0 0.0
  %194 = vmatpush.msra.mxu0 0.0
  %195 = vmatpush.msra.mxu0 0.0
  %196 = vmatpush.msra.mxu0 0.0
  %197 = vmatpush.msra.mxu0 0.0
  %198 = vmatpush.msra.mxu0 0.0
  %199 = vmatpush.msra.mxu0 0.0
  %200 = vmatpush.msra.mxu0 0.0
  %201 = vmatpush.msra.mxu0 0.0
  %202 = vmatpush.msra.mxu0 0.0
  %203 = vmatpush.msra.mxu0 %v186
  %204 = vmatmul.f32.gmra.mxu0 %v170
  %v205 = vpop.f32.mrf.mxu0
  %v206 = vadd.f32 %v166, %v205
  %207 = vmatmul.f32.gmra.mxu0 %v173
  %v208 = vpop.f32.mrf.mxu0
  %v209 = vadd.f32 %v166, %v208
  %210 = vmatmul.f32.gmra.mxu0 %v176
  %v211 = vpop.f32.mrf.mxu0
  %v212 = vadd.f32 %v166, %v211
  %213 = vmatmul.f32.gmra.mxu0 %v179
  %v214 = vpop.f32.mrf.mxu0
  %v215 = vadd.f32 %v166, %v214
  %216 = vmatmul.f32.gmra.mxu0 %v182
  %v217 = vpop.f32.mrf.mxu0
  %v218 = vadd.f32 %v166, %v217
  %219 = vdwg.mxu0
  %220 = vst [vmem:[#allocation3] sm:$0xff] %v206
  %221 = vst [vmem:[#allocation3 + $0x8] sm:$0xff] %v209
  %222 = vst [vmem:[#allocation3 + $0x10] sm:$0xff] %v212
  %223 = vst [vmem:[#allocation3 + $0x18] sm:$0xff] %v215
  %224 = vst [vmem:[#allocation3 + $0x20] sm:$0xff] %v218
  %v225 = vld [vmem:[%s2] sm:$0xff]
  %s226 = scalar_lea.vmem %s2, 8
  %v227 = vld [vmem:[%s226] sm:$0xff]
  %v228 = vld [vmem:[%s3] sm:$0xff]
  %s229 = scalar_lea.vmem %s3, 8
  %v230 = vld [vmem:[%s229] sm:$0xff]
  %v231 = vld [vmem:[%s5] sm:$0xff]
  %v232 = vld [vmem:[%s5 + $0x8] sm:$0xff]
  %v233 = vld [vmem:[%s5 + $0x10] sm:$0xff]
  %v234 = vld [vmem:[%s5 + $0x18] sm:$0xff]
  %vm235 = vcmask 261120
  %v237 = vsel %vm235, %v225, 0
  %239 = vmatpush.msra.mxu0 0.0
  %240 = vmatpush.msra.mxu0 0.0
  %241 = vmatpush.msra.mxu0 0.0
  %242 = vmatpush.msra.mxu0 0.0
  %243 = vmatpush.msra.mxu0 0.0
  %244 = vmatpush.msra.mxu0 0.0
  %245 = vmatpush.msra.mxu0 0.0
  %246 = vmatpush.msra.mxu0 0.0
  %247 = vmatpush.msra.mxu0 0.0
  %248 = vmatpush.msra.mxu0 0.0
  %249 = vmatpush.msra.mxu0 0.0
  %250 = vmatpush.msra.mxu0 0.0
  %251 = vmatpush.msra.mxu0 %v234
  %252 = vmatpush.msra.mxu0 %v233
  %253 = vmatpush.msra.mxu0 %v232
  %254 = vmatpush.msra.mxu0 %v231
  %255 = vmatmul.f32.gmra.mxu0 %v237
  %v256 = vpop.f32.mrf.mxu0
  %v257 = vadd.f32 0.0, %v256
  %258 = vdwg.mxu0
  %v259 = vld [vmem:[#allocation2] sm:$0xff]
  %v260 = vadd.f32 %v259, %v257
  %v261 = vmul.f32 %v260, 0.5
  %v262 = vsel %vm66, %v260, %v261
  %v263 = vtanh.pop %v262
  %v264 = vmul.f32 %v263, 0.5
  %v265 = vadd.f32 %v264, 0.5
  %v266 = vsel %vm66, %v263, %v265
  %268 = vrot.lane.b32.xlu0 %v228, 32
  %v269 = vpop.permute.xlu0 %268
  %v271 = vmul.f32 %v266, %v269
  %273 = vrot.lane.b32.xlu0 %v266, 64
  %v274 = vpop.permute.xlu0 %273
  %v276 = vmul.f32 %v266, %v274
  %278 = vrot.lane.b32.xlu0 %v276, 32
  %v279 = vpop.permute.xlu0 %278
  %v281 = vadd.f32 %v271, %v279
  %v282 = vtanh.pop %v281
  %284 = vrot.lane.b32.xlu0 %v282, 64
  %v285 = vpop.permute.xlu0 %284
  %v287 = vmul.f32 %v266, %v285
  %289 = vrot.lane.b32.xlu0 %v287, 32
  %v290 = vpop.permute.xlu0 %289
  %v291 = vsel %vm235, %v290, 0
  %293 = vmatpush.msra.mxu0 0.0
  %294 = vmatpush.msra.mxu0 0.0
  %295 = vmatpush.msra.mxu0 0.0
  %296 = vmatpush.msra.mxu0 0.0
  %297 = vmatpush.msra.mxu0 0.0
  %298 = vmatpush.msra.mxu0 0.0
  %299 = vmatpush.msra.mxu0 0.0
  %300 = vmatpush.msra.mxu0 0.0
  %301 = vmatpush.msra.mxu0 0.0
  %302 = vmatpush.msra.mxu0 0.0
  %303 = vmatpush.msra.mxu0 0.0
  %304 = vmatpush.msra.mxu0 0.0
  %305 = vmatpush.msra.mxu0 %v234
  %306 = vmatpush.msra.mxu0 %v233
  %307 = vmatpush.msra.mxu0 %v232
  %308 = vmatpush.msra.mxu0 %v231
  %309 = vmatmul.f32.gmra.mxu0 %v291
  %v310 = vpop.f32.mrf.mxu0
  %v311 = vadd.f32 0.0, %v310
  %312 = vdwg.mxu0
  %s313 = scalar_lea.vmem [#allocation2], 8
  %v314 = vld [vmem:[%s313] sm:$0xff]
  %v315 = vadd.f32 %v314, %v311
  %v316 = vmul.f32 %v315, 0.5
  %v317 = vsel %vm66, %v315, %v316
  %v318 = vtanh.pop %v317
  %v319 = vmul.f32 %v318, 0.5
  %v320 = vadd.f32 %v319, 0.5
  %v321 = vsel %vm66, %v318, %v320
  %v322 = vmul.f32 %v321, %v281
  %324 = vrot.lane.b32.xlu0 %v321, 64
  %v325 = vpop.permute.xlu0 %324
  %v327 = vmul.f32 %v321, %v325
  %329 = vrot.lane.b32.xlu0 %v327, 32
  %v330 = vpop.permute.xlu0 %329
  %v332 = vadd.f32 %v322, %v330
  %v333 = vtanh.pop %v332
  %335 = vrot.lane.b32.xlu0 %v333, 64
  %v336 = vpop.permute.xlu0 %335
  %v338 = vmul.f32 %v321, %v336
  %v339 = vld [vmem:[%s8] sm:$0xff]
  %v340 = vld [vmem:[%s8 + $0x8] sm:$0xff]
  %v341 = vld [vmem:[%s8 + $0x10] sm:$0xff]
  %v342 = vld [vmem:[%s8 + $0x18] sm:$0xff]
  %v344 = vsel %vm235, %v227, 0
  %346 = vmatpush.msra.mxu0 0.0
  %347 = vmatpush.msra.mxu0 0.0
  %348 = vmatpush.msra.mxu0 0.0
  %349 = vmatpush.msra.mxu0 0.0
  %350 = vmatpush.msra.mxu0 0.0
  %351 = vmatpush.msra.mxu0 0.0
  %352 = vmatpush.msra.mxu0 0.0
  %353 = vmatpush.msra.mxu0 0.0
  %354 = vmatpush.msra.mxu0 0.0
  %355 = vmatpush.msra.mxu0 0.0
  %356 = vmatpush.msra.mxu0 0.0
  %357 = vmatpush.msra.mxu0 0.0
  %358 = vmatpush.msra.mxu0 %v342
  %359 = vmatpush.msra.mxu0 %v341
  %360 = vmatpush.msra.mxu0 %v340
  %361 = vmatpush.msra.mxu0 %v339
  %362 = vmatmul.f32.gmra.mxu0 %v344
  %v363 = vpop.f32.mrf.mxu0
  %v364 = vadd.f32 0.0, %v363
  %365 = vdwg.mxu0
  %v366 = vld [vmem:[%s7] sm:$0xff]
  %v367 = vld [vmem:[%s7 + $0x8] sm:$0xff]
  %v368 = vld [vmem:[%s7 + $0x10] sm:$0xff]
  %v369 = vld [vmem:[%s7 + $0x18] sm:$0xff]
  %370 = vmatpush.msra.mxu0 0.0
  %371 = vmatpush.msra.mxu0 0.0
  %372 = vmatpush.msra.mxu0 0.0
  %373 = vmatpush.msra.mxu0 0.0
  %374 = vmatpush.msra.mxu0 0.0
  %375 = vmatpush.msra.mxu0 0.0
  %376 = vmatpush.msra.mxu0 0.0
  %377 = vmatpush.msra.mxu0 0.0
  %378 = vmatpush.msra.mxu0 0.0
  %379 = vmatpush.msra.mxu0 0.0
  %380 = vmatpush.msra.mxu0 0.0
  %381 = vmatpush.msra.mxu0 0.0
  %382 = vmatpush.msra.mxu0 %v369
  %383 = vmatpush.msra.mxu0 %v368
  %384 = vmatpush.msra.mxu0 %v367
  %385 = vmatpush.msra.mxu0 %v366
  %386 = vmatmul.f32.gmra.mxu0 %v291
  %v387 = vpop.f32.mrf.mxu0
  %v388 = vadd.f32 %v364, %v387
  %389 = vdwg.mxu0
  %v390 = vld [vmem:[%s9] sm:$0x1]
  %v392 = vperm.slane %v390, 0
  %v394 = vadd.f32 %v388, %v392
  %v395 = vmul.f32 %v394, 0.5
  %v396 = vsel %vm66, %v394, %v395
  %v397 = vtanh.pop %v396
  %v398 = vmul.f32 %v397, 0.5
  %v399 = vadd.f32 %v398, 0.5
  %v400 = vsel %vm66, %v397, %v399
  %402 = vrot.lane.b32.xlu0 %v230, 32
  %v403 = vpop.permute.xlu0 %402
  %v405 = vmul.f32 %v400, %v403
  %407 = vrot.lane.b32.xlu0 %v400, 64
  %v408 = vpop.permute.xlu0 %407
  %v410 = vmul.f32 %v400, %v408
  %412 = vrot.lane.b32.xlu0 %v410, 32
  %v413 = vpop.permute.xlu0 %412
  %v415 = vadd.f32 %v405, %v413
  %v416 = vtanh.pop %v415
  %418 = vrot.lane.b32.xlu0 %v416, 64
  %v419 = vpop.permute.xlu0 %418
  %v421 = vmul.f32 %v400, %v419
  %423 = vrot.lane.b32.xlu0 %v338, 32
  %v424 = vpop.permute.xlu0 %423
  %v425 = vsel %vm235, %v424, 0
  %427 = vmatpush.msra.mxu0 0.0
  %428 = vmatpush.msra.mxu0 0.0
  %429 = vmatpush.msra.mxu0 0.0
  %430 = vmatpush.msra.mxu0 0.0
  %431 = vmatpush.msra.mxu0 0.0
  %432 = vmatpush.msra.mxu0 0.0
  %433 = vmatpush.msra.mxu0 0.0
  %434 = vmatpush.msra.mxu0 0.0
  %435 = vmatpush.msra.mxu0 0.0
  %436 = vmatpush.msra.mxu0 0.0
  %437 = vmatpush.msra.mxu0 0.0
  %438 = vmatpush.msra.mxu0 0.0
  %439 = vmatpush.msra.mxu0 %v234
  %440 = vmatpush.msra.mxu0 %v233
  %441 = vmatpush.msra.mxu0 %v232
  %442 = vmatpush.msra.mxu0 %v231
  %443 = vmatmul.f32.gmra.mxu0 %v425
  %v444 = vpop.f32.mrf.mxu0
  %v445 = vadd.f32 0.0, %v444
  %446 = vdwg.mxu0
  %s447 = scalar_lea.vmem [#allocation2], 16
  %v448 = vld [vmem:[%s447] sm:$0xff]
  %v449 = vadd.f32 %v448, %v445
  %v450 = vmul.f32 %v449, 0.5
  %v451 = vsel %vm66, %v449, %v450
  %v452 = vtanh.pop %v451
  %v453 = vmul.f32 %v452, 0.5
  %v454 = vadd.f32 %v453, 0.5
  %v455 = vsel %vm66, %v452, %v454
  %v456 = vmul.f32 %v455, %v332
  %458 = vrot.lane.b32.xlu0 %v455, 64
  %v459 = vpop.permute.xlu0 %458
  %v461 = vmul.f32 %v455, %v459
  %463 = vrot.lane.b32.xlu0 %v461, 32
  %v464 = vpop.permute.xlu0 %463
  %v466 = vadd.f32 %v456, %v464
  %v467 = vtanh.pop %v466
  %469 = vrot.lane.b32.xlu0 %v467, 64
  %v470 = vpop.permute.xlu0 %469
  %v472 = vmul.f32 %v455, %v470
  %474 = vrot.lane.b32.xlu0 %v421, 32
  %v475 = vpop.permute.xlu0 %474
  %v476 = vsel %vm235, %v475, 0
  %478 = vmatpush.msra.mxu0 0.0
  %479 = vmatpush.msra.mxu0 0.0
  %480 = vmatpush.msra.mxu0 0.0
  %481 = vmatpush.msra.mxu0 0.0
  %482 = vmatpush.msra.mxu0 0.0
  %483 = vmatpush.msra.mxu0 0.0
  %484 = vmatpush.msra.mxu0 0.0
  %485 = vmatpush.msra.mxu0 0.0
  %486 = vmatpush.msra.mxu0 0.0
  %487 = vmatpush.msra.mxu0 0.0
  %488 = vmatpush.msra.mxu0 0.0
  %489 = vmatpush.msra.mxu0 0.0
  %490 = vmatpush.msra.mxu0 %v342
  %491 = vmatpush.msra.mxu0 %v341
  %492 = vmatpush.msra.mxu0 %v340
  %493 = vmatpush.msra.mxu0 %v339
  %494 = vmatmul.f32.gmra.mxu0 %v476
  %v495 = vpop.f32.mrf.mxu0
  %v496 = vadd.f32 0.0, %v495
  %497 = vdwg.mxu0
  %498 = vmatpush.msra.mxu0 0.0
  %499 = vmatpush.msra.mxu0 0.0
  %500 = vmatpush.msra.mxu0 0.0
  %501 = vmatpush.msra.mxu0 0.0
  %502 = vmatpush.msra.mxu0 0.0
  %503 = vmatpush.msra.mxu0 0.0
  %504 = vmatpush.msra.mxu0 0.0
  %505 = vmatpush.msra.mxu0 0.0
  %506 = vmatpush.msra.mxu0 0.0
  %507 = vmatpush.msra.mxu0 0.0
  %508 = vmatpush.msra.mxu0 0.0
  %509 = vmatpush.msra.mxu0 0.0
  %510 = vmatpush.msra.mxu0 %v369
  %511 = vmatpush.msra.mxu0 %v368
  %512 = vmatpush.msra.mxu0 %v367
  %513 = vmatpush.msra.mxu0 %v366
  %514 = vmatmul.f32.gmra.mxu0 %v425
  %v515 = vpop.f32.mrf.mxu0
  %v516 = vadd.f32 %v496, %v515
  %517 = vdwg.mxu0
  %v518 = vadd.f32 %v516, %v392
  %v519 = vmul.f32 %v518, 0.5
  %v520 = vsel %vm66, %v518, %v519
  %v521 = vtanh.pop %v520
  %v522 = vmul.f32 %v521, 0.5
  %v523 = vadd.f32 %v522, 0.5
  %v524 = vsel %vm66, %v521, %v523
  %v525 = vmul.f32 %v524, %v415
  %527 = vrot.lane.b32.xlu0 %v524, 64
  %v528 = vpop.permute.xlu0 %527
  %v530 = vmul.f32 %v524, %v528
  %532 = vrot.lane.b32.xlu0 %v530, 32
  %v533 = vpop.permute.xlu0 %532
  %v535 = vadd.f32 %v525, %v533
  %v536 = vtanh.pop %v535
  %538 = vrot.lane.b32.xlu0 %v536, 64
  %v539 = vpop.permute.xlu0 %538
  %v541 = vmul.f32 %v524, %v539
  %543 = vrot.lane.b32.xlu0 %v472, 32
  %v544 = vpop.permute.xlu0 %543
  %v545 = vsel %vm235, %v544, 0
  %547 = vmatpush.msra.mxu0 0.0
  %548 = vmatpush.msra.mxu0 0.0
  %549 = vmatpush.msra.mxu0 0.0
  %550 = vmatpush.msra.mxu0 0.0
  %551 = vmatpush.msra.mxu0 0.0
  %552 = vmatpush.msra.mxu0 0.0
  %553 = vmatpush.msra.mxu0 0.0
  %554 = vmatpush.msra.mxu0 0.0
  %555 = vmatpush.msra.mxu0 0.0
  %556 = vmatpush.msra.mxu0 0.0
  %557 = vmatpush.msra.mxu0 0.0
  %558 = vmatpush.msra.mxu0 0.0
  %559 = vmatpush.msra.mxu0 %v234
  %560 = vmatpush.msra.mxu0 %v233
  %561 = vmatpush.msra.mxu0 %v232
  %562 = vmatpush.msra.mxu0 %v231
  %563 = vmatmul.f32.gmra.mxu0 %v545
  %v564 = vpop.f32.mrf.mxu0
  %v565 = vadd.f32 0.0, %v564
  %566 = vdwg.mxu0
  %s567 = scalar_lea.vmem [#allocation2], 24
  %v568 = vld [vmem:[%s567] sm:$0xff]
  %v569 = vadd.f32 %v568, %v565
  %v570 = vmul.f32 %v569, 0.5
  %v571 = vsel %vm66, %v569, %v570
  %v572 = vtanh.pop %v571
  %v573 = vmul.f32 %v572, 0.5
  %v574 = vadd.f32 %v573, 0.5
  %v575 = vsel %vm66, %v572, %v574
  %v576 = vmul.f32 %v575, %v466
  %578 = vrot.lane.b32.xlu0 %v575, 64
  %v579 = vpop.permute.xlu0 %578
  %v581 = vmul.f32 %v575, %v579
  %583 = vrot.lane.b32.xlu0 %v581, 32
  %v584 = vpop.permute.xlu0 %583
  %v586 = vadd.f32 %v576, %v584
  %v587 = vtanh.pop %v586
  %589 = vrot.lane.b32.xlu0 %v587, 64
  %v590 = vpop.permute.xlu0 %589
  %v592 = vmul.f32 %v575, %v590
  %594 = vrot.lane.b32.xlu0 %v541, 32
  %v595 = vpop.permute.xlu0 %594
  %v596 = vsel %vm235, %v595, 0
  %598 = vmatpush.msra.mxu0 0.0
  %599 = vmatpush.msra.mxu0 0.0
  %600 = vmatpush.msra.mxu0 0.0
  %601 = vmatpush.msra.mxu0 0.0
  %602 = vmatpush.msra.mxu0 0.0
  %603 = vmatpush.msra.mxu0 0.0
  %604 = vmatpush.msra.mxu0 0.0
  %605 = vmatpush.msra.mxu0 0.0
  %606 = vmatpush.msra.mxu0 0.0
  %607 = vmatpush.msra.mxu0 0.0
  %608 = vmatpush.msra.mxu0 0.0
  %609 = vmatpush.msra.mxu0 0.0
  %610 = vmatpush.msra.mxu0 %v342
  %611 = vmatpush.msra.mxu0 %v341
  %612 = vmatpush.msra.mxu0 %v340
  %613 = vmatpush.msra.mxu0 %v339
  %614 = vmatmul.f32.gmra.mxu0 %v596
  %v615 = vpop.f32.mrf.mxu0
  %v616 = vadd.f32 0.0, %v615
  %617 = vdwg.mxu0
  %618 = vmatpush.msra.mxu0 0.0
  %619 = vmatpush.msra.mxu0 0.0
  %620 = vmatpush.msra.mxu0 0.0
  %621 = vmatpush.msra.mxu0 0.0
  %622 = vmatpush.msra.mxu0 0.0
  %623 = vmatpush.msra.mxu0 0.0
  %624 = vmatpush.msra.mxu0 0.0
  %625 = vmatpush.msra.mxu0 0.0
  %626 = vmatpush.msra.mxu0 0.0
  %627 = vmatpush.msra.mxu0 0.0
  %628 = vmatpush.msra.mxu0 0.0
  %629 = vmatpush.msra.mxu0 0.0
  %630 = vmatpush.msra.mxu0 %v369
  %631 = vmatpush.msra.mxu0 %v368
  %632 = vmatpush.msra.mxu0 %v367
  %633 = vmatpush.msra.mxu0 %v366
  %634 = vmatmul.f32.gmra.mxu0 %v545
  %v635 = vpop.f32.mrf.mxu0
  %v636 = vadd.f32 %v616, %v635
  %637 = vdwg.mxu0
  %v638 = vadd.f32 %v636, %v392
  %v639 = vmul.f32 %v638, 0.5
  %v640 = vsel %vm66, %v638, %v639
  %v641 = vtanh.pop %v640
  %v642 = vmul.f32 %v641, 0.5
  %v643 = vadd.f32 %v642, 0.5
  %v644 = vsel %vm66, %v641, %v643
  %v645 = vmul.f32 %v644, %v535
  %647 = vrot.lane.b32.xlu0 %v644, 64
  %v648 = vpop.permute.xlu0 %647
  %v650 = vmul.f32 %v644, %v648
  %652 = vrot.lane.b32.xlu0 %v650, 32
  %v653 = vpop.permute.xlu0 %652
  %v655 = vadd.f32 %v645, %v653
  %v656 = vtanh.pop %v655
  %658 = vrot.lane.b32.xlu0 %v656, 64
  %v659 = vpop.permute.xlu0 %658
  %v661 = vmul.f32 %v644, %v659
  %663 = vrot.lane.b32.xlu0 %v592, 32
  %v664 = vpop.permute.xlu0 %663
  %v665 = vsel %vm235, %v664, 0
  %667 = vmatpush.msra.mxu0 0.0
  %668 = vmatpush.msra.mxu0 0.0
  %669 = vmatpush.msra.mxu0 0.0
  %670 = vmatpush.msra.mxu0 0.0
  %671 = vmatpush.msra.mxu0 0.0
  %672 = vmatpush.msra.mxu0 0.0
  %673 = vmatpush.msra.mxu0 0.0
  %674 = vmatpush.msra.mxu0 0.0
  %675 = vmatpush.msra.mxu0 0.0
  %676 = vmatpush.msra.mxu0 0.0
  %677 = vmatpush.msra.mxu0 0.0
  %678 = vmatpush.msra.mxu0 0.0
  %679 = vmatpush.msra.mxu0 %v234
  %680 = vmatpush.msra.mxu0 %v233
  %681 = vmatpush.msra.mxu0 %v232
  %682 = vmatpush.msra.mxu0 %v231
  %683 = vmatmul.f32.gmra.mxu0 %v665
  %v684 = vpop.f32.mrf.mxu0
  %v685 = vadd.f32 0.0, %v684
  %686 = vdwg.mxu0
  %s687 = scalar_lea.vmem [#allocation2], 32
  %v688 = vld [vmem:[%s687] sm:$0xff]
  %v689 = vadd.f32 %v688, %v685
  %v690 = vmul.f32 %v689, 0.5
  %v691 = vsel %vm66, %v689, %v690
  %v692 = vtanh.pop %v691
  %v693 = vmul.f32 %v692, 0.5
  %v694 = vadd.f32 %v693, 0.5
  %v695 = vsel %vm66, %v692, %v694
  %v696 = vmul.f32 %v695, %v586
  %698 = vrot.lane.b32.xlu0 %v695, 64
  %v699 = vpop.permute.xlu0 %698
  %v701 = vmul.f32 %v695, %v699
  %703 = vrot.lane.b32.xlu0 %v701, 32
  %v704 = vpop.permute.xlu0 %703
  %v706 = vadd.f32 %v696, %v704
  %v707 = vtanh.pop %v706
  %709 = vrot.lane.b32.xlu0 %v707, 64
  %v710 = vpop.permute.xlu0 %709
  %v712 = vmul.f32 %v695, %v710
  %714 = vrot.lane.b32.xlu0 %v661, 32
  %v715 = vpop.permute.xlu0 %714
  %v716 = vsel %vm235, %v715, 0
  %718 = vmatpush.msra.mxu0 0.0
  %719 = vmatpush.msra.mxu0 0.0
  %720 = vmatpush.msra.mxu0 0.0
  %721 = vmatpush.msra.mxu0 0.0
  %722 = vmatpush.msra.mxu0 0.0
  %723 = vmatpush.msra.mxu0 0.0
  %724 = vmatpush.msra.mxu0 0.0
  %725 = vmatpush.msra.mxu0 0.0
  %726 = vmatpush.msra.mxu0 0.0
  %727 = vmatpush.msra.mxu0 0.0
  %728 = vmatpush.msra.mxu0 0.0
  %729 = vmatpush.msra.mxu0 0.0
  %730 = vmatpush.msra.mxu0 %v342
  %731 = vmatpush.msra.mxu0 %v341
  %732 = vmatpush.msra.mxu0 %v340
  %733 = vmatpush.msra.mxu0 %v339
  %734 = vmatmul.f32.gmra.mxu0 %v716
  %v735 = vpop.f32.mrf.mxu0
  %v736 = vadd.f32 0.0, %v735
  %737 = vdwg.mxu0
  %738 = vmatpush.msra.mxu0 0.0
  %739 = vmatpush.msra.mxu0 0.0
  %740 = vmatpush.msra.mxu0 0.0
  %741 = vmatpush.msra.mxu0 0.0
  %742 = vmatpush.msra.mxu0 0.0
  %743 = vmatpush.msra.mxu0 0.0
  %744 = vmatpush.msra.mxu0 0.0
  %745 = vmatpush.msra.mxu0 0.0
  %746 = vmatpush.msra.mxu0 0.0
  %747 = vmatpush.msra.mxu0 0.0
  %748 = vmatpush.msra.mxu0 0.0
  %749 = vmatpush.msra.mxu0 0.0
  %750 = vmatpush.msra.mxu0 %v369
  %751 = vmatpush.msra.mxu0 %v368
  %752 = vmatpush.msra.mxu0 %v367
  %753 = vmatpush.msra.mxu0 %v366
  %754 = vmatmul.f32.gmra.mxu0 %v665
  %v755 = vpop.f32.mrf.mxu0
  %v756 = vadd.f32 %v736, %v755
  %757 = vdwg.mxu0
  %v758 = vadd.f32 %v756, %v392
  %v759 = vmul.f32 %v758, 0.5
  %v760 = vsel %vm66, %v758, %v759
  %v761 = vtanh.pop %v760
  %v762 = vmul.f32 %v761, 0.5
  %v763 = vadd.f32 %v762, 0.5
  %v764 = vsel %vm66, %v761, %v763
  %v765 = vmul.f32 %v764, %v655
  %767 = vrot.lane.b32.xlu0 %v764, 64
  %v768 = vpop.permute.xlu0 %767
  %v770 = vmul.f32 %v764, %v768
  %772 = vrot.lane.b32.xlu0 %v770, 32
  %v773 = vpop.permute.xlu0 %772
  %v775 = vadd.f32 %v765, %v773
  %v776 = vtanh.pop %v775
  %778 = vrot.lane.b32.xlu0 %v776, 64
  %v779 = vpop.permute.xlu0 %778
  %v781 = vmul.f32 %v764, %v779
  %783 = vrot.lane.b32.xlu0 %v712, 32
  %v784 = vpop.permute.xlu0 %783
  %v785 = vsel %vm235, %v784, 0
  %787 = vmatpush.msra.mxu0 0.0
  %788 = vmatpush.msra.mxu0 0.0
  %789 = vmatpush.msra.mxu0 0.0
  %790 = vmatpush.msra.mxu0 0.0
  %791 = vmatpush.msra.mxu0 0.0
  %792 = vmatpush.msra.mxu0 0.0
  %793 = vmatpush.msra.mxu0 0.0
  %794 = vmatpush.msra.mxu0 0.0
  %795 = vmatpush.msra.mxu0 0.0
  %796 = vmatpush.msra.mxu0 0.0
  %797 = vmatpush.msra.mxu0 0.0
  %798 = vmatpush.msra.mxu0 0.0
  %799 = vmatpush.msra.mxu0 %v234
  %800 = vmatpush.msra.mxu0 %v233
  %801 = vmatpush.msra.mxu0 %v232
  %802 = vmatpush.msra.mxu0 %v231
  %803 = vmatmul.f32.gmra.mxu0 %v785
  %v804 = vpop.f32.mrf.mxu0
  %v805 = vadd.f32 0.0, %v804
  %806 = vdwg.mxu0
  %s807 = scalar_lea.vmem [#allocation2], 40
  %v808 = vld [vmem:[%s807] sm:$0xff]
  %v809 = vadd.f32 %v808, %v805
  %v810 = vmul.f32 %v809, 0.5
  %v811 = vsel %vm66, %v809, %v810
  %v812 = vtanh.pop %v811
  %v813 = vmul.f32 %v812, 0.5
  %v814 = vadd.f32 %v813, 0.5
  %v815 = vsel %vm66, %v812, %v814
  %v816 = vmul.f32 %v815, %v706
  %818 = vrot.lane.b32.xlu0 %v815, 64
  %v819 = vpop.permute.xlu0 %818
  %v821 = vmul.f32 %v815, %v819
  %823 = vrot.lane.b32.xlu0 %v821, 32
  %v824 = vpop.permute.xlu0 %823
  %v826 = vadd.f32 %v816, %v824
  %v827 = vtanh.pop %v826
  %829 = vrot.lane.b32.xlu0 %v827, 64
  %v830 = vpop.permute.xlu0 %829
  %v832 = vmul.f32 %v815, %v830
  %834 = vrot.lane.b32.xlu0 %v781, 32
  %v835 = vpop.permute.xlu0 %834
  %v836 = vsel %vm235, %v835, 0
  %838 = vmatpush.msra.mxu0 0.0
  %839 = vmatpush.msra.mxu0 0.0
  %840 = vmatpush.msra.mxu0 0.0
  %841 = vmatpush.msra.mxu0 0.0
  %842 = vmatpush.msra.mxu0 0.0
  %843 = vmatpush.msra.mxu0 0.0
  %844 = vmatpush.msra.mxu0 0.0
  %845 = vmatpush.msra.mxu0 0.0
  %846 = vmatpush.msra.mxu0 0.0
  %847 = vmatpush.msra.mxu0 0.0
  %848 = vmatpush.msra.mxu0 0.0
  %849 = vmatpush.msra.mxu0 0.0
  %850 = vmatpush.msra.mxu0 %v342
  %851 = vmatpush.msra.mxu0 %v341
  %852 = vmatpush.msra.mxu0 %v340
  %853 = vmatpush.msra.mxu0 %v339
  %854 = vmatmul.f32.gmra.mxu0 %v836
  %v855 = vpop.f32.mrf.mxu0
  %v856 = vadd.f32 0.0, %v855
  %857 = vdwg.mxu0
  %858 = vmatpush.msra.mxu0 0.0
  %859 = vmatpush.msra.mxu0 0.0
  %860 = vmatpush.msra.mxu0 0.0
  %861 = vmatpush.msra.mxu0 0.0
  %862 = vmatpush.msra.mxu0 0.0
  %863 = vmatpush.msra.mxu0 0.0
  %864 = vmatpush.msra.mxu0 0.0
  %865 = vmatpush.msra.mxu0 0.0
  %866 = vmatpush.msra.mxu0 0.0
  %867 = vmatpush.msra.mxu0 0.0
  %868 = vmatpush.msra.mxu0 0.0
  %869 = vmatpush.msra.mxu0 0.0
  %870 = vmatpush.msra.mxu0 %v369
  %871 = vmatpush.msra.mxu0 %v368
  %872 = vmatpush.msra.mxu0 %v367
  %873 = vmatpush.msra.mxu0 %v366
  %874 = vmatmul.f32.gmra.mxu0 %v785
  %v875 = vpop.f32.mrf.mxu0
  %v876 = vadd.f32 %v856, %v875
  %877 = vdwg.mxu0
  %v878 = vadd.f32 %v876, %v392
  %v879 = vmul.f32 %v878, 0.5
  %v880 = vsel %vm66, %v878, %v879
  %v881 = vtanh.pop %v880
  %v882 = vmul.f32 %v881, 0.5
  %v883 = vadd.f32 %v882, 0.5
  %v884 = vsel %vm66, %v881, %v883
  %v885 = vmul.f32 %v884, %v775
  %887 = vrot.lane.b32.xlu0 %v884, 64
  %v888 = vpop.permute.xlu0 %887
  %v890 = vmul.f32 %v884, %v888
  %892 = vrot.lane.b32.xlu0 %v890, 32
  %v893 = vpop.permute.xlu0 %892
  %v895 = vadd.f32 %v885, %v893
  %v896 = vtanh.pop %v895
  %898 = vrot.lane.b32.xlu0 %v896, 64
  %v899 = vpop.permute.xlu0 %898
  %v901 = vmul.f32 %v884, %v899
  %903 = vrot.lane.b32.xlu0 %v832, 32
  %v904 = vpop.permute.xlu0 %903
  %v905 = vsel %vm235, %v904, 0
  %907 = vmatpush.msra.mxu0 0.0
  %908 = vmatpush.msra.mxu0 0.0
  %909 = vmatpush.msra.mxu0 0.0
  %910 = vmatpush.msra.mxu0 0.0
  %911 = vmatpush.msra.mxu0 0.0
  %912 = vmatpush.msra.mxu0 0.0
  %913 = vmatpush.msra.mxu0 0.0
  %914 = vmatpush.msra.mxu0 0.0
  %915 = vmatpush.msra.mxu0 0.0
  %916 = vmatpush.msra.mxu0 0.0
  %917 = vmatpush.msra.mxu0 0.0
  %918 = vmatpush.msra.mxu0 0.0
  %919 = vmatpush.msra.mxu0 %v234
  %920 = vmatpush.msra.mxu0 %v233
  %921 = vmatpush.msra.mxu0 %v232
  %922 = vmatpush.msra.mxu0 %v231
  %923 = vmatmul.f32.gmra.mxu0 %v905
  %v924 = vpop.f32.mrf.mxu0
  %v925 = vadd.f32 0.0, %v924
  %926 = vdwg.mxu0
  %s927 = scalar_lea.vmem [#allocation2], 48
  %v928 = vld [vmem:[%s927] sm:$0xff]
  %v929 = vadd.f32 %v928, %v925
  %v930 = vmul.f32 %v929, 0.5
  %v931 = vsel %vm66, %v929, %v930
  %v932 = vtanh.pop %v931
  %v933 = vmul.f32 %v932, 0.5
  %v934 = vadd.f32 %v933, 0.5
  %v935 = vsel %vm66, %v932, %v934
  %v936 = vmul.f32 %v935, %v826
  %938 = vrot.lane.b32.xlu0 %v935, 64
  %v939 = vpop.permute.xlu0 %938
  %v941 = vmul.f32 %v935, %v939
  %943 = vrot.lane.b32.xlu0 %v941, 32
  %v944 = vpop.permute.xlu0 %943
  %v946 = vadd.f32 %v936, %v944
  %v947 = vtanh.pop %v946
  %949 = vrot.lane.b32.xlu0 %v947, 64
  %v950 = vpop.permute.xlu0 %949
  %v952 = vmul.f32 %v935, %v950
  %954 = vrot.lane.b32.xlu0 %v901, 32
  %v955 = vpop.permute.xlu0 %954
  %v956 = vsel %vm235, %v955, 0
  %958 = vmatpush.msra.mxu0 0.0
  %959 = vmatpush.msra.mxu0 0.0
  %960 = vmatpush.msra.mxu0 0.0
  %961 = vmatpush.msra.mxu0 0.0
  %962 = vmatpush.msra.mxu0 0.0
  %963 = vmatpush.msra.mxu0 0.0
  %964 = vmatpush.msra.mxu0 0.0
  %965 = vmatpush.msra.mxu0 0.0
  %966 = vmatpush.msra.mxu0 0.0
  %967 = vmatpush.msra.mxu0 0.0
  %968 = vmatpush.msra.mxu0 0.0
  %969 = vmatpush.msra.mxu0 0.0
  %970 = vmatpush.msra.mxu0 %v342
  %971 = vmatpush.msra.mxu0 %v341
  %972 = vmatpush.msra.mxu0 %v340
  %973 = vmatpush.msra.mxu0 %v339
  %974 = vmatmul.f32.gmra.mxu0 %v956
  %v975 = vpop.f32.mrf.mxu0
  %v976 = vadd.f32 0.0, %v975
  %977 = vdwg.mxu0
  %978 = vmatpush.msra.mxu0 0.0
  %979 = vmatpush.msra.mxu0 0.0
  %980 = vmatpush.msra.mxu0 0.0
  %981 = vmatpush.msra.mxu0 0.0
  %982 = vmatpush.msra.mxu0 0.0
  %983 = vmatpush.msra.mxu0 0.0
  %984 = vmatpush.msra.mxu0 0.0
  %985 = vmatpush.msra.mxu0 0.0
  %986 = vmatpush.msra.mxu0 0.0
  %987 = vmatpush.msra.mxu0 0.0
  %988 = vmatpush.msra.mxu0 0.0
  %989 = vmatpush.msra.mxu0 0.0
  %990 = vmatpush.msra.mxu0 %v369
  %991 = vmatpush.msra.mxu0 %v368
  %992 = vmatpush.msra.mxu0 %v367
  %993 = vmatpush.msra.mxu0 %v366
  %994 = vmatmul.f32.gmra.mxu0 %v905
  %v995 = vpop.f32.mrf.mxu0
  %v996 = vadd.f32 %v976, %v995
  %997 = vdwg.mxu0
  %v998 = vadd.f32 %v996, %v392
  %v999 = vmul.f32 %v998, 0.5
  %v1000 = vsel %vm66, %v998, %v999
  %v1001 = vtanh.pop %v1000
  %v1002 = vmul.f32 %v1001, 0.5
  %v1003 = vadd.f32 %v1002, 0.5
  %v1004 = vsel %vm66, %v1001, %v1003
  %v1005 = vmul.f32 %v1004, %v895
  %1007 = vrot.lane.b32.xlu0 %v1004, 64
  %v1008 = vpop.permute.xlu0 %1007
  %v1010 = vmul.f32 %v1004, %v1008
  %1012 = vrot.lane.b32.xlu0 %v1010, 32
  %v1013 = vpop.permute.xlu0 %1012
  %v1015 = vadd.f32 %v1005, %v1013
  %v1016 = vtanh.pop %v1015
  %1018 = vrot.lane.b32.xlu0 %v1016, 64
  %v1019 = vpop.permute.xlu0 %1018
  %v1021 = vmul.f32 %v1004, %v1019
  %1023 = vrot.lane.b32.xlu0 %v952, 32
  %v1024 = vpop.permute.xlu0 %1023
  %v1025 = vsel %vm235, %v1024, 0
  %1027 = vmatpush.msra.mxu0 0.0
  %1028 = vmatpush.msra.mxu0 0.0
  %1029 = vmatpush.msra.mxu0 0.0
  %1030 = vmatpush.msra.mxu0 0.0
  %1031 = vmatpush.msra.mxu0 0.0
  %1032 = vmatpush.msra.mxu0 0.0
  %1033 = vmatpush.msra.mxu0 0.0
  %1034 = vmatpush.msra.mxu0 0.0
  %1035 = vmatpush.msra.mxu0 0.0
  %1036 = vmatpush.msra.mxu0 0.0
  %1037 = vmatpush.msra.mxu0 0.0
  %1038 = vmatpush.msra.mxu0 0.0
  %1039 = vmatpush.msra.mxu0 %v234
  %1040 = vmatpush.msra.mxu0 %v233
  %1041 = vmatpush.msra.mxu0 %v232
  %1042 = vmatpush.msra.mxu0 %v231
  %1043 = vmatmul.f32.gmra.mxu0 %v1025
  %v1044 = vpop.f32.mrf.mxu0
  %v1045 = vadd.f32 0.0, %v1044
  %1046 = vdwg.mxu0
  %s1047 = scalar_lea.vmem [#allocation2], 56
  %v1048 = vld [vmem:[%s1047] sm:$0xff]
  %v1049 = vadd.f32 %v1048, %v1045
  %v1050 = vmul.f32 %v1049, 0.5
  %v1051 = vsel %vm66, %v1049, %v1050
  %v1052 = vtanh.pop %v1051
  %v1053 = vmul.f32 %v1052, 0.5
  %v1054 = vadd.f32 %v1053, 0.5
  %v1055 = vsel %vm66, %v1052, %v1054
  %v1056 = vmul.f32 %v1055, %v946
  %1058 = vrot.lane.b32.xlu0 %v1055, 64
  %v1059 = vpop.permute.xlu0 %1058
  %v1061 = vmul.f32 %v1055, %v1059
  %1063 = vrot.lane.b32.xlu0 %v1061, 32
  %v1064 = vpop.permute.xlu0 %1063
  %v1066 = vadd.f32 %v1056, %v1064
  %v1067 = vtanh.pop %v1066
  %1069 = vrot.lane.b32.xlu0 %v1067, 64
  %v1070 = vpop.permute.xlu0 %1069
  %v1072 = vmul.f32 %v1055, %v1070
  %1074 = vrot.lane.b32.xlu0 %v1021, 32
  %v1075 = vpop.permute.xlu0 %1074
  %v1076 = vsel %vm235, %v1075, 0
  %1078 = vmatpush.msra.mxu0 0.0
  %1079 = vmatpush.msra.mxu0 0.0
  %1080 = vmatpush.msra.mxu0 0.0
  %1081 = vmatpush.msra.mxu0 0.0
  %1082 = vmatpush.msra.mxu0 0.0
  %1083 = vmatpush.msra.mxu0 0.0
  %1084 = vmatpush.msra.mxu0 0.0
  %1085 = vmatpush.msra.mxu0 0.0
  %1086 = vmatpush.msra.mxu0 0.0
  %1087 = vmatpush.msra.mxu0 0.0
  %1088 = vmatpush.msra.mxu0 0.0
  %1089 = vmatpush.msra.mxu0 0.0
  %1090 = vmatpush.msra.mxu0 %v342
  %1091 = vmatpush.msra.mxu0 %v341
  %1092 = vmatpush.msra.mxu0 %v340
  %1093 = vmatpush.msra.mxu0 %v339
  %1094 = vmatmul.f32.gmra.mxu0 %v1076
  %v1095 = vpop.f32.mrf.mxu0
  %v1096 = vadd.f32 0.0, %v1095
  %1097 = vdwg.mxu0
  %1098 = vmatpush.msra.mxu0 0.0
  %1099 = vmatpush.msra.mxu0 0.0
  %1100 = vmatpush.msra.mxu0 0.0
  %1101 = vmatpush.msra.mxu0 0.0
  %1102 = vmatpush.msra.mxu0 0.0
  %1103 = vmatpush.msra.mxu0 0.0
  %1104 = vmatpush.msra.mxu0 0.0
  %1105 = vmatpush.msra.mxu0 0.0
  %1106 = vmatpush.msra.mxu0 0.0
  %1107 = vmatpush.msra.mxu0 0.0
  %1108 = vmatpush.msra.mxu0 0.0
  %1109 = vmatpush.msra.mxu0 0.0
  %1110 = vmatpush.msra.mxu0 %v369
  %1111 = vmatpush.msra.mxu0 %v368
  %1112 = vmatpush.msra.mxu0 %v367
  %1113 = vmatpush.msra.mxu0 %v366
  %1114 = vmatmul.f32.gmra.mxu0 %v1025
  %v1115 = vpop.f32.mrf.mxu0
  %v1116 = vadd.f32 %v1096, %v1115
  %1117 = vdwg.mxu0
  %v1118 = vadd.f32 %v1116, %v392
  %v1119 = vmul.f32 %v1118, 0.5
  %v1120 = vsel %vm66, %v1118, %v1119
  %v1121 = vtanh.pop %v1120
  %v1122 = vmul.f32 %v1121, 0.5
  %v1123 = vadd.f32 %v1122, 0.5
  %v1124 = vsel %vm66, %v1121, %v1123
  %v1125 = vmul.f32 %v1124, %v1015
  %1127 = vrot.lane.b32.xlu0 %v1124, 64
  %v1128 = vpop.permute.xlu0 %1127
  %v1130 = vmul.f32 %v1124, %v1128
  %1132 = vrot.lane.b32.xlu0 %v1130, 32
  %v1133 = vpop.permute.xlu0 %1132
  %v1135 = vadd.f32 %v1125, %v1133
  %v1136 = vtanh.pop %v1135
  %1138 = vrot.lane.b32.xlu0 %v1136, 64
  %v1139 = vpop.permute.xlu0 %1138
  %v1141 = vmul.f32 %v1124, %v1139
  %1143 = vrot.lane.b32.xlu0 %v1141, 32
  %v1144 = vpop.permute.xlu0 %1143
  %v1145 = vsel %vm235, %v1144, 0
  %1147 = vmatpush.msra.mxu0 0.0
  %1148 = vmatpush.msra.mxu0 0.0
  %1149 = vmatpush.msra.mxu0 0.0
  %1150 = vmatpush.msra.mxu0 0.0
  %1151 = vmatpush.msra.mxu0 0.0
  %1152 = vmatpush.msra.mxu0 0.0
  %1153 = vmatpush.msra.mxu0 0.0
  %1154 = vmatpush.msra.mxu0 0.0
  %1155 = vmatpush.msra.mxu0 0.0
  %1156 = vmatpush.msra.mxu0 0.0
  %1157 = vmatpush.msra.mxu0 0.0
  %1158 = vmatpush.msra.mxu0 0.0
  %1159 = vmatpush.msra.mxu0 %v342
  %1160 = vmatpush.msra.mxu0 %v341
  %1161 = vmatpush.msra.mxu0 %v340
  %1162 = vmatpush.msra.mxu0 %v339
  %1163 = vmatmul.f32.gmra.mxu0 %v1145
  %v1164 = vpop.f32.mrf.mxu0
  %v1165 = vadd.f32 0.0, %v1164
  %1166 = vdwg.mxu0
  %1168 = vrot.lane.b32.xlu0 %v1072, 32
  %v1169 = vpop.permute.xlu0 %1168
  %v1170 = vsel %vm235, %v1169, 0
  %1172 = vmatpush.msra.mxu0 0.0
  %1173 = vmatpush.msra.mxu0 0.0
  %1174 = vmatpush.msra.mxu0 0.0
  %1175 = vmatpush.msra.mxu0 0.0
  %1176 = vmatpush.msra.mxu0 0.0
  %1177 = vmatpush.msra.mxu0 0.0
  %1178 = vmatpush.msra.mxu0 0.0
  %1179 = vmatpush.msra.mxu0 0.0
  %1180 = vmatpush.msra.mxu0 0.0
  %1181 = vmatpush.msra.mxu0 0.0
  %1182 = vmatpush.msra.mxu0 0.0
  %1183 = vmatpush.msra.mxu0 0.0
  %1184 = vmatpush.msra.mxu0 %v369
  %1185 = vmatpush.msra.mxu0 %v368
  %1186 = vmatpush.msra.mxu0 %v367
  %1187 = vmatpush.msra.mxu0 %v366
  %1188 = vmatmul.f32.gmra.mxu0 %v1170
  %v1189 = vpop.f32.mrf.mxu0
  %v1190 = vadd.f32 %v1165, %v1189
  %1191 = vdwg.mxu0
  %v1192 = vadd.f32 %v1190, %v392
  %v1193 = vmul.f32 %v1192, 0.5
  %v1194 = vsel %vm66, %v1192, %v1193
  %v1195 = vtanh.pop %v1194
  %v1196 = vmul.f32 %v1195, 0.5
  %v1197 = vadd.f32 %v1196, 0.5
  %v1198 = vsel %vm66, %v1195, %v1197
  %v1199 = vmul.f32 %v1198, %v1135
  %1201 = vrot.lane.b32.xlu0 %v1198, 64
  %v1202 = vpop.permute.xlu0 %1201
  %v1204 = vmul.f32 %v1198, %v1202
  %1206 = vrot.lane.b32.xlu0 %v1204, 32
  %v1207 = vpop.permute.xlu0 %1206
  %v1209 = vadd.f32 %v1199, %v1207
  %v1210 = vtanh.pop %v1209
  %1212 = vrot.lane.b32.xlu0 %v1210, 64
  %v1213 = vpop.permute.xlu0 %1212
  %v1215 = vmul.f32 %v1198, %v1213
  %1217 = vst.msk [vmem:[%s19] sm:$0xff] %vm235, %v1169
  %1219 = vrot.lane.b32.xlu0 %v1066, 96
  %v1220 = vpop.permute.xlu0 %1219
  %1222 = vst.msk [vmem:[%s20] sm:$0xff] %vm235, %v1220
  %1224 = vrot.lane.b32.xlu0 %v1215, 32
  %v1225 = vpop.permute.xlu0 %1224
  %s1227 = scalar_lea.vmem %s19, 8
  %1228 = vst.msk [vmem:[%s1227] sm:$0xff] %vm235, %v1225
  %1230 = vrot.lane.b32.xlu0 %v1209, 96
  %v1231 = vpop.permute.xlu0 %1230
  %s1233 = scalar_lea.vmem %s20, 8
  %1234 = vst.msk [vmem:[%s1233] sm:$0xff] %vm235, %v1231
  %v1235 = vld [vmem:[%s11] sm:$0xff]
  %v1236 = vld [vmem:[%s11 + $0x8] sm:$0xff]
  %v1237 = vld [vmem:[%s11 + $0x10] sm:$0xff]
  %v1238 = vld [vmem:[%s11 + $0x18] sm:$0xff]
  %1239 = vmatpush.msra.mxu0 0.0
  %1240 = vmatpush.msra.mxu0 0.0
  %1241 = vmatpush.msra.mxu0 0.0
  %1242 = vmatpush.msra.mxu0 0.0
  %1243 = vmatpush.msra.mxu0 0.0
  %1244 = vmatpush.msra.mxu0 0.0
  %1245 = vmatpush.msra.mxu0 0.0
  %1246 = vmatpush.msra.mxu0 0.0
  %1247 = vmatpush.msra.mxu0 0.0
  %1248 = vmatpush.msra.mxu0 0.0
  %1249 = vmatpush.msra.mxu0 0.0
  %1250 = vmatpush.msra.mxu0 0.0
  %1251 = vmatpush.msra.mxu0 %v1238
  %1252 = vmatpush.msra.mxu0 %v1237
  %1253 = vmatpush.msra.mxu0 %v1236
  %1254 = vmatpush.msra.mxu0 %v1235
  %1255 = vmatmul.f32.gmra.mxu0 %v1170
  %v1256 = vpop.f32.mrf.mxu0
  %v1257 = vadd.f32 0.0, %v1256
  %1258 = vdwg.mxu0
  %v1259 = vld [vmem:[#allocation3] sm:$0xff]
  %v1260 = vadd.f32 %v1259, %v1257
  %v1261 = vmul.f32 %v1260, 0.5
  %v1262 = vsel %vm66, %v1260, %v1261
  %v1263 = vtanh.pop %v1262
  %v1264 = vmul.f32 %v1263, 0.5
  %v1265 = vadd.f32 %v1264, 0.5
  %v1266 = vsel %vm66, %v1263, %v1265
  %v1267 = vmul.f32 %v1266, %v1066
  %1269 = vrot.lane.b32.xlu0 %v1266, 64
  %v1270 = vpop.permute.xlu0 %1269
  %v1272 = vmul.f32 %v1266, %v1270
  %1274 = vrot.lane.b32.xlu0 %v1272, 32
  %v1275 = vpop.permute.xlu0 %1274
  %v1277 = vadd.f32 %v1267, %v1275
  %v1278 = vtanh.pop %v1277
  %1280 = vrot.lane.b32.xlu0 %v1278, 64
  %v1281 = vpop.permute.xlu0 %1280
  %v1283 = vmul.f32 %v1266, %v1281
  %1285 = vrot.lane.b32.xlu0 %v1283, 32
  %v1286 = vpop.permute.xlu0 %1285
  %v1287 = vsel %vm235, %v1286, 0
  %1289 = vmatpush.msra.mxu0 0.0
  %1290 = vmatpush.msra.mxu0 0.0
  %1291 = vmatpush.msra.mxu0 0.0
  %1292 = vmatpush.msra.mxu0 0.0
  %1293 = vmatpush.msra.mxu0 0.0
  %1294 = vmatpush.msra.mxu0 0.0
  %1295 = vmatpush.msra.mxu0 0.0
  %1296 = vmatpush.msra.mxu0 0.0
  %1297 = vmatpush.msra.mxu0 0.0
  %1298 = vmatpush.msra.mxu0 0.0
  %1299 = vmatpush.msra.mxu0 0.0
  %1300 = vmatpush.msra.mxu0 0.0
  %1301 = vmatpush.msra.mxu0 %v1238
  %1302 = vmatpush.msra.mxu0 %v1237
  %1303 = vmatpush.msra.mxu0 %v1236
  %1304 = vmatpush.msra.mxu0 %v1235
  %1305 = vmatmul.f32.gmra.mxu0 %v1287
  %v1306 = vpop.f32.mrf.mxu0
  %v1307 = vadd.f32 0.0, %v1306
  %1308 = vdwg.mxu0
  %s1309 = scalar_lea.vmem [#allocation3], 8
  %v1310 = vld [vmem:[%s1309] sm:$0xff]
  %v1311 = vadd.f32 %v1310, %v1307
  %v1312 = vmul.f32 %v1311, 0.5
  %v1313 = vsel %vm66, %v1311, %v1312
  %v1314 = vtanh.pop %v1313
  %v1315 = vmul.f32 %v1314, 0.5
  %v1316 = vadd.f32 %v1315, 0.5
  %v1317 = vsel %vm66, %v1314, %v1316
  %v1318 = vmul.f32 %v1317, %v1277
  %1320 = vrot.lane.b32.xlu0 %v1317, 64
  %v1321 = vpop.permute.xlu0 %1320
  %v1323 = vmul.f32 %v1317, %v1321
  %1325 = vrot.lane.b32.xlu0 %v1323, 32
  %v1326 = vpop.permute.xlu0 %1325
  %v1328 = vadd.f32 %v1318, %v1326
  %v1329 = vtanh.pop %v1328
  %1331 = vrot.lane.b32.xlu0 %v1329, 64
  %v1332 = vpop.permute.xlu0 %1331
  %v1334 = vmul.f32 %v1317, %v1332
  %v1335 = vld [vmem:[%s14] sm:$0xff]
  %v1336 = vld [vmem:[%s14 + $0x8] sm:$0xff]
  %v1337 = vld [vmem:[%s14 + $0x10] sm:$0xff]
  %v1338 = vld [vmem:[%s14 + $0x18] sm:$0xff]
  %v1339 = vsel %vm235, %v1225, 0
  %1341 = vmatpush.msra.mxu0 0.0
  %1342 = vmatpush.msra.mxu0 0.0
  %1343 = vmatpush.msra.mxu0 0.0
  %1344 = vmatpush.msra.mxu0 0.0
  %1345 = vmatpush.msra.mxu0 0.0
  %1346 = vmatpush.msra.mxu0 0.0
  %1347 = vmatpush.msra.mxu0 0.0
  %1348 = vmatpush.msra.mxu0 0.0
  %1349 = vmatpush.msra.mxu0 0.0
  %1350 = vmatpush.msra.mxu0 0.0
  %1351 = vmatpush.msra.mxu0 0.0
  %1352 = vmatpush.msra.mxu0 0.0
  %1353 = vmatpush.msra.mxu0 %v1338
  %1354 = vmatpush.msra.mxu0 %v1337
  %1355 = vmatpush.msra.mxu0 %v1336
  %1356 = vmatpush.msra.mxu0 %v1335
  %1357 = vmatmul.f32.gmra.mxu0 %v1339
  %v1358 = vpop.f32.mrf.mxu0
  %v1359 = vadd.f32 0.0, %v1358
  %1360 = vdwg.mxu0
  %v1361 = vld [vmem:[%s13] sm:$0xff]
  %v1362 = vld [vmem:[%s13 + $0x8] sm:$0xff]
  %v1363 = vld [vmem:[%s13 + $0x10] sm:$0xff]
  %v1364 = vld [vmem:[%s13 + $0x18] sm:$0xff]
  %1365 = vmatpush.msra.mxu0 0.0
  %1366 = vmatpush.msra.mxu0 0.0
  %1367 = vmatpush.msra.mxu0 0.0
  %1368 = vmatpush.msra.mxu0 0.0
  %1369 = vmatpush.msra.mxu0 0.0
  %1370 = vmatpush.msra.mxu0 0.0
  %1371 = vmatpush.msra.mxu0 0.0
  %1372 = vmatpush.msra.mxu0 0.0
  %1373 = vmatpush.msra.mxu0 0.0
  %1374 = vmatpush.msra.mxu0 0.0
  %1375 = vmatpush.msra.mxu0 0.0
  %1376 = vmatpush.msra.mxu0 0.0
  %1377 = vmatpush.msra.mxu0 %v1364
  %1378 = vmatpush.msra.mxu0 %v1363
  %1379 = vmatpush.msra.mxu0 %v1362
  %1380 = vmatpush.msra.mxu0 %v1361
  %1381 = vmatmul.f32.gmra.mxu0 %v1287
  %v1382 = vpop.f32.mrf.mxu0
  %v1383 = vadd.f32 %v1359, %v1382
  %1384 = vdwg.mxu0
  %v1385 = vld [vmem:[%s15] sm:$0x1]
  %v1387 = vperm.slane %v1385, 0
  %v1389 = vadd.f32 %v1383, %v1387
  %v1390 = vmul.f32 %v1389, 0.5
  %v1391 = vsel %vm66, %v1389, %v1390
  %v1392 = vtanh.pop %v1391
  %v1393 = vmul.f32 %v1392, 0.5
  %v1394 = vadd.f32 %v1393, 0.5
  %v1395 = vsel %vm66, %v1392, %v1394
  %v1396 = vmul.f32 %v1395, %v1209
  %1398 = vrot.lane.b32.xlu0 %v1395, 64
  %v1399 = vpop.permute.xlu0 %1398
  %v1401 = vmul.f32 %v1395, %v1399
  %1403 = vrot.lane.b32.xlu0 %v1401, 32
  %v1404 = vpop.permute.xlu0 %1403
  %v1406 = vadd.f32 %v1396, %v1404
  %v1407 = vtanh.pop %v1406
  %1409 = vrot.lane.b32.xlu0 %v1407, 64
  %v1410 = vpop.permute.xlu0 %1409
  %v1412 = vmul.f32 %v1395, %v1410
  %1414 = vrot.lane.b32.xlu0 %v1334, 32
  %v1415 = vpop.permute.xlu0 %1414
  %v1416 = vsel %vm235, %v1415, 0
  %1418 = vmatpush.msra.mxu0 0.0
  %1419 = vmatpush.msra.mxu0 0.0
  %1420 = vmatpush.msra.mxu0 0.0
  %1421 = vmatpush.msra.mxu0 0.0
  %1422 = vmatpush.msra.mxu0 0.0
  %1423 = vmatpush.msra.mxu0 0.0
  %1424 = vmatpush.msra.mxu0 0.0
  %1425 = vmatpush.msra.mxu0 0.0
  %1426 = vmatpush.msra.mxu0 0.0
  %1427 = vmatpush.msra.mxu0 0.0
  %1428 = vmatpush.msra.mxu0 0.0
  %1429 = vmatpush.msra.mxu0 0.0
  %1430 = vmatpush.msra.mxu0 %v1238
  %1431 = vmatpush.msra.mxu0 %v1237
  %1432 = vmatpush.msra.mxu0 %v1236
  %1433 = vmatpush.msra.mxu0 %v1235
  %1434 = vmatmul.f32.gmra.mxu0 %v1416
  %v1435 = vpop.f32.mrf.mxu0
  %v1436 = vadd.f32 0.0, %v1435
  %1437 = vdwg.mxu0
  %s1438 = scalar_lea.vmem [#allocation3], 16
  %v1439 = vld [vmem:[%s1438] sm:$0xff]
  %v1440 = vadd.f32 %v1439, %v1436
  %v1441 = vmul.f32 %v1440, 0.5
  %v1442 = vsel %vm66, %v1440, %v1441
  %v1443 = vtanh.pop %v1442
  %v1444 = vmul.f32 %v1443, 0.5
  %v1445 = vadd.f32 %v1444, 0.5
  %v1446 = vsel %vm66, %v1443, %v1445
  %v1447 = vmul.f32 %v1446, %v1328
  %1449 = vrot.lane.b32.xlu0 %v1446, 64
  %v1450 = vpop.permute.xlu0 %1449
  %v1452 = vmul.f32 %v1446, %v1450
  %1454 = vrot.lane.b32.xlu0 %v1452, 32
  %v1455 = vpop.permute.xlu0 %1454
  %v1457 = vadd.f32 %v1447, %v1455
  %v1458 = vtanh.pop %v1457
  %1460 = vrot.lane.b32.xlu0 %v1458, 64
  %v1461 = vpop.permute.xlu0 %1460
  %v1463 = vmul.f32 %v1446, %v1461
  %1465 = vrot.lane.b32.xlu0 %v1412, 32
  %v1466 = vpop.permute.xlu0 %1465
  %v1467 = vsel %vm235, %v1466, 0
  %1469 = vmatpush.msra.mxu0 0.0
  %1470 = vmatpush.msra.mxu0 0.0
  %1471 = vmatpush.msra.mxu0 0.0
  %1472 = vmatpush.msra.mxu0 0.0
  %1473 = vmatpush.msra.mxu0 0.0
  %1474 = vmatpush.msra.mxu0 0.0
  %1475 = vmatpush.msra.mxu0 0.0
  %1476 = vmatpush.msra.mxu0 0.0
  %1477 = vmatpush.msra.mxu0 0.0
  %1478 = vmatpush.msra.mxu0 0.0
  %1479 = vmatpush.msra.mxu0 0.0
  %1480 = vmatpush.msra.mxu0 0.0
  %1481 = vmatpush.msra.mxu0 %v1338
  %1482 = vmatpush.msra.mxu0 %v1337
  %1483 = vmatpush.msra.mxu0 %v1336
  %1484 = vmatpush.msra.mxu0 %v1335
  %1485 = vmatmul.f32.gmra.mxu0 %v1467
  %v1486 = vpop.f32.mrf.mxu0
  %v1487 = vadd.f32 0.0, %v1486
  %1488 = vdwg.mxu0
  %1489 = vmatpush.msra.mxu0 0.0
  %1490 = vmatpush.msra.mxu0 0.0
  %1491 = vmatpush.msra.mxu0 0.0
  %1492 = vmatpush.msra.mxu0 0.0
  %1493 = vmatpush.msra.mxu0 0.0
  %1494 = vmatpush.msra.mxu0 0.0
  %1495 = vmatpush.msra.mxu0 0.0
  %1496 = vmatpush.msra.mxu0 0.0
  %1497 = vmatpush.msra.mxu0 0.0
  %1498 = vmatpush.msra.mxu0 0.0
  %1499 = vmatpush.msra.mxu0 0.0
  %1500 = vmatpush.msra.mxu0 0.0
  %1501 = vmatpush.msra.mxu0 %v1364
  %1502 = vmatpush.msra.mxu0 %v1363
  %1503 = vmatpush.msra.mxu0 %v1362
  %1504 = vmatpush.msra.mxu0 %v1361
  %1505 = vmatmul.f32.gmra.mxu0 %v1416
  %v1506 = vpop.f32.mrf.mxu0
  %v1507 = vadd.f32 %v1487, %v1506
  %1508 = vdwg.mxu0
  %v1509 = vadd.f32 %v1507, %v1387
  %v1510 = vmul.f32 %v1509, 0.5
  %v1511 = vsel %vm66, %v1509, %v1510
  %v1512 = vtanh.pop %v1511
  %v1513 = vmul.f32 %v1512, 0.5
  %v1514 = vadd.f32 %v1513, 0.5
  %v1515 = vsel %vm66, %v1512, %v1514
  %v1516 = vmul.f32 %v1515, %v1406
  %1518 = vrot.lane.b32.xlu0 %v1515, 64
  %v1519 = vpop.permute.xlu0 %1518
  %v1521 = vmul.f32 %v1515, %v1519
  %1523 = vrot.lane.b32.xlu0 %v1521, 32
  %v1524 = vpop.permute.xlu0 %1523
  %v1526 = vadd.f32 %v1516, %v1524
  %v1527 = vtanh.pop %v1526
  %1529 = vrot.lane.b32.xlu0 %v1527, 64
  %v1530 = vpop.permute.xlu0 %1529
  %v1532 = vmul.f32 %v1515, %v1530
  %1534 = vrot.lane.b32.xlu0 %v1463, 32
  %v1535 = vpop.permute.xlu0 %1534
  %v1536 = vsel %vm235, %v1535, 0
  %1538 = vmatpush.msra.mxu0 0.0
  %1539 = vmatpush.msra.mxu0 0.0
  %1540 = vmatpush.msra.mxu0 0.0
  %1541 = vmatpush.msra.mxu0 0.0
  %1542 = vmatpush.msra.mxu0 0.0
  %1543 = vmatpush.msra.mxu0 0.0
  %1544 = vmatpush.msra.mxu0 0.0
  %1545 = vmatpush.msra.mxu0 0.0
  %1546 = vmatpush.msra.mxu0 0.0
  %1547 = vmatpush.msra.mxu0 0.0
  %1548 = vmatpush.msra.mxu0 0.0
  %1549 = vmatpush.msra.mxu0 0.0
  %1550 = vmatpush.msra.mxu0 %v1238
  %1551 = vmatpush.msra.mxu0 %v1237
  %1552 = vmatpush.msra.mxu0 %v1236
  %1553 = vmatpush.msra.mxu0 %v1235
  %1554 = vmatmul.f32.gmra.mxu0 %v1536
  %v1555 = vpop.f32.mrf.mxu0
  %v1556 = vadd.f32 0.0, %v1555
  %1557 = vdwg.mxu0
  %s1558 = scalar_lea.vmem [#allocation3], 24
  %v1559 = vld [vmem:[%s1558] sm:$0xff]
  %v1560 = vadd.f32 %v1559, %v1556
  %v1561 = vmul.f32 %v1560, 0.5
  %v1562 = vsel %vm66, %v1560, %v1561
  %v1563 = vtanh.pop %v1562
  %v1564 = vmul.f32 %v1563, 0.5
  %v1565 = vadd.f32 %v1564, 0.5
  %v1566 = vsel %vm66, %v1563, %v1565
  %v1567 = vmul.f32 %v1566, %v1457
  %1569 = vrot.lane.b32.xlu0 %v1566, 64
  %v1570 = vpop.permute.xlu0 %1569
  %v1572 = vmul.f32 %v1566, %v1570
  %1574 = vrot.lane.b32.xlu0 %v1572, 32
  %v1575 = vpop.permute.xlu0 %1574
  %v1577 = vadd.f32 %v1567, %v1575
  %v1578 = vtanh.pop %v1577
  %1580 = vrot.lane.b32.xlu0 %v1578, 64
  %v1581 = vpop.permute.xlu0 %1580
  %v1583 = vmul.f32 %v1566, %v1581
  %1585 = vrot.lane.b32.xlu0 %v1532, 32
  %v1586 = vpop.permute.xlu0 %1585
  %v1587 = vsel %vm235, %v1586, 0
  %1589 = vmatpush.msra.mxu0 0.0
  %1590 = vmatpush.msra.mxu0 0.0
  %1591 = vmatpush.msra.mxu0 0.0
  %1592 = vmatpush.msra.mxu0 0.0
  %1593 = vmatpush.msra.mxu0 0.0
  %1594 = vmatpush.msra.mxu0 0.0
  %1595 = vmatpush.msra.mxu0 0.0
  %1596 = vmatpush.msra.mxu0 0.0
  %1597 = vmatpush.msra.mxu0 0.0
  %1598 = vmatpush.msra.mxu0 0.0
  %1599 = vmatpush.msra.mxu0 0.0
  %1600 = vmatpush.msra.mxu0 0.0
  %1601 = vmatpush.msra.mxu0 %v1338
  %1602 = vmatpush.msra.mxu0 %v1337
  %1603 = vmatpush.msra.mxu0 %v1336
  %1604 = vmatpush.msra.mxu0 %v1335
  %1605 = vmatmul.f32.gmra.mxu0 %v1587
  %v1606 = vpop.f32.mrf.mxu0
  %v1607 = vadd.f32 0.0, %v1606
  %1608 = vdwg.mxu0
  %1609 = vmatpush.msra.mxu0 0.0
  %1610 = vmatpush.msra.mxu0 0.0
  %1611 = vmatpush.msra.mxu0 0.0
  %1612 = vmatpush.msra.mxu0 0.0
  %1613 = vmatpush.msra.mxu0 0.0
  %1614 = vmatpush.msra.mxu0 0.0
  %1615 = vmatpush.msra.mxu0 0.0
  %1616 = vmatpush.msra.mxu0 0.0
  %1617 = vmatpush.msra.mxu0 0.0
  %1618 = vmatpush.msra.mxu0 0.0
  %1619 = vmatpush.msra.mxu0 0.0
  %1620 = vmatpush.msra.mxu0 0.0
  %1621 = vmatpush.msra.mxu0 %v1364
  %1622 = vmatpush.msra.mxu0 %v1363
  %1623 = vmatpush.msra.mxu0 %v1362
  %1624 = vmatpush.msra.mxu0 %v1361
  %1625 = vmatmul.f32.gmra.mxu0 %v1536
  %v1626 = vpop.f32.mrf.mxu0
  %v1627 = vadd.f32 %v1607, %v1626
  %1628 = vdwg.mxu0
  %v1629 = vadd.f32 %v1627, %v1387
  %v1630 = vmul.f32 %v1629, 0.5
  %v1631 = vsel %vm66, %v1629, %v1630
  %v1632 = vtanh.pop %v1631
  %v1633 = vmul.f32 %v1632, 0.5
  %v1634 = vadd.f32 %v1633, 0.5
  %v1635 = vsel %vm66, %v1632, %v1634
  %v1636 = vmul.f32 %v1635, %v1526
  %1638 = vrot.lane.b32.xlu0 %v1635, 64
  %v1639 = vpop.permute.xlu0 %1638
  %v1641 = vmul.f32 %v1635, %v1639
  %1643 = vrot.lane.b32.xlu0 %v1641, 32
  %v1644 = vpop.permute.xlu0 %1643
  %v1646 = vadd.f32 %v1636, %v1644
  %v1647 = vtanh.pop %v1646
  %1649 = vrot.lane.b32.xlu0 %v1647, 64
  %v1650 = vpop.permute.xlu0 %1649
  %v1652 = vmul.f32 %v1635, %v1650
  %1654 = vrot.lane.b32.xlu0 %v1583, 32
  %v1655 = vpop.permute.xlu0 %1654
  %v1656 = vsel %vm235, %v1655, 0
  %1658 = vmatpush.msra.mxu0 0.0
  %1659 = vmatpush.msra.mxu0 0.0
  %1660 = vmatpush.msra.mxu0 0.0
  %1661 = vmatpush.msra.mxu0 0.0
  %1662 = vmatpush.msra.mxu0 0.0
  %1663 = vmatpush.msra.mxu0 0.0
  %1664 = vmatpush.msra.mxu0 0.0
  %1665 = vmatpush.msra.mxu0 0.0
  %1666 = vmatpush.msra.mxu0 0.0
  %1667 = vmatpush.msra.mxu0 0.0
  %1668 = vmatpush.msra.mxu0 0.0
  %1669 = vmatpush.msra.mxu0 0.0
  %1670 = vmatpush.msra.mxu0 %v1238
  %1671 = vmatpush.msra.mxu0 %v1237
  %1672 = vmatpush.msra.mxu0 %v1236
  %1673 = vmatpush.msra.mxu0 %v1235
  %1674 = vmatmul.f32.gmra.mxu0 %v1656
  %v1675 = vpop.f32.mrf.mxu0
  %v1676 = vadd.f32 0.0, %v1675
  %1677 = vdwg.mxu0
  %s1678 = scalar_lea.vmem [#allocation3], 32
  %v1679 = vld [vmem:[%s1678] sm:$0xff]
  %v1680 = vadd.f32 %v1679, %v1676
  %v1681 = vmul.f32 %v1680, 0.5
  %v1682 = vsel %vm66, %v1680, %v1681
  %v1683 = vtanh.pop %v1682
  %v1684 = vmul.f32 %v1683, 0.5
  %v1685 = vadd.f32 %v1684, 0.5
  %v1686 = vsel %vm66, %v1683, %v1685
  %v1687 = vmul.f32 %v1686, %v1577
  %1689 = vrot.lane.b32.xlu0 %v1686, 64
  %v1690 = vpop.permute.xlu0 %1689
  %v1692 = vmul.f32 %v1686, %v1690
  %1694 = vrot.lane.b32.xlu0 %v1692, 32
  %v1695 = vpop.permute.xlu0 %1694
  %v1697 = vadd.f32 %v1687, %v1695
  %v1698 = vtanh.pop %v1697
  %1700 = vrot.lane.b32.xlu0 %v1698, 64
  %v1701 = vpop.permute.xlu0 %1700
  %v1703 = vmul.f32 %v1686, %v1701
  %1705 = vrot.lane.b32.xlu0 %v1652, 32
  %v1706 = vpop.permute.xlu0 %1705
  %v1707 = vsel %vm235, %v1706, 0
  %1709 = vmatpush.msra.mxu0 0.0
  %1710 = vmatpush.msra.mxu0 0.0
  %1711 = vmatpush.msra.mxu0 0.0
  %1712 = vmatpush.msra.mxu0 0.0
  %1713 = vmatpush.msra.mxu0 0.0
  %1714 = vmatpush.msra.mxu0 0.0
  %1715 = vmatpush.msra.mxu0 0.0
  %1716 = vmatpush.msra.mxu0 0.0
  %1717 = vmatpush.msra.mxu0 0.0
  %1718 = vmatpush.msra.mxu0 0.0
  %1719 = vmatpush.msra.mxu0 0.0
  %1720 = vmatpush.msra.mxu0 0.0
  %1721 = vmatpush.msra.mxu0 %v1338
  %1722 = vmatpush.msra.mxu0 %v1337
  %1723 = vmatpush.msra.mxu0 %v1336
  %1724 = vmatpush.msra.mxu0 %v1335
  %1725 = vmatmul.f32.gmra.mxu0 %v1707
  %v1726 = vpop.f32.mrf.mxu0
  %v1727 = vadd.f32 0.0, %v1726
  %1728 = vdwg.mxu0
  %1729 = vmatpush.msra.mxu0 0.0
  %1730 = vmatpush.msra.mxu0 0.0
  %1731 = vmatpush.msra.mxu0 0.0
  %1732 = vmatpush.msra.mxu0 0.0
  %1733 = vmatpush.msra.mxu0 0.0
  %1734 = vmatpush.msra.mxu0 0.0
  %1735 = vmatpush.msra.mxu0 0.0
  %1736 = vmatpush.msra.mxu0 0.0
  %1737 = vmatpush.msra.mxu0 0.0
  %1738 = vmatpush.msra.mxu0 0.0
  %1739 = vmatpush.msra.mxu0 0.0
  %1740 = vmatpush.msra.mxu0 0.0
  %1741 = vmatpush.msra.mxu0 %v1364
  %1742 = vmatpush.msra.mxu0 %v1363
  %1743 = vmatpush.msra.mxu0 %v1362
  %1744 = vmatpush.msra.mxu0 %v1361
  %1745 = vmatmul.f32.gmra.mxu0 %v1656
  %v1746 = vpop.f32.mrf.mxu0
  %v1747 = vadd.f32 %v1727, %v1746
  %1748 = vdwg.mxu0
  %v1749 = vadd.f32 %v1747, %v1387
  %v1750 = vmul.f32 %v1749, 0.5
  %v1751 = vsel %vm66, %v1749, %v1750
  %v1752 = vtanh.pop %v1751
  %v1753 = vmul.f32 %v1752, 0.5
  %v1754 = vadd.f32 %v1753, 0.5
  %v1755 = vsel %vm66, %v1752, %v1754
  %v1756 = vmul.f32 %v1755, %v1646
  %1758 = vrot.lane.b32.xlu0 %v1755, 64
  %v1759 = vpop.permute.xlu0 %1758
  %v1761 = vmul.f32 %v1755, %v1759
  %1763 = vrot.lane.b32.xlu0 %v1761, 32
  %v1764 = vpop.permute.xlu0 %1763
  %v1766 = vadd.f32 %v1756, %v1764
  %v1767 = vtanh.pop %v1766
  %1769 = vrot.lane.b32.xlu0 %v1767, 64
  %v1770 = vpop.permute.xlu0 %1769
  %v1772 = vmul.f32 %v1755, %v1770
  %1774 = vrot.lane.b32.xlu0 %v1772, 32
  %v1775 = vpop.permute.xlu0 %1774
  %v1776 = vsel %vm235, %v1775, 0
  %1778 = vmatpush.msra.mxu0 0.0
  %1779 = vmatpush.msra.mxu0 0.0
  %1780 = vmatpush.msra.mxu0 0.0
  %1781 = vmatpush.msra.mxu0 0.0
  %1782 = vmatpush.msra.mxu0 0.0
  %1783 = vmatpush.msra.mxu0 0.0
  %1784 = vmatpush.msra.mxu0 0.0
  %1785 = vmatpush.msra.mxu0 0.0
  %1786 = vmatpush.msra.mxu0 0.0
  %1787 = vmatpush.msra.mxu0 0.0
  %1788 = vmatpush.msra.mxu0 0.0
  %1789 = vmatpush.msra.mxu0 0.0
  %1790 = vmatpush.msra.mxu0 %v1338
  %1791 = vmatpush.msra.mxu0 %v1337
  %1792 = vmatpush.msra.mxu0 %v1336
  %1793 = vmatpush.msra.mxu0 %v1335
  %1794 = vmatmul.f32.gmra.mxu0 %v1776
  %v1795 = vpop.f32.mrf.mxu0
  %v1796 = vadd.f32 0.0, %v1795
  %1797 = vdwg.mxu0
  %1799 = vrot.lane.b32.xlu0 %v1703, 32
  %v1800 = vpop.permute.xlu0 %1799
  %v1801 = vsel %vm235, %v1800, 0
  %1803 = vmatpush.msra.mxu0 0.0
  %1804 = vmatpush.msra.mxu0 0.0
  %1805 = vmatpush.msra.mxu0 0.0
  %1806 = vmatpush.msra.mxu0 0.0
  %1807 = vmatpush.msra.mxu0 0.0
  %1808 = vmatpush.msra.mxu0 0.0
  %1809 = vmatpush.msra.mxu0 0.0
  %1810 = vmatpush.msra.mxu0 0.0
  %1811 = vmatpush.msra.mxu0 0.0
  %1812 = vmatpush.msra.mxu0 0.0
  %1813 = vmatpush.msra.mxu0 0.0
  %1814 = vmatpush.msra.mxu0 0.0
  %1815 = vmatpush.msra.mxu0 %v1364
  %1816 = vmatpush.msra.mxu0 %v1363
  %1817 = vmatpush.msra.mxu0 %v1362
  %1818 = vmatpush.msra.mxu0 %v1361
  %1819 = vmatmul.f32.gmra.mxu0 %v1801
  %v1820 = vpop.f32.mrf.mxu0
  %v1821 = vadd.f32 %v1796, %v1820
  %1822 = vdwg.mxu0
  %v1823 = vadd.f32 %v1821, %v1387
  %v1824 = vmul.f32 %v1823, 0.5
  %v1825 = vsel %vm66, %v1823, %v1824
  %v1826 = vtanh.pop %v1825
  %v1827 = vmul.f32 %v1826, 0.5
  %v1828 = vadd.f32 %v1827, 0.5
  %v1829 = vsel %vm66, %v1826, %v1828
  %v1830 = vmul.f32 %v1829, %v1766
  %1832 = vrot.lane.b32.xlu0 %v1829, 64
  %v1833 = vpop.permute.xlu0 %1832
  %v1835 = vmul.f32 %v1829, %v1833
  %1837 = vrot.lane.b32.xlu0 %v1835, 32
  %v1838 = vpop.permute.xlu0 %1837
  %v1840 = vadd.f32 %v1830, %v1838
  %v1841 = vtanh.pop %v1840
  %1843 = vrot.lane.b32.xlu0 %v1841, 64
  %v1844 = vpop.permute.xlu0 %1843
  %v1846 = vmul.f32 %v1829, %v1844
  %v1847 = vld [vmem:[%s16] sm:$0xff]
  %v1848 = vld [vmem:[%s16 + $0x8] sm:$0xff]
  %v1849 = vld [vmem:[%s16 + $0x10] sm:$0xff]
  %v1850 = vld [vmem:[%s16 + $0x18] sm:$0xff]
  %v1851 = vld [vmem:[%s17] sm:$0x1]
  %v1853 = vperm.slane %v1851, 0
  %1856 = vrot.lane.b32.xlu0 %v1846, 32
  %v1857 = vpop.permute.xlu0 %1856
  %v1858 = vsel %vm235, %v1857, 0
  %1860 = vmatpush.msra.mxu0 0.0
  %1861 = vmatpush.msra.mxu0 0.0
  %1862 = vmatpush.msra.mxu0 0.0
  %1863 = vmatpush.msra.mxu0 0.0
  %1864 = vmatpush.msra.mxu0 0.0
  %1865 = vmatpush.msra.mxu0 0.0
  %1866 = vmatpush.msra.mxu0 0.0
  %1867 = vmatpush.msra.mxu0 0.0
  %1868 = vmatpush.msra.mxu0 0.0
  %1869 = vmatpush.msra.mxu0 0.0
  %1870 = vmatpush.msra.mxu0 0.0
  %1871 = vmatpush.msra.mxu0 0.0
  %1872 = vmatpush.msra.mxu0 %v1850
  %1873 = vmatpush.msra.mxu0 %v1849
  %1874 = vmatpush.msra.mxu0 %v1848
  %1875 = vmatpush.msra.mxu0 %v1847
  %1876 = vmatmul.f32.gmra.mxu0 %v1858
  %v1877 = vpop.f32.mrf.mxu0
  %v1878 = vadd.f32 %v1853, %v1877
  %1879 = vdwg.mxu0
  %vm1880 = vcmask 23552
  %1881 = vst.msk [vmem:[%s18] sm:$0xff] %vm1880, %v1878
  // Predicated region
  $region74: #{seq2seq_forward.1} parent=0 // pred_check
    _
  $region75: #{seq2seq_forward.1} parent=0 // pred_check_branch
    %1883 = sbr.rel (0) target = $region77
  $region76: #{seq2seq_forward.1} parent=0 // pred_region
    _
  $region77: #{seq2seq_forward.1} parent=0 // pred_fallthru
    _
  // Predicated region
  $region78: #{seq2seq_forward.1} parent=0 // pred_check
    _
  $region79: #{seq2seq_forward.1} parent=0 // pred_check_branch
    %1885 = sbr.rel (0) target = $region81
  $region80: #{seq2seq_forward.1} parent=0 // pred_region
    _
  $region81: #{seq2seq_forward.1} parent=0 // pred_fallthru
    _
  // Predicated region
  $region82: #{seq2seq_forward.1} parent=0 // pred_check
    _
  $region83: #{seq2seq_forward.1} parent=0 // pred_check_branch
    %1887 = sbr.rel (0) target = $region85
  $region84: #{seq2seq_forward.1} parent=0 // pred_region
    _
  $region85: #{seq2seq_forward.1} parent=0 // pred_fallthru
    _
  // Predicated region
  $region86: #{seq2seq_forward.1} parent=0 // pred_check
    _
  $region87: #{seq2seq_forward.1} parent=0 // pred_check_branch
    %1889 = sbr.rel (0) target = $region89
  $region88: #{seq2seq_forward.1} parent=0 // pred_region
    _
  $region89: #{seq2seq_forward.1} parent=0 // pred_fallthru
    _
  // Predicated region
  $region90: #{seq2seq_forward.1} parent=0 // pred_check
    _
  $region91: #{seq2seq_forward.1} parent=0 // pred_check_branch
    %1891 = sbr.rel (0) target = $region93
  $region92: #{seq2seq_forward.1} parent=0 // pred_region
    _
  $region93: #{seq2seq_forward.1} parent=0 // pred_fallthru
    _
  // Predicated region
  $region94: #{seq2seq_forward.1} parent=0 // pred_check
    _
  $region95: #{seq2seq_forward.1} parent=0 // pred_check_branch
    %1893 = sbr.rel (0) target = $region97
  $region96: #{seq2seq_forward.1} parent=0 // pred_region
    _
  $region97: #{seq2seq_forward.1} parent=0 // pred_fallthru
    _

</llo_original>
